<compile_context>
chip_gen: v5e
topology: v5e:2x2
jax: 0.10.0
libtpu: 0.0.40
codegen_flags: <defaults>
</compile_context>

<pallas_src>
import functools

import jax
import jax.numpy as jnp
from jax.experimental import pallas as pl
from jax.experimental.pallas import tpu as pltpu


GROUP = 4                         # points per local group at each SA level
MXU_DTYPE = jnp.bfloat16          # matmul-input dtype; accumulation stays f32
VMEM_LIMIT = 32 * 1024 * 1024     # safe on v5e/v6e and within v7x's 64 MiB physical


def _mm(x, w):
    """MXU matmul: bf16 inputs, f32 accumulation."""
    return jnp.dot(x.astype(MXU_DTYPE), w.astype(MXU_DTYPE),
                   preferred_element_type=jnp.float32)


def _pick_tile(n, cap=512):
    """Largest tile that divides n, is <= cap, and is a multiple of 8 (or n itself)."""
    if n <= cap:
        return n
    best = None
    for cand in range(8, cap + 1, 8):
        if n % cand == 0:
            best = cand
    return best if best is not None else n


# -----------------------------------------------------------------------------
# Fused set-abstraction stage: grouping -> rel coords -> 2-layer MLP -> local max
# -----------------------------------------------------------------------------
def _sa_kernel(pos_ref, feat_ref, w1a_ref, w1b_ref, b1_ref, w2_ref, b2_ref,
               cent_ref, out_ref, *, g):
    # pos_ref: [1, g, Gt, 3], feat_ref: [1, g, Gt, Cf]  (member axis leading).
    members = [pos_ref[0, k] for k in range(g)]           # g x [Gt, 3]
    centroid = members[0]
    for k in range(1, g):
        centroid = centroid + members[k]
    centroid = centroid * (1.0 / g)                       # [Gt, 3]
    pooled = None
    for k in range(g):                                    # unrolled over group members
        rel = members[k] - centroid                       # relative coordinates
        f = feat_ref[0, k]                                # [Gt, Cf]
        h1 = jnp.maximum(_mm(rel, w1a_ref[...]) + _mm(f, w1b_ref[...])
                         + b1_ref[...], 0.0)              # split-weight "concat"
        h2 = jnp.maximum(_mm(h1, w2_ref[...]) + b2_ref[...], 0.0)
        pooled = h2 if pooled is None else jnp.maximum(pooled, h2)   # local max pool
    cent_ref[0] = centroid
    out_ref[0] = pooled


def sa_block(pos, feat, p1, p2, g=GROUP):
    """pos [B,Np,3], feat [B,Np,Cf] -> centroids [B,Np//g,3], pooled [B,Np//g,C2]."""
    B, Np, Cf = feat.shape
    Ng = Np // g
    pos_g = pos.reshape(B, g, Ng, 3)      # member k of group j = point k*Ng + j (free)
    feat_g = feat.reshape(B, g, Ng, Cf)
    (w1, b1), (w2, b2) = p1, p2
    c1, c2 = w1.shape[1], w2.shape[1]
    w1a = w1[:3].astype(MXU_DTYPE)        # relative-coordinate part of the concat
    w1b = w1[3:].astype(MXU_DTYPE)        # feature part of the concat
    w2c = w2.astype(MXU_DTYPE)
    gt = _pick_tile(Ng)
    grid = (B, Ng // gt)
    flops = 2 * B * Np * ((3 + Cf) * c1 + c1 * c2)
    bytes_accessed = (4 * (B * Np * (3 + Cf) + B * Ng * (3 + c2))
                      + 2 * ((3 + Cf) * c1 + c1 * c2))
    kernel = functools.partial(_sa_kernel, g=g)
    cent, pooled = pl.pallas_call(
        kernel,
        out_shape=(jax.ShapeDtypeStruct((B, Ng, 3), jnp.float32),
                   jax.ShapeDtypeStruct((B, Ng, c2), jnp.float32)),
        grid_spec=pltpu.PrefetchScalarGridSpec(
            num_scalar_prefetch=0,
            grid=grid,
            in_specs=[
                pl.BlockSpec((1, g, gt, 3), lambda b, i: (b, 0, i, 0)),
                pl.BlockSpec((1, g, gt, Cf), lambda b, i: (b, 0, i, 0)),
                pl.BlockSpec((3, c1), lambda b, i: (0, 0)),
                pl.BlockSpec((Cf, c1), lambda b, i: (0, 0)),
                pl.BlockSpec((1, c1), lambda b, i: (0, 0)),
                pl.BlockSpec((c1, c2), lambda b, i: (0, 0)),
                pl.BlockSpec((1, c2), lambda b, i: (0, 0)),
            ],
            out_specs=(pl.BlockSpec((1, gt, 3), lambda b, i: (b, i, 0)),
                       pl.BlockSpec((1, gt, c2), lambda b, i: (b, i, 0))),
        ),
        compiler_params=pltpu.CompilerParams(
            dimension_semantics=("parallel", "parallel"),
            vmem_limit_bytes=VMEM_LIMIT),
        cost_estimate=pl.CostEstimate(flops=flops, transcendentals=0,
                                      bytes_accessed=bytes_accessed),
    )(pos_g, feat_g, w1a, w1b, b1.reshape(1, c1), w2c, b2.reshape(1, c2))
    return cent, pooled


# -----------------------------------------------------------------------------
# Fused global SA (2-layer MLP + global max -> latent h) + first FP stage (FP3)
# -----------------------------------------------------------------------------
def _global_sa_fp3_kernel(pos_ref, feat_ref, w1a_ref, w1b_ref, b1_ref,
                          w2_ref, b2_ref, w3a_ref, w3b_ref, b3_ref,
                          h_ref, y_ref):
    p = pos_ref[0]                                        # [N2, 3]
    f = feat_ref[0]                                       # [N2, Cf]
    t = jnp.maximum(_mm(p, w1a_ref[...]) + _mm(f, w1b_ref[...]) + b1_ref[...], 0.0)
    t = jnp.maximum(_mm(t, w2_ref[...]) + b2_ref[...], 0.0)       # [N2, 128]
    h = jnp.max(t, axis=0, keepdims=True)                 # [1, 128] global max pool
    hproj = _mm(h, w3a_ref[...])                          # latent branch of FP3
    y = jnp.maximum(_mm(f, w3b_ref[...]) + b3_ref[...] + hproj, 0.0)  # broadcast upsample
    h_ref[0] = h
    y_ref[0] = y


def global_sa_fp3(pos2, feat2, p_sa1, p_sa2, p_fp3):
    """pos2 [B,N2,3], feat2 [B,N2,Cf] -> latent h [B,128], FP3 features [B,N2,64]."""
    B, N2, Cf = feat2.shape
    (w1, b1), (w2, b2), (w3, b3) = p_sa1, p_sa2, p_fp3
    c1, c2, c3 = w1.shape[1], w2.shape[1], w3.shape[1]
    w1a = w1[:3].astype(MXU_DTYPE)
    w1b = w1[3:].astype(MXU_DTYPE)
    w2c = w2.astype(MXU_DTYPE)
    w3a = w3[:c2].astype(MXU_DTYPE)       # latent (broadcast) part of the FP3 concat
    w3b = w3[c2:].astype(MXU_DTYPE)       # skip-connection part of the FP3 concat
    flops = 2 * B * N2 * ((3 + Cf) * c1 + c1 * c2 + Cf * c3) + 2 * B * c2 * c3
    bytes_accessed = (4 * (B * N2 * (3 + Cf + c3) + B * c2)
                      + 2 * ((3 + Cf) * c1 + c1 * c2 + (c2 + Cf) * c3))
    h, y = pl.pallas_call(
        _global_sa_fp3_kernel,
        out_shape=(jax.ShapeDtypeStruct((B, 1, c2), jnp.float32),
                   jax.ShapeDtypeStruct((B, N2, c3), jnp.float32)),
        grid_spec=pltpu.PrefetchScalarGridSpec(
            num_scalar_prefetch=0,
            grid=(B,),
            in_specs=[
                pl.BlockSpec((1, N2, 3), lambda b: (b, 0, 0)),
                pl.BlockSpec((1, N2, Cf), lambda b: (b, 0, 0)),
                pl.BlockSpec((3, c1), lambda b: (0, 0)),
                pl.BlockSpec((Cf, c1), lambda b: (0, 0)),
                pl.BlockSpec((1, c1), lambda b: (0, 0)),
                pl.BlockSpec((c1, c2), lambda b: (0, 0)),
                pl.BlockSpec((1, c2), lambda b: (0, 0)),
                pl.BlockSpec((c2, c3), lambda b: (0, 0)),
                pl.BlockSpec((Cf, c3), lambda b: (0, 0)),
                pl.BlockSpec((1, c3), lambda b: (0, 0)),
            ],
            out_specs=(pl.BlockSpec((1, 1, c2), lambda b: (b, 0, 0)),
                       pl.BlockSpec((1, N2, c3), lambda b: (b, 0, 0))),
        ),
        compiler_params=pltpu.CompilerParams(
            dimension_semantics=("parallel",),
            vmem_limit_bytes=VMEM_LIMIT),
        cost_estimate=pl.CostEstimate(flops=flops, transcendentals=0,
                                      bytes_accessed=bytes_accessed),
    )(pos2, feat2, w1a, w1b, b1.reshape(1, c1), w2c, b2.reshape(1, c2),
      w3a, w3b, b3.reshape(1, c3))
    return h.reshape(B, c2), y


# -----------------------------------------------------------------------------
# Fused feature-propagation stage: in-kernel upsample + skip + MLP (+ final linear)
# -----------------------------------------------------------------------------
def _fp_kernel(y_ref, skip_ref, wa_ref, wb_ref, b_ref, *rest, g, final):
    if final:
        w2_ref, b2_ref, o_ref = rest
    else:
        (o_ref,) = rest
    proj = _mm(y_ref[0], wa_ref[...])                     # coarse branch, shared by group
    for k in range(g):                                    # upsample = broadcast over members
        t = jnp.maximum(_mm(skip_ref[0, k], wb_ref[...]) + b_ref[...] + proj, 0.0)
        if final:
            t = _mm(t, w2_ref[...]) + b2_ref[...]         # fused last linear (no ReLU)
        o_ref[0, k] = t


def fp_block(y_coarse, skip, layer, final=None, g=GROUP):
    """y_coarse [B,Nc,Cc], skip [B,Nc*g,Cs] -> [B,Nc*g,Cout] (Cout=C or final width)."""
    B, Nc, Cc = y_coarse.shape
    Nf = skip.shape[1]
    Cs = skip.shape[-1]
    w, b = layer
    C = w.shape[1]
    skip_g = skip.reshape(B, g, Nc, Cs)   # member k of group j = point k*Nc + j (free)
    wa = w[:Cc].astype(MXU_DTYPE)         # upsampled-coarse part of the concat
    wb = w[Cc:].astype(MXU_DTYPE)         # skip-connection part of the concat
    gt = _pick_tile(Nc)
    grid = (B, Nc // gt)
    args = [y_coarse, skip_g, wa, wb, b.reshape(1, C)]
    in_specs = [
        pl.BlockSpec((1, gt, Cc), lambda bb, i: (bb, i, 0)),
        pl.BlockSpec((1, g, gt, Cs), lambda bb, i: (bb, 0, i, 0)),
        pl.BlockSpec((Cc, C), lambda bb, i: (0, 0)),
        pl.BlockSpec((Cs, C), lambda bb, i: (0, 0)),
        pl.BlockSpec((1, C), lambda bb, i: (0, 0)),
    ]
    cout = C
    flops = 2 * B * (Nc * Cc * C + Nf * Cs * C)
    if final is not None:
        w2, b2 = final
        cout = w2.shape[1]
        args += [w2.astype(MXU_DTYPE), b2.reshape(1, cout)]
        in_specs += [pl.BlockSpec((C, cout), lambda bb, i: (0, 0)),
                     pl.BlockSpec((1, cout), lambda bb, i: (0, 0))]
        flops += 2 * B * Nf * C * cout
    bytes_accessed = (4 * (B * Nc * Cc + B * Nf * Cs + B * Nf * cout)
                      + 2 * (Cc + Cs) * C)
    kernel = functools.partial(_fp_kernel, g=g, final=final is not None)
    out = pl.pallas_call(
        kernel,
        out_shape=jax.ShapeDtypeStruct((B, g, Nc, cout), jnp.float32),
        grid_spec=pltpu.PrefetchScalarGridSpec(
            num_scalar_prefetch=0,
            grid=grid,
            in_specs=in_specs,
            out_specs=pl.BlockSpec((1, g, gt, cout), lambda bb, i: (bb, 0, i, 0)),
        ),
        compiler_params=pltpu.CompilerParams(
            dimension_semantics=("parallel", "parallel"),
            vmem_limit_bytes=VMEM_LIMIT),
        cost_estimate=pl.CostEstimate(flops=flops, transcendentals=0,
                                      bytes_accessed=bytes_accessed),
    )(*args)
    return out.reshape(B, Nf, cout)


# -----------------------------------------------------------------------------
# Parameter initialization (deterministic, synthetic)
# -----------------------------------------------------------------------------
def _init_linear(key, cin, cout):
    kw, kb = jax.random.split(key)
    w = jax.random.normal(kw, (cin, cout), jnp.float32) * (1.0 / jnp.sqrt(cin))
    b = jax.random.normal(kb, (cout,), jnp.float32) * 0.01
    return w, b


def init_params(key):
    keys = jax.random.split(key, 16)
    p = {}
    # Encoder (PointNetHFE, node_feat_dim=3, globalSA=True)
    p["sa1_l1"] = _init_linear(keys[0], 3 + 3, 32)        # rel_pos(3) + feat(3)
    p["sa1_l2"] = _init_linear(keys[1], 32, 32)
    p["sa2_l1"] = _init_linear(keys[2], 32 + 3, 64)
    p["sa2_l2"] = _init_linear(keys[3], 64, 64)
    p["sa3_l1"] = _init_linear(keys[4], 64 + 3, 128)      # global SA
    p["sa3_l2"] = _init_linear(keys[5], 128, 128)
    # Decoder (PointNetDecoder, skip connections, classification=False)
    p["fp3"] = _init_linear(keys[6], 128 + 64, 64)
    p["fp2"] = _init_linear(keys[7], 64 + 32, 32)
    p["fp1_l1"] = _init_linear(keys[8], 32 + 3, 32)
    p["fp1_l2"] = _init_linear(keys[9], 32, 3)            # reconstruct xyz
    return p


# -----------------------------------------------------------------------------
# PointAE.forward (front_encoder=False, x_front=None)
# -----------------------------------------------------------------------------
def point_ae_forward(params, x):
    pos0, feat0 = x, x                                    # node_feat_dim=3 -> xyz feats
    # Encoder (PointNetHFE): hierarchical set abstraction.
    pos1, feat1 = sa_block(pos0, feat0, params["sa1_l1"], params["sa1_l2"])
    pos2, feat2 = sa_block(pos1, feat1, params["sa2_l1"], params["sa2_l2"])
    h, y3 = global_sa_fp3(pos2, feat2,
                          params["sa3_l1"], params["sa3_l2"], params["fp3"])
    # Decoder (PointNetDecoder): feature propagation with skip connections.
    y2 = fp_block(y3, feat1, params["fp2"])
    x_hat = fp_block(y2, feat0, params["fp1_l1"], final=params["fp1_l2"])
    return x_hat


# -----------------------------------------------------------------------------
if __name__ == "__main__":
    key = jax.random.PRNGKey(0)
    kx, kp = jax.random.split(key)

    B, N = 2, 64
    x = jax.random.normal(kx, (B, N, 3), jnp.float32)     # batch of point clouds
    params = init_params(kp)

    x_hat = jax.jit(point_ae_forward)(params, x)
    x_hat = jax.block_until_ready(x_hat)

    assert x_hat.shape == (B, N, 3), x_hat.shape
    assert jnp.all(jnp.isfinite(x_hat))
    print("KERNEL_OK")
</pallas_src>

<mosaic_0001>
module attributes {stable_mosaic.version = 11 : i64} {
  func.func @_sa_kernel(%arg0: i32, %arg1: i32, %arg2: memref<1x4x16x3xf32, #tpu.memory_space<vmem>>, %arg3: memref<1x4x16x3xf32, #tpu.memory_space<vmem>>, %arg4: memref<3x32xbf16, #tpu.memory_space<vmem>>, %arg5: memref<3x32xbf16, #tpu.memory_space<vmem>>, %arg6: memref<1x32xf32, #tpu.memory_space<vmem>>, %arg7: memref<32x32xbf16, #tpu.memory_space<vmem>>, %arg8: memref<1x32xf32, #tpu.memory_space<vmem>>, %arg9: memref<1x16x3xf32, #tpu.memory_space<vmem>>, %arg10: memref<1x16x32xf32, #tpu.memory_space<vmem>>) attributes {dimension_semantics = [#tpu.dimension_semantics<parallel>, #tpu.dimension_semantics<parallel>], iteration_bounds = array<i64: 2, 1>, scalar_prefetch = 0 : i64, scratch_operands = 0 : i64, tpu.core_type = #tpu.core_type<tc>, window_params = [{transform_indices = @transform_0, window_bounds = array<i64: 1, 4, 16, 3>}, {transform_indices = @transform_1, window_bounds = array<i64: 1, 4, 16, 3>}, {pipeline_mode = #tpu.pipeline_mode<synchronous>, transform_indices = @transform_2, window_bounds = array<i64: 3, 32>}, {pipeline_mode = #tpu.pipeline_mode<synchronous>, transform_indices = @transform_3, window_bounds = array<i64: 3, 32>}, {pipeline_mode = #tpu.pipeline_mode<synchronous>, transform_indices = @transform_4, window_bounds = array<i64: 1, 32>}, {pipeline_mode = #tpu.pipeline_mode<synchronous>, transform_indices = @transform_5, window_bounds = array<i64: 32, 32>}, {pipeline_mode = #tpu.pipeline_mode<synchronous>, transform_indices = @transform_6, window_bounds = array<i64: 1, 32>}, {transform_indices = @transform_7, window_bounds = array<i64: 1, 16, 3>}, {transform_indices = @transform_8, window_bounds = array<i64: 1, 16, 32>}]} {
    %c0 = arith.constant 0 : index
    %c0_0 = arith.constant 0 : index
    %c0_1 = arith.constant 0 : index
    %c0_2 = arith.constant 0 : index
    %0 = vector.load %arg2[%c0, %c0_0, %c0_1, %c0_2] : memref<1x4x16x3xf32, #tpu.memory_space<vmem>>, vector<1x1x16x3xf32>
    %1 = vector.shape_cast %0 : vector<1x1x16x3xf32> to vector<16x3xf32>
    %c0_3 = arith.constant 0 : index
    %c1 = arith.constant 1 : index
    %c0_4 = arith.constant 0 : index
    %c0_5 = arith.constant 0 : index
    %2 = vector.load %arg2[%c0_3, %c1, %c0_4, %c0_5] : memref<1x4x16x3xf32, #tpu.memory_space<vmem>>, vector<1x1x16x3xf32>
    %3 = vector.shape_cast %2 : vector<1x1x16x3xf32> to vector<16x3xf32>
    %c0_6 = arith.constant 0 : index
    %c2 = arith.constant 2 : index
    %c0_7 = arith.constant 0 : index
    %c0_8 = arith.constant 0 : index
    %4 = vector.load %arg2[%c0_6, %c2, %c0_7, %c0_8] : memref<1x4x16x3xf32, #tpu.memory_space<vmem>>, vector<1x1x16x3xf32>
    %5 = vector.shape_cast %4 : vector<1x1x16x3xf32> to vector<16x3xf32>
    %c0_9 = arith.constant 0 : index
    %c3 = arith.constant 3 : index
    %c0_10 = arith.constant 0 : index
    %c0_11 = arith.constant 0 : index
    %6 = vector.load %arg2[%c0_9, %c3, %c0_10, %c0_11] : memref<1x4x16x3xf32, #tpu.memory_space<vmem>>, vector<1x1x16x3xf32>
    %7 = vector.shape_cast %6 : vector<1x1x16x3xf32> to vector<16x3xf32>
    %8 = arith.addf %1, %3 : vector<16x3xf32>
    %9 = arith.addf %8, %5 : vector<16x3xf32>
    %10 = arith.addf %9, %7 : vector<16x3xf32>
    %cst = arith.constant 2.500000e-01 : f32
    %11 = vector.broadcast %cst : f32 to vector<16x3xf32>
    %12 = arith.mulf %10, %11 : vector<16x3xf32>
    %13 = arith.subf %1, %12 : vector<16x3xf32>
    %c0_12 = arith.constant 0 : index
    %c0_13 = arith.constant 0 : index
    %c0_14 = arith.constant 0 : index
    %c0_15 = arith.constant 0 : index
    %14 = vector.load %arg3[%c0_12, %c0_13, %c0_14, %c0_15] : memref<1x4x16x3xf32, #tpu.memory_space<vmem>>, vector<1x1x16x3xf32>
    %15 = vector.shape_cast %14 : vector<1x1x16x3xf32> to vector<16x3xf32>
    %c0_16 = arith.constant 0 : index
    %c0_17 = arith.constant 0 : index
    %16 = vector.load %arg4[%c0_16, %c0_17] : memref<3x32xbf16, #tpu.memory_space<vmem>>, vector<3x32xbf16>
    %17 = arith.truncf %13 : vector<16x3xf32> to vector<16x3xbf16>
    %cst_18 = arith.constant dense<0.000000e+00> : vector<16x32xf32>
    %18 = tpu.matmul %17, %16, %cst_18 {dimension_numbers = #tpu.dot_dimension_numbers<[1], [0], [0], [1], [0, 0, 1, 1], [], []>} : vector<16x3xbf16>, vector<3x32xbf16>, vector<16x32xf32> -> vector<16x32xf32>
    %c0_19 = arith.constant 0 : index
    %c0_20 = arith.constant 0 : index
    %19 = vector.load %arg5[%c0_19, %c0_20] : memref<3x32xbf16, #tpu.memory_space<vmem>>, vector<3x32xbf16>
    %20 = arith.truncf %15 : vector<16x3xf32> to vector<16x3xbf16>
    %cst_21 = arith.constant dense<0.000000e+00> : vector<16x32xf32>
    %21 = tpu.matmul %20, %19, %cst_21 {dimension_numbers = #tpu.dot_dimension_numbers<[1], [0], [0], [1], [0, 0, 1, 1], [], []>} : vector<16x3xbf16>, vector<3x32xbf16>, vector<16x32xf32> -> vector<16x32xf32>
    %22 = arith.addf %18, %21 : vector<16x32xf32>
    %c0_22 = arith.constant 0 : index
    %c0_23 = arith.constant 0 : index
    %23 = vector.load %arg6[%c0_22, %c0_23] : memref<1x32xf32, #tpu.memory_space<vmem>>, vector<1x32xf32>
    %24 = vector.broadcast %23 : vector<1x32xf32> to vector<16x32xf32>
    %25 = arith.addf %22, %24 : vector<16x32xf32>
    %cst_24 = arith.constant 0.000000e+00 : f32
    %26 = vector.broadcast %cst_24 : f32 to vector<16x32xf32>
    %27 = arith.maximumf %25, %26 : vector<16x32xf32>
    %c0_25 = arith.constant 0 : index
    %c0_26 = arith.constant 0 : index
    %28 = vector.load %arg7[%c0_25, %c0_26] : memref<32x32xbf16, #tpu.memory_space<vmem>>, vector<32x32xbf16>
    %29 = arith.truncf %27 : vector<16x32xf32> to vector<16x32xbf16>
    %cst_27 = arith.constant dense<0.000000e+00> : vector<16x32xf32>
    %30 = tpu.matmul %29, %28, %cst_27 {dimension_numbers = #tpu.dot_dimension_numbers<[1], [0], [0], [1], [0, 0, 1, 1], [], []>} : vector<16x32xbf16>, vector<32x32xbf16>, vector<16x32xf32> -> vector<16x32xf32>
    %c0_28 = arith.constant 0 : index
    %c0_29 = arith.constant 0 : index
    %31 = vector.load %arg8[%c0_28, %c0_29] : memref<1x32xf32, #tpu.memory_space<vmem>>, vector<1x32xf32>
    %32 = vector.broadcast %31 : vector<1x32xf32> to vector<16x32xf32>
    %33 = arith.addf %30, %32 : vector<16x32xf32>
    %cst_30 = arith.constant 0.000000e+00 : f32
    %34 = vector.broadcast %cst_30 : f32 to vector<16x32xf32>
    %35 = arith.maximumf %33, %34 : vector<16x32xf32>
    %36 = arith.subf %3, %12 : vector<16x3xf32>
    %c0_31 = arith.constant 0 : index
    %c1_32 = arith.constant 1 : index
    %c0_33 = arith.constant 0 : index
    %c0_34 = arith.constant 0 : index
    %37 = vector.load %arg3[%c0_31, %c1_32, %c0_33, %c0_34] : memref<1x4x16x3xf32, #tpu.memory_space<vmem>>, vector<1x1x16x3xf32>
    %38 = vector.shape_cast %37 : vector<1x1x16x3xf32> to vector<16x3xf32>
    %c0_35 = arith.constant 0 : index
    %c0_36 = arith.constant 0 : index
    %39 = vector.load %arg4[%c0_35, %c0_36] : memref<3x32xbf16, #tpu.memory_space<vmem>>, vector<3x32xbf16>
    %40 = arith.truncf %36 : vector<16x3xf32> to vector<16x3xbf16>
    %cst_37 = arith.constant dense<0.000000e+00> : vector<16x32xf32>
    %41 = tpu.matmul %40, %39, %cst_37 {dimension_numbers = #tpu.dot_dimension_numbers<[1], [0], [0], [1], [0, 0, 1, 1], [], []>} : vector<16x3xbf16>, vector<3x32xbf16>, vector<16x32xf32> -> vector<16x32xf32>
    %c0_38 = arith.constant 0 : index
    %c0_39 = arith.constant 0 : index
    %42 = vector.load %arg5[%c0_38, %c0_39] : memref<3x32xbf16, #tpu.memory_space<vmem>>, vector<3x32xbf16>
    %43 = arith.truncf %38 : vector<16x3xf32> to vector<16x3xbf16>
    %cst_40 = arith.constant dense<0.000000e+00> : vector<16x32xf32>
    %44 = tpu.matmul %43, %42, %cst_40 {dimension_numbers = #tpu.dot_dimension_numbers<[1], [0], [0], [1], [0, 0, 1, 1], [], []>} : vector<16x3xbf16>, vector<3x32xbf16>, vector<16x32xf32> -> vector<16x32xf32>
    %45 = arith.addf %41, %44 : vector<16x32xf32>
    %c0_41 = arith.constant 0 : index
    %c0_42 = arith.constant 0 : index
    %46 = vector.load %arg6[%c0_41, %c0_42] : memref<1x32xf32, #tpu.memory_space<vmem>>, vector<1x32xf32>
    %47 = vector.broadcast %46 : vector<1x32xf32> to vector<16x32xf32>
    %48 = arith.addf %45, %47 : vector<16x32xf32>
    %cst_43 = arith.constant 0.000000e+00 : f32
    %49 = vector.broadcast %cst_43 : f32 to vector<16x32xf32>
    %50 = arith.maximumf %48, %49 : vector<16x32xf32>
    %c0_44 = arith.constant 0 : index
    %c0_45 = arith.constant 0 : index
    %51 = vector.load %arg7[%c0_44, %c0_45] : memref<32x32xbf16, #tpu.memory_space<vmem>>, vector<32x32xbf16>
    %52 = arith.truncf %50 : vector<16x32xf32> to vector<16x32xbf16>
    %cst_46 = arith.constant dense<0.000000e+00> : vector<16x32xf32>
    %53 = tpu.matmul %52, %51, %cst_46 {dimension_numbers = #tpu.dot_dimension_numbers<[1], [0], [0], [1], [0, 0, 1, 1], [], []>} : vector<16x32xbf16>, vector<32x32xbf16>, vector<16x32xf32> -> vector<16x32xf32>
    %c0_47 = arith.constant 0 : index
    %c0_48 = arith.constant 0 : index
    %54 = vector.load %arg8[%c0_47, %c0_48] : memref<1x32xf32, #tpu.memory_space<vmem>>, vector<1x32xf32>
    %55 = vector.broadcast %54 : vector<1x32xf32> to vector<16x32xf32>
    %56 = arith.addf %53, %55 : vector<16x32xf32>
    %cst_49 = arith.constant 0.000000e+00 : f32
    %57 = vector.broadcast %cst_49 : f32 to vector<16x32xf32>
    %58 = arith.maximumf %56, %57 : vector<16x32xf32>
    %59 = arith.maximumf %35, %58 : vector<16x32xf32>
    %60 = arith.subf %5, %12 : vector<16x3xf32>
    %c0_50 = arith.constant 0 : index
    %c2_51 = arith.constant 2 : index
    %c0_52 = arith.constant 0 : index
    %c0_53 = arith.constant 0 : index
    %61 = vector.load %arg3[%c0_50, %c2_51, %c0_52, %c0_53] : memref<1x4x16x3xf32, #tpu.memory_space<vmem>>, vector<1x1x16x3xf32>
    %62 = vector.shape_cast %61 : vector<1x1x16x3xf32> to vector<16x3xf32>
    %c0_54 = arith.constant 0 : index
    %c0_55 = arith.constant 0 : index
    %63 = vector.load %arg4[%c0_54, %c0_55] : memref<3x32xbf16, #tpu.memory_space<vmem>>, vector<3x32xbf16>
    %64 = arith.truncf %60 : vector<16x3xf32> to vector<16x3xbf16>
    %cst_56 = arith.constant dense<0.000000e+00> : vector<16x32xf32>
    %65 = tpu.matmul %64, %63, %cst_56 {dimension_numbers = #tpu.dot_dimension_numbers<[1], [0], [0], [1], [0, 0, 1, 1], [], []>} : vector<16x3xbf16>, vector<3x32xbf16>, vector<16x32xf32> -> vector<16x32xf32>
    %c0_57 = arith.constant 0 : index
    %c0_58 = arith.constant 0 : index
    %66 = vector.load %arg5[%c0_57, %c0_58] : memref<3x32xbf16, #tpu.memory_space<vmem>>, vector<3x32xbf16>
    %67 = arith.truncf %62 : vector<16x3xf32> to vector<16x3xbf16>
    %cst_59 = arith.constant dense<0.000000e+00> : vector<16x32xf32>
    %68 = tpu.matmul %67, %66, %cst_59 {dimension_numbers = #tpu.dot_dimension_numbers<[1], [0], [0], [1], [0, 0, 1, 1], [], []>} : vector<16x3xbf16>, vector<3x32xbf16>, vector<16x32xf32> -> vector<16x32xf32>
    %69 = arith.addf %65, %68 : vector<16x32xf32>
    %c0_60 = arith.constant 0 : index
    %c0_61 = arith.constant 0 : index
    %70 = vector.load %arg6[%c0_60, %c0_61] : memref<1x32xf32, #tpu.memory_space<vmem>>, vector<1x32xf32>
    %71 = vector.broadcast %70 : vector<1x32xf32> to vector<16x32xf32>
    %72 = arith.addf %69, %71 : vector<16x32xf32>
    %cst_62 = arith.constant 0.000000e+00 : f32
    %73 = vector.broadcast %cst_62 : f32 to vector<16x32xf32>
    %74 = arith.maximumf %72, %73 : vector<16x32xf32>
    %c0_63 = arith.constant 0 : index
    %c0_64 = arith.constant 0 : index
    %75 = vector.load %arg7[%c0_63, %c0_64] : memref<32x32xbf16, #tpu.memory_space<vmem>>, vector<32x32xbf16>
    %76 = arith.truncf %74 : vector<16x32xf32> to vector<16x32xbf16>
    %cst_65 = arith.constant dense<0.000000e+00> : vector<16x32xf32>
    %77 = tpu.matmul %76, %75, %cst_65 {dimension_numbers = #tpu.dot_dimension_numbers<[1], [0], [0], [1], [0, 0, 1, 1], [], []>} : vector<16x32xbf16>, vector<32x32xbf16>, vector<16x32xf32> -> vector<16x32xf32>
    %c0_66 = arith.constant 0 : index
    %c0_67 = arith.constant 0 : index
    %78 = vector.load %arg8[%c0_66, %c0_67] : memref<1x32xf32, #tpu.memory_space<vmem>>, vector<1x32xf32>
    %79 = vector.broadcast %78 : vector<1x32xf32> to vector<16x32xf32>
    %80 = arith.addf %77, %79 : vector<16x32xf32>
    %cst_68 = arith.constant 0.000000e+00 : f32
    %81 = vector.broadcast %cst_68 : f32 to vector<16x32xf32>
    %82 = arith.maximumf %80, %81 : vector<16x32xf32>
    %83 = arith.maximumf %59, %82 : vector<16x32xf32>
    %84 = arith.subf %7, %12 : vector<16x3xf32>
    %c0_69 = arith.constant 0 : index
    %c3_70 = arith.constant 3 : index
    %c0_71 = arith.constant 0 : index
    %c0_72 = arith.constant 0 : index
    %85 = vector.load %arg3[%c0_69, %c3_70, %c0_71, %c0_72] : memref<1x4x16x3xf32, #tpu.memory_space<vmem>>, vector<1x1x16x3xf32>
    %86 = vector.shape_cast %85 : vector<1x1x16x3xf32> to vector<16x3xf32>
    %c0_73 = arith.constant 0 : index
    %c0_74 = arith.constant 0 : index
    %87 = vector.load %arg4[%c0_73, %c0_74] : memref<3x32xbf16, #tpu.memory_space<vmem>>, vector<3x32xbf16>
    %88 = arith.truncf %84 : vector<16x3xf32> to vector<16x3xbf16>
    %cst_75 = arith.constant dense<0.000000e+00> : vector<16x32xf32>
    %89 = tpu.matmul %88, %87, %cst_75 {dimension_numbers = #tpu.dot_dimension_numbers<[1], [0], [0], [1], [0, 0, 1, 1], [], []>} : vector<16x3xbf16>, vector<3x32xbf16>, vector<16x32xf32> -> vector<16x32xf32>
    %c0_76 = arith.constant 0 : index
    %c0_77 = arith.constant 0 : index
    %90 = vector.load %arg5[%c0_76, %c0_77] : memref<3x32xbf16, #tpu.memory_space<vmem>>, vector<3x32xbf16>
    %91 = arith.truncf %86 : vector<16x3xf32> to vector<16x3xbf16>
    %cst_78 = arith.constant dense<0.000000e+00> : vector<16x32xf32>
    %92 = tpu.matmul %91, %90, %cst_78 {dimension_numbers = #tpu.dot_dimension_numbers<[1], [0], [0], [1], [0, 0, 1, 1], [], []>} : vector<16x3xbf16>, vector<3x32xbf16>, vector<16x32xf32> -> vector<16x32xf32>
    %93 = arith.addf %89, %92 : vector<16x32xf32>
    %c0_79 = arith.constant 0 : index
    %c0_80 = arith.constant 0 : index
    %94 = vector.load %arg6[%c0_79, %c0_80] : memref<1x32xf32, #tpu.memory_space<vmem>>, vector<1x32xf32>
    %95 = vector.broadcast %94 : vector<1x32xf32> to vector<16x32xf32>
    %96 = arith.addf %93, %95 : vector<16x32xf32>
    %cst_81 = arith.constant 0.000000e+00 : f32
    %97 = vector.broadcast %cst_81 : f32 to vector<16x32xf32>
    %98 = arith.maximumf %96, %97 : vector<16x32xf32>
    %c0_82 = arith.constant 0 : index
    %c0_83 = arith.constant 0 : index
    %99 = vector.load %arg7[%c0_82, %c0_83] : memref<32x32xbf16, #tpu.memory_space<vmem>>, vector<32x32xbf16>
    %100 = arith.truncf %98 : vector<16x32xf32> to vector<16x32xbf16>
    %cst_84 = arith.constant dense<0.000000e+00> : vector<16x32xf32>
    %101 = tpu.matmul %100, %99, %cst_84 {dimension_numbers = #tpu.dot_dimension_numbers<[1], [0], [0], [1], [0, 0, 1, 1], [], []>} : vector<16x32xbf16>, vector<32x32xbf16>, vector<16x32xf32> -> vector<16x32xf32>
    %c0_85 = arith.constant 0 : index
    %c0_86 = arith.constant 0 : index
    %102 = vector.load %arg8[%c0_85, %c0_86] : memref<1x32xf32, #tpu.memory_space<vmem>>, vector<1x32xf32>
    %103 = vector.broadcast %102 : vector<1x32xf32> to vector<16x32xf32>
    %104 = arith.addf %101, %103 : vector<16x32xf32>
    %cst_87 = arith.constant 0.000000e+00 : f32
    %105 = vector.broadcast %cst_87 : f32 to vector<16x32xf32>
    %106 = arith.maximumf %104, %105 : vector<16x32xf32>
    %107 = arith.maximumf %83, %106 : vector<16x32xf32>
    %c0_88 = arith.constant 0 : index
    %c0_89 = arith.constant 0 : index
    %c0_90 = arith.constant 0 : index
    %108 = vector.load %arg9[%c0_88, %c0_89, %c0_90] : memref<1x16x3xf32, #tpu.memory_space<vmem>>, vector<1x16x3xf32>
    %109 = vector.shape_cast %108 : vector<1x16x3xf32> to vector<16x3xf32>
    %110 = vector.shape_cast %12 : vector<16x3xf32> to vector<1x16x3xf32>
    tpu.vector_store %arg9[%c0_88, %c0_89, %c0_90], %110 {strides = array<i32>} : memref<1x16x3xf32, #tpu.memory_space<vmem>>, vector<1x16x3xf32>,
    %c0_91 = arith.constant 0 : index
    %c0_92 = arith.constant 0 : index
    %c0_93 = arith.constant 0 : index
    %111 = vector.load %arg10[%c0_91, %c0_92, %c0_93] : memref<1x16x32xf32, #tpu.memory_space<vmem>>, vector<1x16x32xf32>
    %112 = vector.shape_cast %111 : vector<1x16x32xf32> to vector<16x32xf32>
    %113 = vector.shape_cast %107 : vector<16x32xf32> to vector<1x16x32xf32>
    tpu.vector_store %arg10[%c0_91, %c0_92, %c0_93], %113 {strides = array<i32>} : memref<1x16x32xf32, #tpu.memory_space<vmem>>, vector<1x16x32xf32>,
    return
  }
  func.func @transform_0(%arg0: i32, %arg1: i32) -> (i32, i32, i32, i32) {
    %c0_i32 = arith.constant 0 : i32
    %c0_i32_0 = arith.constant 0 : i32
    %c0_i32_1 = arith.constant 0 : i32
    return %arg0, %c0_i32, %arg1, %c0_i32_0 : i32, i32, i32, i32
  }
  func.func @transform_1(%arg0: i32, %arg1: i32) -> (i32, i32, i32, i32) {
    %c0_i32 = arith.constant 0 : i32
    %c0_i32_0 = arith.constant 0 : i32
    %c0_i32_1 = arith.constant 0 : i32
    return %arg0, %c0_i32, %arg1, %c0_i32_0 : i32, i32, i32, i32
  }
  func.func @transform_2(%arg0: i32, %arg1: i32) -> (i32, i32) {
    %c0_i32 = arith.constant 0 : i32
    %c0_i32_0 = arith.constant 0 : i32
    %c0_i32_1 = arith.constant 0 : i32
    return %c0_i32, %c0_i32_0 : i32, i32
  }
  func.func @transform_3(%arg0: i32, %arg1: i32) -> (i32, i32) {
    %c0_i32 = arith.constant 0 : i32
    %c0_i32_0 = arith.constant 0 : i32
    %c0_i32_1 = arith.constant 0 : i32
    return %c0_i32, %c0_i32_0 : i32, i32
  }
  func.func @transform_4(%arg0: i32, %arg1: i32) -> (i32, i32) {
    %c0_i32 = arith.constant 0 : i32
    %c0_i32_0 = arith.constant 0 : i32
    %c0_i32_1 = arith.constant 0 : i32
    return %c0_i32, %c0_i32_0 : i32, i32
  }
  func.func @transform_5(%arg0: i32, %arg1: i32) -> (i32, i32) {
    %c0_i32 = arith.constant 0 : i32
    %c0_i32_0 = arith.constant 0 : i32
    %c0_i32_1 = arith.constant 0 : i32
    return %c0_i32, %c0_i32_0 : i32, i32
  }
  func.func @transform_6(%arg0: i32, %arg1: i32) -> (i32, i32) {
    %c0_i32 = arith.constant 0 : i32
    %c0_i32_0 = arith.constant 0 : i32
    %c0_i32_1 = arith.constant 0 : i32
    return %c0_i32, %c0_i32_0 : i32, i32
  }
  func.func @transform_7(%arg0: i32, %arg1: i32) -> (i32, i32, i32) {
    %c0_i32 = arith.constant 0 : i32
    %c0_i32_0 = arith.constant 0 : i32
    return %arg0, %arg1, %c0_i32 : i32, i32, i32
  }
  func.func @transform_8(%arg0: i32, %arg1: i32) -> (i32, i32, i32) {
    %c0_i32 = arith.constant 0 : i32
    %c0_i32_0 = arith.constant 0 : i32
    return %arg0, %arg1, %c0_i32 : i32, i32, i32
  }
}

module attributes {stable_mosaic.version = 11 : i64} {
  func.func @_sa_kernel(%arg0: i32, %arg1: i32, %arg2: memref<1x4x4x3xf32, #tpu.memory_space<vmem>>, %arg3: memref<1x4x4x32xf32, #tpu.memory_space<vmem>>, %arg4: memref<3x64xbf16, #tpu.memory_space<vmem>>, %arg5: memref<32x64xbf16, #tpu.memory_space<vmem>>, %arg6: memref<1x64xf32, #tpu.memory_space<vmem>>, %arg7: memref<64x64xbf16, #tpu.memory_space<vmem>>, %arg8: memref<1x64xf32, #tpu.memory_space<vmem>>, %arg9: memref<1x4x3xf32, #tpu.memory_space<vmem>>, %arg10: memref<1x4x64xf32, #tpu.memory_space<vmem>>) attributes {dimension_semantics = [#tpu.dimension_semantics<parallel>, #tpu.dimension_semantics<parallel>], iteration_bounds = array<i64: 2, 1>, scalar_prefetch = 0 : i64, scratch_operands = 0 : i64, tpu.core_type = #tpu.core_type<tc>, window_params = [{transform_indices = @transform_0, window_bounds = array<i64: 1, 4, 4, 3>}, {transform_indices = @transform_1, window_bounds = array<i64: 1, 4, 4, 32>}, {pipeline_mode = #tpu.pipeline_mode<synchronous>, transform_indices = @transform_2, window_bounds = array<i64: 3, 64>}, {pipeline_mode = #tpu.pipeline_mode<synchronous>, transform_indices = @transform_3, window_bounds = array<i64: 32, 64>}, {pipeline_mode = #tpu.pipeline_mode<synchronous>, transform_indices = @transform_4, window_bounds = array<i64: 1, 64>}, {pipeline_mode = #tpu.pipeline_mode<synchronous>, transform_indices = @transform_5, window_bounds = array<i64: 64, 64>}, {pipeline_mode = #tpu.pipeline_mode<synchronous>, transform_indices = @transform_6, window_bounds = array<i64: 1, 64>}, {transform_indices = @transform_7, window_bounds = array<i64: 1, 4, 3>}, {transform_indices = @transform_8, window_bounds = array<i64: 1, 4, 64>}]} {
    %c0 = arith.constant 0 : index
    %c0_0 = arith.constant 0 : index
    %c0_1 = arith.constant 0 : index
    %c0_2 = arith.constant 0 : index
    %0 = vector.load %arg2[%c0, %c0_0, %c0_1, %c0_2] : memref<1x4x4x3xf32, #tpu.memory_space<vmem>>, vector<1x1x4x3xf32>
    %1 = vector.shape_cast %0 : vector<1x1x4x3xf32> to vector<4x3xf32>
    %c0_3 = arith.constant 0 : index
    %c1 = arith.constant 1 : index
    %c0_4 = arith.constant 0 : index
    %c0_5 = arith.constant 0 : index
    %2 = vector.load %arg2[%c0_3, %c1, %c0_4, %c0_5] : memref<1x4x4x3xf32, #tpu.memory_space<vmem>>, vector<1x1x4x3xf32>
    %3 = vector.shape_cast %2 : vector<1x1x4x3xf32> to vector<4x3xf32>
    %c0_6 = arith.constant 0 : index
    %c2 = arith.constant 2 : index
    %c0_7 = arith.constant 0 : index
    %c0_8 = arith.constant 0 : index
    %4 = vector.load %arg2[%c0_6, %c2, %c0_7, %c0_8] : memref<1x4x4x3xf32, #tpu.memory_space<vmem>>, vector<1x1x4x3xf32>
    %5 = vector.shape_cast %4 : vector<1x1x4x3xf32> to vector<4x3xf32>
    %c0_9 = arith.constant 0 : index
    %c3 = arith.constant 3 : index
    %c0_10 = arith.constant 0 : index
    %c0_11 = arith.constant 0 : index
    %6 = vector.load %arg2[%c0_9, %c3, %c0_10, %c0_11] : memref<1x4x4x3xf32, #tpu.memory_space<vmem>>, vector<1x1x4x3xf32>
    %7 = vector.shape_cast %6 : vector<1x1x4x3xf32> to vector<4x3xf32>
    %8 = arith.addf %1, %3 : vector<4x3xf32>
    %9 = arith.addf %8, %5 : vector<4x3xf32>
    %10 = arith.addf %9, %7 : vector<4x3xf32>
    %cst = arith.constant 2.500000e-01 : f32
    %11 = vector.broadcast %cst : f32 to vector<4x3xf32>
    %12 = arith.mulf %10, %11 : vector<4x3xf32>
    %13 = arith.subf %1, %12 : vector<4x3xf32>
    %c0_12 = arith.constant 0 : index
    %c0_13 = arith.constant 0 : index
    %c0_14 = arith.constant 0 : index
    %c0_15 = arith.constant 0 : index
    %14 = vector.load %arg3[%c0_12, %c0_13, %c0_14, %c0_15] : memref<1x4x4x32xf32, #tpu.memory_space<vmem>>, vector<1x1x4x32xf32>
    %15 = vector.shape_cast %14 : vector<1x1x4x32xf32> to vector<4x32xf32>
    %c0_16 = arith.constant 0 : index
    %c0_17 = arith.constant 0 : index
    %16 = vector.load %arg4[%c0_16, %c0_17] : memref<3x64xbf16, #tpu.memory_space<vmem>>, vector<3x64xbf16>
    %17 = arith.truncf %13 : vector<4x3xf32> to vector<4x3xbf16>
    %cst_18 = arith.constant dense<0.000000e+00> : vector<4x64xf32>
    %18 = tpu.matmul %17, %16, %cst_18 {dimension_numbers = #tpu.dot_dimension_numbers<[1], [0], [0], [1], [0, 0, 1, 1], [], []>} : vector<4x3xbf16>, vector<3x64xbf16>, vector<4x64xf32> -> vector<4x64xf32>
    %c0_19 = arith.constant 0 : index
    %c0_20 = arith.constant 0 : index
    %19 = vector.load %arg5[%c0_19, %c0_20] : memref<32x64xbf16, #tpu.memory_space<vmem>>, vector<32x64xbf16>
    %20 = arith.truncf %15 : vector<4x32xf32> to vector<4x32xbf16>
    %cst_21 = arith.constant dense<0.000000e+00> : vector<4x64xf32>
    %21 = tpu.matmul %20, %19, %cst_21 {dimension_numbers = #tpu.dot_dimension_numbers<[1], [0], [0], [1], [0, 0, 1, 1], [], []>} : vector<4x32xbf16>, vector<32x64xbf16>, vector<4x64xf32> -> vector<4x64xf32>
    %22 = arith.addf %18, %21 : vector<4x64xf32>
    %c0_22 = arith.constant 0 : index
    %c0_23 = arith.constant 0 : index
    %23 = vector.load %arg6[%c0_22, %c0_23] : memref<1x64xf32, #tpu.memory_space<vmem>>, vector<1x64xf32>
    %24 = vector.broadcast %23 : vector<1x64xf32> to vector<4x64xf32>
    %25 = arith.addf %22, %24 : vector<4x64xf32>
    %cst_24 = arith.constant 0.000000e+00 : f32
    %26 = vector.broadcast %cst_24 : f32 to vector<4x64xf32>
    %27 = arith.maximumf %25, %26 : vector<4x64xf32>
    %c0_25 = arith.constant 0 : index
    %c0_26 = arith.constant 0 : index
    %28 = vector.load %arg7[%c0_25, %c0_26] : memref<64x64xbf16, #tpu.memory_space<vmem>>, vector<64x64xbf16>
    %29 = arith.truncf %27 : vector<4x64xf32> to vector<4x64xbf16>
    %cst_27 = arith.constant dense<0.000000e+00> : vector<4x64xf32>
    %30 = tpu.matmul %29, %28, %cst_27 {dimension_numbers = #tpu.dot_dimension_numbers<[1], [0], [0], [1], [0, 0, 1, 1], [], []>} : vector<4x64xbf16>, vector<64x64xbf16>, vector<4x64xf32> -> vector<4x64xf32>
    %c0_28 = arith.constant 0 : index
    %c0_29 = arith.constant 0 : index
    %31 = vector.load %arg8[%c0_28, %c0_29] : memref<1x64xf32, #tpu.memory_space<vmem>>, vector<1x64xf32>
    %32 = vector.broadcast %31 : vector<1x64xf32> to vector<4x64xf32>
    %33 = arith.addf %30, %32 : vector<4x64xf32>
    %cst_30 = arith.constant 0.000000e+00 : f32
    %34 = vector.broadcast %cst_30 : f32 to vector<4x64xf32>
    %35 = arith.maximumf %33, %34 : vector<4x64xf32>
    %36 = arith.subf %3, %12 : vector<4x3xf32>
    %c0_31 = arith.constant 0 : index
    %c1_32 = arith.constant 1 : index
    %c0_33 = arith.constant 0 : index
    %c0_34 = arith.constant 0 : index
    %37 = vector.load %arg3[%c0_31, %c1_32, %c0_33, %c0_34] : memref<1x4x4x32xf32, #tpu.memory_space<vmem>>, vector<1x1x4x32xf32>
    %38 = vector.shape_cast %37 : vector<1x1x4x32xf32> to vector<4x32xf32>
    %c0_35 = arith.constant 0 : index
    %c0_36 = arith.constant 0 : index
    %39 = vector.load %arg4[%c0_35, %c0_36] : memref<3x64xbf16, #tpu.memory_space<vmem>>, vector<3x64xbf16>
    %40 = arith.truncf %36 : vector<4x3xf32> to vector<4x3xbf16>
    %cst_37 = arith.constant dense<0.000000e+00> : vector<4x64xf32>
    %41 = tpu.matmul %40, %39, %cst_37 {dimension_numbers = #tpu.dot_dimension_numbers<[1], [0], [0], [1], [0, 0, 1, 1], [], []>} : vector<4x3xbf16>, vector<3x64xbf16>, vector<4x64xf32> -> vector<4x64xf32>
    %c0_38 = arith.constant 0 : index
    %c0_39 = arith.constant 0 : index
    %42 = vector.load %arg5[%c0_38, %c0_39] : memref<32x64xbf16, #tpu.memory_space<vmem>>, vector<32x64xbf16>
    %43 = arith.truncf %38 : vector<4x32xf32> to vector<4x32xbf16>
    %cst_40 = arith.constant dense<0.000000e+00> : vector<4x64xf32>
    %44 = tpu.matmul %43, %42, %cst_40 {dimension_numbers = #tpu.dot_dimension_numbers<[1], [0], [0], [1], [0, 0, 1, 1], [], []>} : vector<4x32xbf16>, vector<32x64xbf16>, vector<4x64xf32> -> vector<4x64xf32>
    %45 = arith.addf %41, %44 : vector<4x64xf32>
    %c0_41 = arith.constant 0 : index
    %c0_42 = arith.constant 0 : index
    %46 = vector.load %arg6[%c0_41, %c0_42] : memref<1x64xf32, #tpu.memory_space<vmem>>, vector<1x64xf32>
    %47 = vector.broadcast %46 : vector<1x64xf32> to vector<4x64xf32>
    %48 = arith.addf %45, %47 : vector<4x64xf32>
    %cst_43 = arith.constant 0.000000e+00 : f32
    %49 = vector.broadcast %cst_43 : f32 to vector<4x64xf32>
    %50 = arith.maximumf %48, %49 : vector<4x64xf32>
    %c0_44 = arith.constant 0 : index
    %c0_45 = arith.constant 0 : index
    %51 = vector.load %arg7[%c0_44, %c0_45] : memref<64x64xbf16, #tpu.memory_space<vmem>>, vector<64x64xbf16>
    %52 = arith.truncf %50 : vector<4x64xf32> to vector<4x64xbf16>
    %cst_46 = arith.constant dense<0.000000e+00> : vector<4x64xf32>
    %53 = tpu.matmul %52, %51, %cst_46 {dimension_numbers = #tpu.dot_dimension_numbers<[1], [0], [0], [1], [0, 0, 1, 1], [], []>} : vector<4x64xbf16>, vector<64x64xbf16>, vector<4x64xf32> -> vector<4x64xf32>
    %c0_47 = arith.constant 0 : index
    %c0_48 = arith.constant 0 : index
    %54 = vector.load %arg8[%c0_47, %c0_48] : memref<1x64xf32, #tpu.memory_space<vmem>>, vector<1x64xf32>
    %55 = vector.broadcast %54 : vector<1x64xf32> to vector<4x64xf32>
    %56 = arith.addf %53, %55 : vector<4x64xf32>
    %cst_49 = arith.constant 0.000000e+00 : f32
    %57 = vector.broadcast %cst_49 : f32 to vector<4x64xf32>
    %58 = arith.maximumf %56, %57 : vector<4x64xf32>
    %59 = arith.maximumf %35, %58 : vector<4x64xf32>
    %60 = arith.subf %5, %12 : vector<4x3xf32>
    %c0_50 = arith.constant 0 : index
    %c2_51 = arith.constant 2 : index
    %c0_52 = arith.constant 0 : index
    %c0_53 = arith.constant 0 : index
    %61 = vector.load %arg3[%c0_50, %c2_51, %c0_52, %c0_53] : memref<1x4x4x32xf32, #tpu.memory_space<vmem>>, vector<1x1x4x32xf32>
    %62 = vector.shape_cast %61 : vector<1x1x4x32xf32> to vector<4x32xf32>
    %c0_54 = arith.constant 0 : index
    %c0_55 = arith.constant 0 : index
    %63 = vector.load %arg4[%c0_54, %c0_55] : memref<3x64xbf16, #tpu.memory_space<vmem>>, vector<3x64xbf16>
    %64 = arith.truncf %60 : vector<4x3xf32> to vector<4x3xbf16>
    %cst_56 = arith.constant dense<0.000000e+00> : vector<4x64xf32>
    %65 = tpu.matmul %64, %63, %cst_56 {dimension_numbers = #tpu.dot_dimension_numbers<[1], [0], [0], [1], [0, 0, 1, 1], [], []>} : vector<4x3xbf16>, vector<3x64xbf16>, vector<4x64xf32> -> vector<4x64xf32>
    %c0_57 = arith.constant 0 : index
    %c0_58 = arith.constant 0 : index
    %66 = vector.load %arg5[%c0_57, %c0_58] : memref<32x64xbf16, #tpu.memory_space<vmem>>, vector<32x64xbf16>
    %67 = arith.truncf %62 : vector<4x32xf32> to vector<4x32xbf16>
    %cst_59 = arith.constant dense<0.000000e+00> : vector<4x64xf32>
    %68 = tpu.matmul %67, %66, %cst_59 {dimension_numbers = #tpu.dot_dimension_numbers<[1], [0], [0], [1], [0, 0, 1, 1], [], []>} : vector<4x32xbf16>, vector<32x64xbf16>, vector<4x64xf32> -> vector<4x64xf32>
    %69 = arith.addf %65, %68 : vector<4x64xf32>
    %c0_60 = arith.constant 0 : index
    %c0_61 = arith.constant 0 : index
    %70 = vector.load %arg6[%c0_60, %c0_61] : memref<1x64xf32, #tpu.memory_space<vmem>>, vector<1x64xf32>
    %71 = vector.broadcast %70 : vector<1x64xf32> to vector<4x64xf32>
    %72 = arith.addf %69, %71 : vector<4x64xf32>
    %cst_62 = arith.constant 0.000000e+00 : f32
    %73 = vector.broadcast %cst_62 : f32 to vector<4x64xf32>
    %74 = arith.maximumf %72, %73 : vector<4x64xf32>
    %c0_63 = arith.constant 0 : index
    %c0_64 = arith.constant 0 : index
    %75 = vector.load %arg7[%c0_63, %c0_64] : memref<64x64xbf16, #tpu.memory_space<vmem>>, vector<64x64xbf16>
    %76 = arith.truncf %74 : vector<4x64xf32> to vector<4x64xbf16>
    %cst_65 = arith.constant dense<0.000000e+00> : vector<4x64xf32>
    %77 = tpu.matmul %76, %75, %cst_65 {dimension_numbers = #tpu.dot_dimension_numbers<[1], [0], [0], [1], [0, 0, 1, 1], [], []>} : vector<4x64xbf16>, vector<64x64xbf16>, vector<4x64xf32> -> vector<4x64xf32>
    %c0_66 = arith.constant 0 : index
    %c0_67 = arith.constant 0 : index
    %78 = vector.load %arg8[%c0_66, %c0_67] : memref<1x64xf32, #tpu.memory_space<vmem>>, vector<1x64xf32>
    %79 = vector.broadcast %78 : vector<1x64xf32> to vector<4x64xf32>
    %80 = arith.addf %77, %79 : vector<4x64xf32>
    %cst_68 = arith.constant 0.000000e+00 : f32
    %81 = vector.broadcast %cst_68 : f32 to vector<4x64xf32>
    %82 = arith.maximumf %80, %81 : vector<4x64xf32>
    %83 = arith.maximumf %59, %82 : vector<4x64xf32>
    %84 = arith.subf %7, %12 : vector<4x3xf32>
    %c0_69 = arith.constant 0 : index
    %c3_70 = arith.constant 3 : index
    %c0_71 = arith.constant 0 : index
    %c0_72 = arith.constant 0 : index
    %85 = vector.load %arg3[%c0_69, %c3_70, %c0_71, %c0_72] : memref<1x4x4x32xf32, #tpu.memory_space<vmem>>, vector<1x1x4x32xf32>
    %86 = vector.shape_cast %85 : vector<1x1x4x32xf32> to vector<4x32xf32>
    %c0_73 = arith.constant 0 : index
    %c0_74 = arith.constant 0 : index
    %87 = vector.load %arg4[%c0_73, %c0_74] : memref<3x64xbf16, #tpu.memory_space<vmem>>, vector<3x64xbf16>
    %88 = arith.truncf %84 : vector<4x3xf32> to vector<4x3xbf16>
    %cst_75 = arith.constant dense<0.000000e+00> : vector<4x64xf32>
    %89 = tpu.matmul %88, %87, %cst_75 {dimension_numbers = #tpu.dot_dimension_numbers<[1], [0], [0], [1], [0, 0, 1, 1], [], []>} : vector<4x3xbf16>, vector<3x64xbf16>, vector<4x64xf32> -> vector<4x64xf32>
    %c0_76 = arith.constant 0 : index
    %c0_77 = arith.constant 0 : index
    %90 = vector.load %arg5[%c0_76, %c0_77] : memref<32x64xbf16, #tpu.memory_space<vmem>>, vector<32x64xbf16>
    %91 = arith.truncf %86 : vector<4x32xf32> to vector<4x32xbf16>
    %cst_78 = arith.constant dense<0.000000e+00> : vector<4x64xf32>
    %92 = tpu.matmul %91, %90, %cst_78 {dimension_numbers = #tpu.dot_dimension_numbers<[1], [0], [0], [1], [0, 0, 1, 1], [], []>} : vector<4x32xbf16>, vector<32x64xbf16>, vector<4x64xf32> -> vector<4x64xf32>
    %93 = arith.addf %89, %92 : vector<4x64xf32>
    %c0_79 = arith.constant 0 : index
    %c0_80 = arith.constant 0 : index
    %94 = vector.load %arg6[%c0_79, %c0_80] : memref<1x64xf32, #tpu.memory_space<vmem>>, vector<1x64xf32>
    %95 = vector.broadcast %94 : vector<1x64xf32> to vector<4x64xf32>
    %96 = arith.addf %93, %95 : vector<4x64xf32>
    %cst_81 = arith.constant 0.000000e+00 : f32
    %97 = vector.broadcast %cst_81 : f32 to vector<4x64xf32>
    %98 = arith.maximumf %96, %97 : vector<4x64xf32>
    %c0_82 = arith.constant 0 : index
    %c0_83 = arith.constant 0 : index
    %99 = vector.load %arg7[%c0_82, %c0_83] : memref<64x64xbf16, #tpu.memory_space<vmem>>, vector<64x64xbf16>
    %100 = arith.truncf %98 : vector<4x64xf32> to vector<4x64xbf16>
    %cst_84 = arith.constant dense<0.000000e+00> : vector<4x64xf32>
    %101 = tpu.matmul %100, %99, %cst_84 {dimension_numbers = #tpu.dot_dimension_numbers<[1], [0], [0], [1], [0, 0, 1, 1], [], []>} : vector<4x64xbf16>, vector<64x64xbf16>, vector<4x64xf32> -> vector<4x64xf32>
    %c0_85 = arith.constant 0 : index
    %c0_86 = arith.constant 0 : index
    %102 = vector.load %arg8[%c0_85, %c0_86] : memref<1x64xf32, #tpu.memory_space<vmem>>, vector<1x64xf32>
    %103 = vector.broadcast %102 : vector<1x64xf32> to vector<4x64xf32>
    %104 = arith.addf %101, %103 : vector<4x64xf32>
    %cst_87 = arith.constant 0.000000e+00 : f32
    %105 = vector.broadcast %cst_87 : f32 to vector<4x64xf32>
    %106 = arith.maximumf %104, %105 : vector<4x64xf32>
    %107 = arith.maximumf %83, %106 : vector<4x64xf32>
    %c0_88 = arith.constant 0 : index
    %c0_89 = arith.constant 0 : index
    %c0_90 = arith.constant 0 : index
    %108 = vector.load %arg9[%c0_88, %c0_89, %c0_90] : memref<1x4x3xf32, #tpu.memory_space<vmem>>, vector<1x4x3xf32>
    %109 = vector.shape_cast %108 : vector<1x4x3xf32> to vector<4x3xf32>
    %110 = vector.shape_cast %12 : vector<4x3xf32> to vector<1x4x3xf32>
    tpu.vector_store %arg9[%c0_88, %c0_89, %c0_90], %110 {strides = array<i32>} : memref<1x4x3xf32, #tpu.memory_space<vmem>>, vector<1x4x3xf32>,
    %c0_91 = arith.constant 0 : index
    %c0_92 = arith.constant 0 : index
    %c0_93 = arith.constant 0 : index
    %111 = vector.load %arg10[%c0_91, %c0_92, %c0_93] : memref<1x4x64xf32, #tpu.memory_space<vmem>>, vector<1x4x64xf32>
    %112 = vector.shape_cast %111 : vector<1x4x64xf32> to vector<4x64xf32>
    %113 = vector.shape_cast %107 : vector<4x64xf32> to vector<1x4x64xf32>
    tpu.vector_store %arg10[%c0_91, %c0_92, %c0_93], %113 {strides = array<i32>} : memref<1x4x64xf32, #tpu.memory_space<vmem>>, vector<1x4x64xf32>,
    return
  }
  func.func @transform_0(%arg0: i32, %arg1: i32) -> (i32, i32, i32, i32) {
    %c0_i32 = arith.constant 0 : i32
    %c0_i32_0 = arith.constant 0 : i32
    %c0_i32_1 = arith.constant 0 : i32
    return %arg0, %c0_i32, %arg1, %c0_i32_0 : i32, i32, i32, i32
  }
  func.func @transform_1(%arg0: i32, %arg1: i32) -> (i32, i32, i32, i32) {
    %c0_i32 = arith.constant 0 : i32
    %c0_i32_0 = arith.constant 0 : i32
    %c0_i32_1 = arith.constant 0 : i32
    return %arg0, %c0_i32, %arg1, %c0_i32_0 : i32, i32, i32, i32
  }
  func.func @transform_2(%arg0: i32, %arg1: i32) -> (i32, i32) {
    %c0_i32 = arith.constant 0 : i32
    %c0_i32_0 = arith.constant 0 : i32
    %c0_i32_1 = arith.constant 0 : i32
    return %c0_i32, %c0_i32_0 : i32, i32
  }
  func.func @transform_3(%arg0: i32, %arg1: i32) -> (i32, i32) {
    %c0_i32 = arith.constant 0 : i32
    %c0_i32_0 = arith.constant 0 : i32
    %c0_i32_1 = arith.constant 0 : i32
    return %c0_i32, %c0_i32_0 : i32, i32
  }
  func.func @transform_4(%arg0: i32, %arg1: i32) -> (i32, i32) {
    %c0_i32 = arith.constant 0 : i32
    %c0_i32_0 = arith.constant 0 : i32
    %c0_i32_1 = arith.constant 0 : i32
    return %c0_i32, %c0_i32_0 : i32, i32
  }
  func.func @transform_5(%arg0: i32, %arg1: i32) -> (i32, i32) {
    %c0_i32 = arith.constant 0 : i32
    %c0_i32_0 = arith.constant 0 : i32
    %c0_i32_1 = arith.constant 0 : i32
    return %c0_i32, %c0_i32_0 : i32, i32
  }
  func.func @transform_6(%arg0: i32, %arg1: i32) -> (i32, i32) {
    %c0_i32 = arith.constant 0 : i32
    %c0_i32_0 = arith.constant 0 : i32
    %c0_i32_1 = arith.constant 0 : i32
    return %c0_i32, %c0_i32_0 : i32, i32
  }
  func.func @transform_7(%arg0: i32, %arg1: i32) -> (i32, i32, i32) {
    %c0_i32 = arith.constant 0 : i32
    %c0_i32_0 = arith.constant 0 : i32
    return %arg0, %arg1, %c0_i32 : i32, i32, i32
  }
  func.func @transform_8(%arg0: i32, %arg1: i32) -> (i32, i32, i32) {
    %c0_i32 = arith.constant 0 : i32
    %c0_i32_0 = arith.constant 0 : i32
    return %arg0, %arg1, %c0_i32 : i32, i32, i32
  }
}

module attributes {stable_mosaic.version = 11 : i64} {
  func.func @_global_sa_fp3_kernel(%arg0: i32, %arg1: memref<1x4x3xf32, #tpu.memory_space<vmem>>, %arg2: memref<1x4x64xf32, #tpu.memory_space<vmem>>, %arg3: memref<3x128xbf16, #tpu.memory_space<vmem>>, %arg4: memref<64x128xbf16, #tpu.memory_space<vmem>>, %arg5: memref<1x128xf32, #tpu.memory_space<vmem>>, %arg6: memref<128x128xbf16, #tpu.memory_space<vmem>>, %arg7: memref<1x128xf32, #tpu.memory_space<vmem>>, %arg8: memref<128x64xbf16, #tpu.memory_space<vmem>>, %arg9: memref<64x64xbf16, #tpu.memory_space<vmem>>, %arg10: memref<1x64xf32, #tpu.memory_space<vmem>>, %arg11: memref<1x1x128xf32, #tpu.memory_space<vmem>>, %arg12: memref<1x4x64xf32, #tpu.memory_space<vmem>>) attributes {dimension_semantics = [#tpu.dimension_semantics<parallel>], iteration_bounds = array<i64: 2>, scalar_prefetch = 0 : i64, scratch_operands = 0 : i64, tpu.core_type = #tpu.core_type<tc>, window_params = [{transform_indices = @transform_0, window_bounds = array<i64: 1, 4, 3>}, {transform_indices = @transform_1, window_bounds = array<i64: 1, 4, 64>}, {pipeline_mode = #tpu.pipeline_mode<synchronous>, transform_indices = @transform_2, window_bounds = array<i64: 3, 128>}, {pipeline_mode = #tpu.pipeline_mode<synchronous>, transform_indices = @transform_3, window_bounds = array<i64: 64, 128>}, {pipeline_mode = #tpu.pipeline_mode<synchronous>, transform_indices = @transform_4, window_bounds = array<i64: 1, 128>}, {pipeline_mode = #tpu.pipeline_mode<synchronous>, transform_indices = @transform_5, window_bounds = array<i64: 128, 128>}, {pipeline_mode = #tpu.pipeline_mode<synchronous>, transform_indices = @transform_6, window_bounds = array<i64: 1, 128>}, {pipeline_mode = #tpu.pipeline_mode<synchronous>, transform_indices = @transform_7, window_bounds = array<i64: 128, 64>}, {pipeline_mode = #tpu.pipeline_mode<synchronous>, transform_indices = @transform_8, window_bounds = array<i64: 64, 64>}, {pipeline_mode = #tpu.pipeline_mode<synchronous>, transform_indices = @transform_9, window_bounds = array<i64: 1, 64>}, {transform_indices = @transform_10, window_bounds = array<i64: 1, 1, 128>}, {transform_indices = @transform_11, window_bounds = array<i64: 1, 4, 64>}]} {
    %c0 = arith.constant 0 : index
    %c0_0 = arith.constant 0 : index
    %c0_1 = arith.constant 0 : index
    %0 = vector.load %arg1[%c0, %c0_0, %c0_1] : memref<1x4x3xf32, #tpu.memory_space<vmem>>, vector<1x4x3xf32>
    %1 = vector.shape_cast %0 : vector<1x4x3xf32> to vector<4x3xf32>
    %c0_2 = arith.constant 0 : index
    %c0_3 = arith.constant 0 : index
    %c0_4 = arith.constant 0 : index
    %2 = vector.load %arg2[%c0_2, %c0_3, %c0_4] : memref<1x4x64xf32, #tpu.memory_space<vmem>>, vector<1x4x64xf32>
    %3 = vector.shape_cast %2 : vector<1x4x64xf32> to vector<4x64xf32>
    %c0_5 = arith.constant 0 : index
    %c0_6 = arith.constant 0 : index
    %4 = vector.load %arg3[%c0_5, %c0_6] : memref<3x128xbf16, #tpu.memory_space<vmem>>, vector<3x128xbf16>
    %5 = arith.truncf %1 : vector<4x3xf32> to vector<4x3xbf16>
    %cst = arith.constant dense<0.000000e+00> : vector<4x128xf32>
    %6 = tpu.matmul %5, %4, %cst {dimension_numbers = #tpu.dot_dimension_numbers<[1], [0], [0], [1], [0, 0, 1, 1], [], []>} : vector<4x3xbf16>, vector<3x128xbf16>, vector<4x128xf32> -> vector<4x128xf32>
    %c0_7 = arith.constant 0 : index
    %c0_8 = arith.constant 0 : index
    %7 = vector.load %arg4[%c0_7, %c0_8] : memref<64x128xbf16, #tpu.memory_space<vmem>>, vector<64x128xbf16>
    %8 = arith.truncf %3 : vector<4x64xf32> to vector<4x64xbf16>
    %cst_9 = arith.constant dense<0.000000e+00> : vector<4x128xf32>
    %9 = tpu.matmul %8, %7, %cst_9 {dimension_numbers = #tpu.dot_dimension_numbers<[1], [0], [0], [1], [0, 0, 1, 1], [], []>} : vector<4x64xbf16>, vector<64x128xbf16>, vector<4x128xf32> -> vector<4x128xf32>
    %10 = arith.addf %6, %9 : vector<4x128xf32>
    %c0_10 = arith.constant 0 : index
    %c0_11 = arith.constant 0 : index
    %11 = vector.load %arg5[%c0_10, %c0_11] : memref<1x128xf32, #tpu.memory_space<vmem>>, vector<1x128xf32>
    %12 = vector.broadcast %11 : vector<1x128xf32> to vector<4x128xf32>
    %13 = arith.addf %10, %12 : vector<4x128xf32>
    %cst_12 = arith.constant 0.000000e+00 : f32
    %14 = vector.broadcast %cst_12 : f32 to vector<4x128xf32>
    %15 = arith.maximumf %13, %14 : vector<4x128xf32>
    %c0_13 = arith.constant 0 : index
    %c0_14 = arith.constant 0 : index
    %16 = vector.load %arg6[%c0_13, %c0_14] : memref<128x128xbf16, #tpu.memory_space<vmem>>, vector<128x128xbf16>
    %17 = arith.truncf %15 : vector<4x128xf32> to vector<4x128xbf16>
    %cst_15 = arith.constant dense<0.000000e+00> : vector<4x128xf32>
    %18 = tpu.matmul %17, %16, %cst_15 {dimension_numbers = #tpu.dot_dimension_numbers<[1], [0], [0], [1], [0, 0, 1, 1], [], []>} : vector<4x128xbf16>, vector<128x128xbf16>, vector<4x128xf32> -> vector<4x128xf32>
    %c0_16 = arith.constant 0 : index
    %c0_17 = arith.constant 0 : index
    %19 = vector.load %arg7[%c0_16, %c0_17] : memref<1x128xf32, #tpu.memory_space<vmem>>, vector<1x128xf32>
    %20 = vector.broadcast %19 : vector<1x128xf32> to vector<4x128xf32>
    %21 = arith.addf %18, %20 : vector<4x128xf32>
    %cst_18 = arith.constant 0.000000e+00 : f32
    %22 = vector.broadcast %cst_18 : f32 to vector<4x128xf32>
    %23 = arith.maximumf %21, %22 : vector<4x128xf32>
    %cst_19 = arith.constant dense<0xFF800000> : vector<128xf32>
    %24 = vector.multi_reduction <maximumf>, %23, %cst_19 [0] : vector<4x128xf32> to vector<128xf32>
    %25 = vector.shape_cast %24 : vector<128xf32> to vector<1x128xf32>
    %c0_20 = arith.constant 0 : index
    %c0_21 = arith.constant 0 : index
    %26 = vector.load %arg8[%c0_20, %c0_21] : memref<128x64xbf16, #tpu.memory_space<vmem>>, vector<128x64xbf16>
    %27 = arith.truncf %25 : vector<1x128xf32> to vector<1x128xbf16>
    %cst_22 = arith.constant dense<0.000000e+00> : vector<1x64xf32>
    %28 = tpu.matmul %27, %26, %cst_22 {dimension_numbers = #tpu.dot_dimension_numbers<[1], [0], [0], [1], [0, 0, 1, 1], [], []>} : vector<1x128xbf16>, vector<128x64xbf16>, vector<1x64xf32> -> vector<1x64xf32>
    %c0_23 = arith.constant 0 : index
    %c0_24 = arith.constant 0 : index
    %29 = vector.load %arg9[%c0_23, %c0_24] : memref<64x64xbf16, #tpu.memory_space<vmem>>, vector<64x64xbf16>
    %30 = arith.truncf %3 : vector<4x64xf32> to vector<4x64xbf16>
    %cst_25 = arith.constant dense<0.000000e+00> : vector<4x64xf32>
    %31 = tpu.matmul %30, %29, %cst_25 {dimension_numbers = #tpu.dot_dimension_numbers<[1], [0], [0], [1], [0, 0, 1, 1], [], []>} : vector<4x64xbf16>, vector<64x64xbf16>, vector<4x64xf32> -> vector<4x64xf32>
    %c0_26 = arith.constant 0 : index
    %c0_27 = arith.constant 0 : index
    %32 = vector.load %arg10[%c0_26, %c0_27] : memref<1x64xf32, #tpu.memory_space<vmem>>, vector<1x64xf32>
    %33 = vector.broadcast %32 : vector<1x64xf32> to vector<4x64xf32>
    %34 = arith.addf %31, %33 : vector<4x64xf32>
    %35 = vector.broadcast %28 : vector<1x64xf32> to vector<4x64xf32>
    %36 = arith.addf %34, %35 : vector<4x64xf32>
    %cst_28 = arith.constant 0.000000e+00 : f32
    %37 = vector.broadcast %cst_28 : f32 to vector<4x64xf32>
    %38 = arith.maximumf %36, %37 : vector<4x64xf32>
    %c0_29 = arith.constant 0 : index
    %c0_30 = arith.constant 0 : index
    %c0_31 = arith.constant 0 : index
    %39 = vector.load %arg11[%c0_29, %c0_30, %c0_31] : memref<1x1x128xf32, #tpu.memory_space<vmem>>, vector<1x1x128xf32>
    %40 = vector.shape_cast %39 : vector<1x1x128xf32> to vector<1x128xf32>
    %41 = vector.shape_cast %25 : vector<1x128xf32> to vector<1x1x128xf32>
    tpu.vector_store %arg11[%c0_29, %c0_30, %c0_31], %41 {strides = array<i32>} : memref<1x1x128xf32, #tpu.memory_space<vmem>>, vector<1x1x128xf32>,
    %c0_32 = arith.constant 0 : index
    %c0_33 = arith.constant 0 : index
    %c0_34 = arith.constant 0 : index
    %42 = vector.load %arg12[%c0_32, %c0_33, %c0_34] : memref<1x4x64xf32, #tpu.memory_space<vmem>>, vector<1x4x64xf32>
    %43 = vector.shape_cast %42 : vector<1x4x64xf32> to vector<4x64xf32>
    %44 = vector.shape_cast %38 : vector<4x64xf32> to vector<1x4x64xf32>
    tpu.vector_store %arg12[%c0_32, %c0_33, %c0_34], %44 {strides = array<i32>} : memref<1x4x64xf32, #tpu.memory_space<vmem>>, vector<1x4x64xf32>,
    return
  }
  func.func @transform_0(%arg0: i32) -> (i32, i32, i32) {
    %c0_i32 = arith.constant 0 : i32
    %c0_i32_0 = arith.constant 0 : i32
    %c0_i32_1 = arith.constant 0 : i32
    return %arg0, %c0_i32, %c0_i32_0 : i32, i32, i32
  }
  func.func @transform_1(%arg0: i32) -> (i32, i32, i32) {
    %c0_i32 = arith.constant 0 : i32
    %c0_i32_0 = arith.constant 0 : i32
    %c0_i32_1 = arith.constant 0 : i32
    return %arg0, %c0_i32, %c0_i32_0 : i32, i32, i32
  }
  func.func @transform_2(%arg0: i32) -> (i32, i32) {
    %c0_i32 = arith.constant 0 : i32
    %c0_i32_0 = arith.constant 0 : i32
    %c0_i32_1 = arith.constant 0 : i32
    return %c0_i32, %c0_i32_0 : i32, i32
  }
  func.func @transform_3(%arg0: i32) -> (i32, i32) {
    %c0_i32 = arith.constant 0 : i32
    %c0_i32_0 = arith.constant 0 : i32
    %c0_i32_1 = arith.constant 0 : i32
    return %c0_i32, %c0_i32_0 : i32, i32
  }
  func.func @transform_4(%arg0: i32) -> (i32, i32) {
    %c0_i32 = arith.constant 0 : i32
    %c0_i32_0 = arith.constant 0 : i32
    %c0_i32_1 = arith.constant 0 : i32
    return %c0_i32, %c0_i32_0 : i32, i32
  }
  func.func @transform_5(%arg0: i32) -> (i32, i32) {
    %c0_i32 = arith.constant 0 : i32
    %c0_i32_0 = arith.constant 0 : i32
    %c0_i32_1 = arith.constant 0 : i32
    return %c0_i32, %c0_i32_0 : i32, i32
  }
  func.func @transform_6(%arg0: i32) -> (i32, i32) {
    %c0_i32 = arith.constant 0 : i32
    %c0_i32_0 = arith.constant 0 : i32
    %c0_i32_1 = arith.constant 0 : i32
    return %c0_i32, %c0_i32_0 : i32, i32
  }
  func.func @transform_7(%arg0: i32) -> (i32, i32) {
    %c0_i32 = arith.constant 0 : i32
    %c0_i32_0 = arith.constant 0 : i32
    %c0_i32_1 = arith.constant 0 : i32
    return %c0_i32, %c0_i32_0 : i32, i32
  }
  func.func @transform_8(%arg0: i32) -> (i32, i32) {
    %c0_i32 = arith.constant 0 : i32
    %c0_i32_0 = arith.constant 0 : i32
    %c0_i32_1 = arith.constant 0 : i32
    return %c0_i32, %c0_i32_0 : i32, i32
  }
  func.func @transform_9(%arg0: i32) -> (i32, i32) {
    %c0_i32 = arith.constant 0 : i32
    %c0_i32_0 = arith.constant 0 : i32
    %c0_i32_1 = arith.constant 0 : i32
    return %c0_i32, %c0_i32_0 : i32, i32
  }
  func.func @transform_10(%arg0: i32) -> (i32, i32, i32) {
    %c0_i32 = arith.constant 0 : i32
    %c0_i32_0 = arith.constant 0 : i32
    %c0_i32_1 = arith.constant 0 : i32
    return %arg0, %c0_i32, %c0_i32_0 : i32, i32, i32
  }
  func.func @transform_11(%arg0: i32) -> (i32, i32, i32) {
    %c0_i32 = arith.constant 0 : i32
    %c0_i32_0 = arith.constant 0 : i32
    %c0_i32_1 = arith.constant 0 : i32
    return %arg0, %c0_i32, %c0_i32_0 : i32, i32, i32
  }
}

module attributes {stable_mosaic.version = 11 : i64} {
  func.func @_fp_kernel(%arg0: i32, %arg1: i32, %arg2: memref<1x4x64xf32, #tpu.memory_space<vmem>>, %arg3: memref<1x4x4x32xf32, #tpu.memory_space<vmem>>, %arg4: memref<64x32xbf16, #tpu.memory_space<vmem>>, %arg5: memref<32x32xbf16, #tpu.memory_space<vmem>>, %arg6: memref<1x32xf32, #tpu.memory_space<vmem>>, %arg7: memref<1x4x4x32xf32, #tpu.memory_space<vmem>>) attributes {dimension_semantics = [#tpu.dimension_semantics<parallel>, #tpu.dimension_semantics<parallel>], iteration_bounds = array<i64: 2, 1>, scalar_prefetch = 0 : i64, scratch_operands = 0 : i64, tpu.core_type = #tpu.core_type<tc>, window_params = [{transform_indices = @transform_0, window_bounds = array<i64: 1, 4, 64>}, {transform_indices = @transform_1, window_bounds = array<i64: 1, 4, 4, 32>}, {pipeline_mode = #tpu.pipeline_mode<synchronous>, transform_indices = @transform_2, window_bounds = array<i64: 64, 32>}, {pipeline_mode = #tpu.pipeline_mode<synchronous>, transform_indices = @transform_3, window_bounds = array<i64: 32, 32>}, {pipeline_mode = #tpu.pipeline_mode<synchronous>, transform_indices = @transform_4, window_bounds = array<i64: 1, 32>}, {transform_indices = @transform_5, window_bounds = array<i64: 1, 4, 4, 32>}]} {
    %c0 = arith.constant 0 : index
    %c0_0 = arith.constant 0 : index
    %c0_1 = arith.constant 0 : index
    %0 = vector.load %arg2[%c0, %c0_0, %c0_1] : memref<1x4x64xf32, #tpu.memory_space<vmem>>, vector<1x4x64xf32>
    %1 = vector.shape_cast %0 : vector<1x4x64xf32> to vector<4x64xf32>
    %c0_2 = arith.constant 0 : index
    %c0_3 = arith.constant 0 : index
    %2 = vector.load %arg4[%c0_2, %c0_3] : memref<64x32xbf16, #tpu.memory_space<vmem>>, vector<64x32xbf16>
    %3 = arith.truncf %1 : vector<4x64xf32> to vector<4x64xbf16>
    %cst = arith.constant dense<0.000000e+00> : vector<4x32xf32>
    %4 = tpu.matmul %3, %2, %cst {dimension_numbers = #tpu.dot_dimension_numbers<[1], [0], [0], [1], [0, 0, 1, 1], [], []>} : vector<4x64xbf16>, vector<64x32xbf16>, vector<4x32xf32> -> vector<4x32xf32>
    %c0_4 = arith.constant 0 : index
    %c0_5 = arith.constant 0 : index
    %c0_6 = arith.constant 0 : index
    %c0_7 = arith.constant 0 : index
    %5 = vector.load %arg3[%c0_4, %c0_5, %c0_6, %c0_7] : memref<1x4x4x32xf32, #tpu.memory_space<vmem>>, vector<1x1x4x32xf32>
    %6 = vector.shape_cast %5 : vector<1x1x4x32xf32> to vector<4x32xf32>
    %c0_8 = arith.constant 0 : index
    %c0_9 = arith.constant 0 : index
    %7 = vector.load %arg5[%c0_8, %c0_9] : memref<32x32xbf16, #tpu.memory_space<vmem>>, vector<32x32xbf16>
    %8 = arith.truncf %6 : vector<4x32xf32> to vector<4x32xbf16>
    %cst_10 = arith.constant dense<0.000000e+00> : vector<4x32xf32>
    %9 = tpu.matmul %8, %7, %cst_10 {dimension_numbers = #tpu.dot_dimension_numbers<[1], [0], [0], [1], [0, 0, 1, 1], [], []>} : vector<4x32xbf16>, vector<32x32xbf16>, vector<4x32xf32> -> vector<4x32xf32>
    %c0_11 = arith.constant 0 : index
    %c0_12 = arith.constant 0 : index
    %10 = vector.load %arg6[%c0_11, %c0_12] : memref<1x32xf32, #tpu.memory_space<vmem>>, vector<1x32xf32>
    %11 = vector.broadcast %10 : vector<1x32xf32> to vector<4x32xf32>
    %12 = arith.addf %9, %11 : vector<4x32xf32>
    %13 = arith.addf %12, %4 : vector<4x32xf32>
    %cst_13 = arith.constant 0.000000e+00 : f32
    %14 = vector.broadcast %cst_13 : f32 to vector<4x32xf32>
    %15 = arith.maximumf %13, %14 : vector<4x32xf32>
    %c0_14 = arith.constant 0 : index
    %c0_15 = arith.constant 0 : index
    %c0_16 = arith.constant 0 : index
    %c0_17 = arith.constant 0 : index
    %16 = vector.load %arg7[%c0_14, %c0_15, %c0_16, %c0_17] : memref<1x4x4x32xf32, #tpu.memory_space<vmem>>, vector<1x1x4x32xf32>
    %17 = vector.shape_cast %16 : vector<1x1x4x32xf32> to vector<4x32xf32>
    %18 = vector.shape_cast %15 : vector<4x32xf32> to vector<1x1x4x32xf32>
    tpu.vector_store %arg7[%c0_14, %c0_15, %c0_16, %c0_17], %18 {strides = array<i32>} : memref<1x4x4x32xf32, #tpu.memory_space<vmem>>, vector<1x1x4x32xf32>,
    %c0_18 = arith.constant 0 : index
    %c1 = arith.constant 1 : index
    %c0_19 = arith.constant 0 : index
    %c0_20 = arith.constant 0 : index
    %19 = vector.load %arg3[%c0_18, %c1, %c0_19, %c0_20] : memref<1x4x4x32xf32, #tpu.memory_space<vmem>>, vector<1x1x4x32xf32>
    %20 = vector.shape_cast %19 : vector<1x1x4x32xf32> to vector<4x32xf32>
    %c0_21 = arith.constant 0 : index
    %c0_22 = arith.constant 0 : index
    %21 = vector.load %arg5[%c0_21, %c0_22] : memref<32x32xbf16, #tpu.memory_space<vmem>>, vector<32x32xbf16>
    %22 = arith.truncf %20 : vector<4x32xf32> to vector<4x32xbf16>
    %cst_23 = arith.constant dense<0.000000e+00> : vector<4x32xf32>
    %23 = tpu.matmul %22, %21, %cst_23 {dimension_numbers = #tpu.dot_dimension_numbers<[1], [0], [0], [1], [0, 0, 1, 1], [], []>} : vector<4x32xbf16>, vector<32x32xbf16>, vector<4x32xf32> -> vector<4x32xf32>
    %c0_24 = arith.constant 0 : index
    %c0_25 = arith.constant 0 : index
    %24 = vector.load %arg6[%c0_24, %c0_25] : memref<1x32xf32, #tpu.memory_space<vmem>>, vector<1x32xf32>
    %25 = vector.broadcast %24 : vector<1x32xf32> to vector<4x32xf32>
    %26 = arith.addf %23, %25 : vector<4x32xf32>
    %27 = arith.addf %26, %4 : vector<4x32xf32>
    %cst_26 = arith.constant 0.000000e+00 : f32
    %28 = vector.broadcast %cst_26 : f32 to vector<4x32xf32>
    %29 = arith.maximumf %27, %28 : vector<4x32xf32>
    %c0_27 = arith.constant 0 : index
    %c1_28 = arith.constant 1 : index
    %c0_29 = arith.constant 0 : index
    %c0_30 = arith.constant 0 : index
    %30 = vector.load %arg7[%c0_27, %c1_28, %c0_29, %c0_30] : memref<1x4x4x32xf32, #tpu.memory_space<vmem>>, vector<1x1x4x32xf32>
    %31 = vector.shape_cast %30 : vector<1x1x4x32xf32> to vector<4x32xf32>
    %32 = vector.shape_cast %29 : vector<4x32xf32> to vector<1x1x4x32xf32>
    tpu.vector_store %arg7[%c0_27, %c1_28, %c0_29, %c0_30], %32 {strides = array<i32>} : memref<1x4x4x32xf32, #tpu.memory_space<vmem>>, vector<1x1x4x32xf32>,
    %c0_31 = arith.constant 0 : index
    %c2 = arith.constant 2 : index
    %c0_32 = arith.constant 0 : index
    %c0_33 = arith.constant 0 : index
    %33 = vector.load %arg3[%c0_31, %c2, %c0_32, %c0_33] : memref<1x4x4x32xf32, #tpu.memory_space<vmem>>, vector<1x1x4x32xf32>
    %34 = vector.shape_cast %33 : vector<1x1x4x32xf32> to vector<4x32xf32>
    %c0_34 = arith.constant 0 : index
    %c0_35 = arith.constant 0 : index
    %35 = vector.load %arg5[%c0_34, %c0_35] : memref<32x32xbf16, #tpu.memory_space<vmem>>, vector<32x32xbf16>
    %36 = arith.truncf %34 : vector<4x32xf32> to vector<4x32xbf16>
    %cst_36 = arith.constant dense<0.000000e+00> : vector<4x32xf32>
    %37 = tpu.matmul %36, %35, %cst_36 {dimension_numbers = #tpu.dot_dimension_numbers<[1], [0], [0], [1], [0, 0, 1, 1], [], []>} : vector<4x32xbf16>, vector<32x32xbf16>, vector<4x32xf32> -> vector<4x32xf32>
    %c0_37 = arith.constant 0 : index
    %c0_38 = arith.constant 0 : index
    %38 = vector.load %arg6[%c0_37, %c0_38] : memref<1x32xf32, #tpu.memory_space<vmem>>, vector<1x32xf32>
    %39 = vector.broadcast %38 : vector<1x32xf32> to vector<4x32xf32>
    %40 = arith.addf %37, %39 : vector<4x32xf32>
    %41 = arith.addf %40, %4 : vector<4x32xf32>
    %cst_39 = arith.constant 0.000000e+00 : f32
    %42 = vector.broadcast %cst_39 : f32 to vector<4x32xf32>
    %43 = arith.maximumf %41, %42 : vector<4x32xf32>
    %c0_40 = arith.constant 0 : index
    %c2_41 = arith.constant 2 : index
    %c0_42 = arith.constant 0 : index
    %c0_43 = arith.constant 0 : index
    %44 = vector.load %arg7[%c0_40, %c2_41, %c0_42, %c0_43] : memref<1x4x4x32xf32, #tpu.memory_space<vmem>>, vector<1x1x4x32xf32>
    %45 = vector.shape_cast %44 : vector<1x1x4x32xf32> to vector<4x32xf32>
    %46 = vector.shape_cast %43 : vector<4x32xf32> to vector<1x1x4x32xf32>
    tpu.vector_store %arg7[%c0_40, %c2_41, %c0_42, %c0_43], %46 {strides = array<i32>} : memref<1x4x4x32xf32, #tpu.memory_space<vmem>>, vector<1x1x4x32xf32>,
    %c0_44 = arith.constant 0 : index
    %c3 = arith.constant 3 : index
    %c0_45 = arith.constant 0 : index
    %c0_46 = arith.constant 0 : index
    %47 = vector.load %arg3[%c0_44, %c3, %c0_45, %c0_46] : memref<1x4x4x32xf32, #tpu.memory_space<vmem>>, vector<1x1x4x32xf32>
    %48 = vector.shape_cast %47 : vector<1x1x4x32xf32> to vector<4x32xf32>
    %c0_47 = arith.constant 0 : index
    %c0_48 = arith.constant 0 : index
    %49 = vector.load %arg5[%c0_47, %c0_48] : memref<32x32xbf16, #tpu.memory_space<vmem>>, vector<32x32xbf16>
    %50 = arith.truncf %48 : vector<4x32xf32> to vector<4x32xbf16>
    %cst_49 = arith.constant dense<0.000000e+00> : vector<4x32xf32>
    %51 = tpu.matmul %50, %49, %cst_49 {dimension_numbers = #tpu.dot_dimension_numbers<[1], [0], [0], [1], [0, 0, 1, 1], [], []>} : vector<4x32xbf16>, vector<32x32xbf16>, vector<4x32xf32> -> vector<4x32xf32>
    %c0_50 = arith.constant 0 : index
    %c0_51 = arith.constant 0 : index
    %52 = vector.load %arg6[%c0_50, %c0_51] : memref<1x32xf32, #tpu.memory_space<vmem>>, vector<1x32xf32>
    %53 = vector.broadcast %52 : vector<1x32xf32> to vector<4x32xf32>
    %54 = arith.addf %51, %53 : vector<4x32xf32>
    %55 = arith.addf %54, %4 : vector<4x32xf32>
    %cst_52 = arith.constant 0.000000e+00 : f32
    %56 = vector.broadcast %cst_52 : f32 to vector<4x32xf32>
    %57 = arith.maximumf %55, %56 : vector<4x32xf32>
    %c0_53 = arith.constant 0 : index
    %c3_54 = arith.constant 3 : index
    %c0_55 = arith.constant 0 : index
    %c0_56 = arith.constant 0 : index
    %58 = vector.load %arg7[%c0_53, %c3_54, %c0_55, %c0_56] : memref<1x4x4x32xf32, #tpu.memory_space<vmem>>, vector<1x1x4x32xf32>
    %59 = vector.shape_cast %58 : vector<1x1x4x32xf32> to vector<4x32xf32>
    %60 = vector.shape_cast %57 : vector<4x32xf32> to vector<1x1x4x32xf32>
    tpu.vector_store %arg7[%c0_53, %c3_54, %c0_55, %c0_56], %60 {strides = array<i32>} : memref<1x4x4x32xf32, #tpu.memory_space<vmem>>, vector<1x1x4x32xf32>,
    return
  }
  func.func @transform_0(%arg0: i32, %arg1: i32) -> (i32, i32, i32) {
    %c0_i32 = arith.constant 0 : i32
    %c0_i32_0 = arith.constant 0 : i32
    return %arg0, %arg1, %c0_i32 : i32, i32, i32
  }
  func.func @transform_1(%arg0: i32, %arg1: i32) -> (i32, i32, i32, i32) {
    %c0_i32 = arith.constant 0 : i32
    %c0_i32_0 = arith.constant 0 : i32
    %c0_i32_1 = arith.constant 0 : i32
    return %arg0, %c0_i32, %arg1, %c0_i32_0 : i32, i32, i32, i32
  }
  func.func @transform_2(%arg0: i32, %arg1: i32) -> (i32, i32) {
    %c0_i32 = arith.constant 0 : i32
    %c0_i32_0 = arith.constant 0 : i32
    %c0_i32_1 = arith.constant 0 : i32
    return %c0_i32, %c0_i32_0 : i32, i32
  }
  func.func @transform_3(%arg0: i32, %arg1: i32) -> (i32, i32) {
    %c0_i32 = arith.constant 0 : i32
    %c0_i32_0 = arith.constant 0 : i32
    %c0_i32_1 = arith.constant 0 : i32
    return %c0_i32, %c0_i32_0 : i32, i32
  }
  func.func @transform_4(%arg0: i32, %arg1: i32) -> (i32, i32) {
    %c0_i32 = arith.constant 0 : i32
    %c0_i32_0 = arith.constant 0 : i32
    %c0_i32_1 = arith.constant 0 : i32
    return %c0_i32, %c0_i32_0 : i32, i32
  }
  func.func @transform_5(%arg0: i32, %arg1: i32) -> (i32, i32, i32, i32) {
    %c0_i32 = arith.constant 0 : i32
    %c0_i32_0 = arith.constant 0 : i32
    %c0_i32_1 = arith.constant 0 : i32
    return %arg0, %c0_i32, %arg1, %c0_i32_0 : i32, i32, i32, i32
  }
}

module attributes {stable_mosaic.version = 11 : i64} {
  func.func @_fp_kernel(%arg0: i32, %arg1: i32, %arg2: memref<1x16x32xf32, #tpu.memory_space<vmem>>, %arg3: memref<1x4x16x3xf32, #tpu.memory_space<vmem>>, %arg4: memref<32x32xbf16, #tpu.memory_space<vmem>>, %arg5: memref<3x32xbf16, #tpu.memory_space<vmem>>, %arg6: memref<1x32xf32, #tpu.memory_space<vmem>>, %arg7: memref<32x3xbf16, #tpu.memory_space<vmem>>, %arg8: memref<1x3xf32, #tpu.memory_space<vmem>>, %arg9: memref<1x4x16x3xf32, #tpu.memory_space<vmem>>) attributes {dimension_semantics = [#tpu.dimension_semantics<parallel>, #tpu.dimension_semantics<parallel>], iteration_bounds = array<i64: 2, 1>, scalar_prefetch = 0 : i64, scratch_operands = 0 : i64, tpu.core_type = #tpu.core_type<tc>, window_params = [{transform_indices = @transform_0, window_bounds = array<i64: 1, 16, 32>}, {transform_indices = @transform_1, window_bounds = array<i64: 1, 4, 16, 3>}, {pipeline_mode = #tpu.pipeline_mode<synchronous>, transform_indices = @transform_2, window_bounds = array<i64: 32, 32>}, {pipeline_mode = #tpu.pipeline_mode<synchronous>, transform_indices = @transform_3, window_bounds = array<i64: 3, 32>}, {pipeline_mode = #tpu.pipeline_mode<synchronous>, transform_indices = @transform_4, window_bounds = array<i64: 1, 32>}, {pipeline_mode = #tpu.pipeline_mode<synchronous>, transform_indices = @transform_5, window_bounds = array<i64: 32, 3>}, {pipeline_mode = #tpu.pipeline_mode<synchronous>, transform_indices = @transform_6, window_bounds = array<i64: 1, 3>}, {transform_indices = @transform_7, window_bounds = array<i64: 1, 4, 16, 3>}]} {
    %c0 = arith.constant 0 : index
    %c0_0 = arith.constant 0 : index
    %c0_1 = arith.constant 0 : index
    %0 = vector.load %arg2[%c0, %c0_0, %c0_1] : memref<1x16x32xf32, #tpu.memory_space<vmem>>, vector<1x16x32xf32>
    %1 = vector.shape_cast %0 : vector<1x16x32xf32> to vector<16x32xf32>
    %c0_2 = arith.constant 0 : index
    %c0_3 = arith.constant 0 : index
    %2 = vector.load %arg4[%c0_2, %c0_3] : memref<32x32xbf16, #tpu.memory_space<vmem>>, vector<32x32xbf16>
    %3 = arith.truncf %1 : vector<16x32xf32> to vector<16x32xbf16>
    %cst = arith.constant dense<0.000000e+00> : vector<16x32xf32>
    %4 = tpu.matmul %3, %2, %cst {dimension_numbers = #tpu.dot_dimension_numbers<[1], [0], [0], [1], [0, 0, 1, 1], [], []>} : vector<16x32xbf16>, vector<32x32xbf16>, vector<16x32xf32> -> vector<16x32xf32>
    %c0_4 = arith.constant 0 : index
    %c0_5 = arith.constant 0 : index
    %c0_6 = arith.constant 0 : index
    %c0_7 = arith.constant 0 : index
    %5 = vector.load %arg3[%c0_4, %c0_5, %c0_6, %c0_7] : memref<1x4x16x3xf32, #tpu.memory_space<vmem>>, vector<1x1x16x3xf32>
    %6 = vector.shape_cast %5 : vector<1x1x16x3xf32> to vector<16x3xf32>
    %c0_8 = arith.constant 0 : index
    %c0_9 = arith.constant 0 : index
    %7 = vector.load %arg5[%c0_8, %c0_9] : memref<3x32xbf16, #tpu.memory_space<vmem>>, vector<3x32xbf16>
    %8 = arith.truncf %6 : vector<16x3xf32> to vector<16x3xbf16>
    %cst_10 = arith.constant dense<0.000000e+00> : vector<16x32xf32>
    %9 = tpu.matmul %8, %7, %cst_10 {dimension_numbers = #tpu.dot_dimension_numbers<[1], [0], [0], [1], [0, 0, 1, 1], [], []>} : vector<16x3xbf16>, vector<3x32xbf16>, vector<16x32xf32> -> vector<16x32xf32>
    %c0_11 = arith.constant 0 : index
    %c0_12 = arith.constant 0 : index
    %10 = vector.load %arg6[%c0_11, %c0_12] : memref<1x32xf32, #tpu.memory_space<vmem>>, vector<1x32xf32>
    %11 = vector.broadcast %10 : vector<1x32xf32> to vector<16x32xf32>
    %12 = arith.addf %9, %11 : vector<16x32xf32>
    %13 = arith.addf %12, %4 : vector<16x32xf32>
    %cst_13 = arith.constant 0.000000e+00 : f32
    %14 = vector.broadcast %cst_13 : f32 to vector<16x32xf32>
    %15 = arith.maximumf %13, %14 : vector<16x32xf32>
    %c0_14 = arith.constant 0 : index
    %c0_15 = arith.constant 0 : index
    %16 = vector.load %arg7[%c0_14, %c0_15] : memref<32x3xbf16, #tpu.memory_space<vmem>>, vector<32x3xbf16>
    %17 = arith.truncf %15 : vector<16x32xf32> to vector<16x32xbf16>
    %cst_16 = arith.constant dense<0.000000e+00> : vector<16x3xf32>
    %18 = tpu.matmul %17, %16, %cst_16 {dimension_numbers = #tpu.dot_dimension_numbers<[1], [0], [0], [1], [0, 0, 1, 1], [], []>} : vector<16x32xbf16>, vector<32x3xbf16>, vector<16x3xf32> -> vector<16x3xf32>
    %c0_17 = arith.constant 0 : index
    %c0_18 = arith.constant 0 : index
    %19 = vector.load %arg8[%c0_17, %c0_18] : memref<1x3xf32, #tpu.memory_space<vmem>>, vector<1x3xf32>
    %20 = vector.broadcast %19 : vector<1x3xf32> to vector<16x3xf32>
    %21 = arith.addf %18, %20 : vector<16x3xf32>
    %c0_19 = arith.constant 0 : index
    %c0_20 = arith.constant 0 : index
    %c0_21 = arith.constant 0 : index
    %c0_22 = arith.constant 0 : index
    %22 = vector.load %arg9[%c0_19, %c0_20, %c0_21, %c0_22] : memref<1x4x16x3xf32, #tpu.memory_space<vmem>>, vector<1x1x16x3xf32>
    %23 = vector.shape_cast %22 : vector<1x1x16x3xf32> to vector<16x3xf32>
    %24 = vector.shape_cast %21 : vector<16x3xf32> to vector<1x1x16x3xf32>
    tpu.vector_store %arg9[%c0_19, %c0_20, %c0_21, %c0_22], %24 {strides = array<i32>} : memref<1x4x16x3xf32, #tpu.memory_space<vmem>>, vector<1x1x16x3xf32>,
    %c0_23 = arith.constant 0 : index
    %c1 = arith.constant 1 : index
    %c0_24 = arith.constant 0 : index
    %c0_25 = arith.constant 0 : index
    %25 = vector.load %arg3[%c0_23, %c1, %c0_24, %c0_25] : memref<1x4x16x3xf32, #tpu.memory_space<vmem>>, vector<1x1x16x3xf32>
    %26 = vector.shape_cast %25 : vector<1x1x16x3xf32> to vector<16x3xf32>
    %c0_26 = arith.constant 0 : index
    %c0_27 = arith.constant 0 : index
    %27 = vector.load %arg5[%c0_26, %c0_27] : memref<3x32xbf16, #tpu.memory_space<vmem>>, vector<3x32xbf16>
    %28 = arith.truncf %26 : vector<16x3xf32> to vector<16x3xbf16>
    %cst_28 = arith.constant dense<0.000000e+00> : vector<16x32xf32>
    %29 = tpu.matmul %28, %27, %cst_28 {dimension_numbers = #tpu.dot_dimension_numbers<[1], [0], [0], [1], [0, 0, 1, 1], [], []>} : vector<16x3xbf16>, vector<3x32xbf16>, vector<16x32xf32> -> vector<16x32xf32>
    %c0_29 = arith.constant 0 : index
    %c0_30 = arith.constant 0 : index
    %30 = vector.load %arg6[%c0_29, %c0_30] : memref<1x32xf32, #tpu.memory_space<vmem>>, vector<1x32xf32>
    %31 = vector.broadcast %30 : vector<1x32xf32> to vector<16x32xf32>
    %32 = arith.addf %29, %31 : vector<16x32xf32>
    %33 = arith.addf %32, %4 : vector<16x32xf32>
    %cst_31 = arith.constant 0.000000e+00 : f32
    %34 = vector.broadcast %cst_31 : f32 to vector<16x32xf32>
    %35 = arith.maximumf %33, %34 : vector<16x32xf32>
    %c0_32 = arith.constant 0 : index
    %c0_33 = arith.constant 0 : index
    %36 = vector.load %arg7[%c0_32, %c0_33] : memref<32x3xbf16, #tpu.memory_space<vmem>>, vector<32x3xbf16>
    %37 = arith.truncf %35 : vector<16x32xf32> to vector<16x32xbf16>
    %cst_34 = arith.constant dense<0.000000e+00> : vector<16x3xf32>
    %38 = tpu.matmul %37, %36, %cst_34 {dimension_numbers = #tpu.dot_dimension_numbers<[1], [0], [0], [1], [0, 0, 1, 1], [], []>} : vector<16x32xbf16>, vector<32x3xbf16>, vector<16x3xf32> -> vector<16x3xf32>
    %c0_35 = arith.constant 0 : index
    %c0_36 = arith.constant 0 : index
    %39 = vector.load %arg8[%c0_35, %c0_36] : memref<1x3xf32, #tpu.memory_space<vmem>>, vector<1x3xf32>
    %40 = vector.broadcast %39 : vector<1x3xf32> to vector<16x3xf32>
    %41 = arith.addf %38, %40 : vector<16x3xf32>
    %c0_37 = arith.constant 0 : index
    %c1_38 = arith.constant 1 : index
    %c0_39 = arith.constant 0 : index
    %c0_40 = arith.constant 0 : index
    %42 = vector.load %arg9[%c0_37, %c1_38, %c0_39, %c0_40] : memref<1x4x16x3xf32, #tpu.memory_space<vmem>>, vector<1x1x16x3xf32>
    %43 = vector.shape_cast %42 : vector<1x1x16x3xf32> to vector<16x3xf32>
    %44 = vector.shape_cast %41 : vector<16x3xf32> to vector<1x1x16x3xf32>
    tpu.vector_store %arg9[%c0_37, %c1_38, %c0_39, %c0_40], %44 {strides = array<i32>} : memref<1x4x16x3xf32, #tpu.memory_space<vmem>>, vector<1x1x16x3xf32>,
    %c0_41 = arith.constant 0 : index
    %c2 = arith.constant 2 : index
    %c0_42 = arith.constant 0 : index
    %c0_43 = arith.constant 0 : index
    %45 = vector.load %arg3[%c0_41, %c2, %c0_42, %c0_43] : memref<1x4x16x3xf32, #tpu.memory_space<vmem>>, vector<1x1x16x3xf32>
    %46 = vector.shape_cast %45 : vector<1x1x16x3xf32> to vector<16x3xf32>
    %c0_44 = arith.constant 0 : index
    %c0_45 = arith.constant 0 : index
    %47 = vector.load %arg5[%c0_44, %c0_45] : memref<3x32xbf16, #tpu.memory_space<vmem>>, vector<3x32xbf16>
    %48 = arith.truncf %46 : vector<16x3xf32> to vector<16x3xbf16>
    %cst_46 = arith.constant dense<0.000000e+00> : vector<16x32xf32>
    %49 = tpu.matmul %48, %47, %cst_46 {dimension_numbers = #tpu.dot_dimension_numbers<[1], [0], [0], [1], [0, 0, 1, 1], [], []>} : vector<16x3xbf16>, vector<3x32xbf16>, vector<16x32xf32> -> vector<16x32xf32>
    %c0_47 = arith.constant 0 : index
    %c0_48 = arith.constant 0 : index
    %50 = vector.load %arg6[%c0_47, %c0_48] : memref<1x32xf32, #tpu.memory_space<vmem>>, vector<1x32xf32>
    %51 = vector.broadcast %50 : vector<1x32xf32> to vector<16x32xf32>
    %52 = arith.addf %49, %51 : vector<16x32xf32>
    %53 = arith.addf %52, %4 : vector<16x32xf32>
    %cst_49 = arith.constant 0.000000e+00 : f32
    %54 = vector.broadcast %cst_49 : f32 to vector<16x32xf32>
    %55 = arith.maximumf %53, %54 : vector<16x32xf32>
    %c0_50 = arith.constant 0 : index
    %c0_51 = arith.constant 0 : index
    %56 = vector.load %arg7[%c0_50, %c0_51] : memref<32x3xbf16, #tpu.memory_space<vmem>>, vector<32x3xbf16>
    %57 = arith.truncf %55 : vector<16x32xf32> to vector<16x32xbf16>
    %cst_52 = arith.constant dense<0.000000e+00> : vector<16x3xf32>
    %58 = tpu.matmul %57, %56, %cst_52 {dimension_numbers = #tpu.dot_dimension_numbers<[1], [0], [0], [1], [0, 0, 1, 1], [], []>} : vector<16x32xbf16>, vector<32x3xbf16>, vector<16x3xf32> -> vector<16x3xf32>
    %c0_53 = arith.constant 0 : index
    %c0_54 = arith.constant 0 : index
    %59 = vector.load %arg8[%c0_53, %c0_54] : memref<1x3xf32, #tpu.memory_space<vmem>>, vector<1x3xf32>
    %60 = vector.broadcast %59 : vector<1x3xf32> to vector<16x3xf32>
    %61 = arith.addf %58, %60 : vector<16x3xf32>
    %c0_55 = arith.constant 0 : index
    %c2_56 = arith.constant 2 : index
    %c0_57 = arith.constant 0 : index
    %c0_58 = arith.constant 0 : index
    %62 = vector.load %arg9[%c0_55, %c2_56, %c0_57, %c0_58] : memref<1x4x16x3xf32, #tpu.memory_space<vmem>>, vector<1x1x16x3xf32>
    %63 = vector.shape_cast %62 : vector<1x1x16x3xf32> to vector<16x3xf32>
    %64 = vector.shape_cast %61 : vector<16x3xf32> to vector<1x1x16x3xf32>
    tpu.vector_store %arg9[%c0_55, %c2_56, %c0_57, %c0_58], %64 {strides = array<i32>} : memref<1x4x16x3xf32, #tpu.memory_space<vmem>>, vector<1x1x16x3xf32>,
    %c0_59 = arith.constant 0 : index
    %c3 = arith.constant 3 : index
    %c0_60 = arith.constant 0 : index
    %c0_61 = arith.constant 0 : index
    %65 = vector.load %arg3[%c0_59, %c3, %c0_60, %c0_61] : memref<1x4x16x3xf32, #tpu.memory_space<vmem>>, vector<1x1x16x3xf32>
    %66 = vector.shape_cast %65 : vector<1x1x16x3xf32> to vector<16x3xf32>
    %c0_62 = arith.constant 0 : index
    %c0_63 = arith.constant 0 : index
    %67 = vector.load %arg5[%c0_62, %c0_63] : memref<3x32xbf16, #tpu.memory_space<vmem>>, vector<3x32xbf16>
    %68 = arith.truncf %66 : vector<16x3xf32> to vector<16x3xbf16>
    %cst_64 = arith.constant dense<0.000000e+00> : vector<16x32xf32>
    %69 = tpu.matmul %68, %67, %cst_64 {dimension_numbers = #tpu.dot_dimension_numbers<[1], [0], [0], [1], [0, 0, 1, 1], [], []>} : vector<16x3xbf16>, vector<3x32xbf16>, vector<16x32xf32> -> vector<16x32xf32>
    %c0_65 = arith.constant 0 : index
    %c0_66 = arith.constant 0 : index
    %70 = vector.load %arg6[%c0_65, %c0_66] : memref<1x32xf32, #tpu.memory_space<vmem>>, vector<1x32xf32>
    %71 = vector.broadcast %70 : vector<1x32xf32> to vector<16x32xf32>
    %72 = arith.addf %69, %71 : vector<16x32xf32>
    %73 = arith.addf %72, %4 : vector<16x32xf32>
    %cst_67 = arith.constant 0.000000e+00 : f32
    %74 = vector.broadcast %cst_67 : f32 to vector<16x32xf32>
    %75 = arith.maximumf %73, %74 : vector<16x32xf32>
    %c0_68 = arith.constant 0 : index
    %c0_69 = arith.constant 0 : index
    %76 = vector.load %arg7[%c0_68, %c0_69] : memref<32x3xbf16, #tpu.memory_space<vmem>>, vector<32x3xbf16>
    %77 = arith.truncf %75 : vector<16x32xf32> to vector<16x32xbf16>
    %cst_70 = arith.constant dense<0.000000e+00> : vector<16x3xf32>
    %78 = tpu.matmul %77, %76, %cst_70 {dimension_numbers = #tpu.dot_dimension_numbers<[1], [0], [0], [1], [0, 0, 1, 1], [], []>} : vector<16x32xbf16>, vector<32x3xbf16>, vector<16x3xf32> -> vector<16x3xf32>
    %c0_71 = arith.constant 0 : index
    %c0_72 = arith.constant 0 : index
    %79 = vector.load %arg8[%c0_71, %c0_72] : memref<1x3xf32, #tpu.memory_space<vmem>>, vector<1x3xf32>
    %80 = vector.broadcast %79 : vector<1x3xf32> to vector<16x3xf32>
    %81 = arith.addf %78, %80 : vector<16x3xf32>
    %c0_73 = arith.constant 0 : index
    %c3_74 = arith.constant 3 : index
    %c0_75 = arith.constant 0 : index
    %c0_76 = arith.constant 0 : index
    %82 = vector.load %arg9[%c0_73, %c3_74, %c0_75, %c0_76] : memref<1x4x16x3xf32, #tpu.memory_space<vmem>>, vector<1x1x16x3xf32>
    %83 = vector.shape_cast %82 : vector<1x1x16x3xf32> to vector<16x3xf32>
    %84 = vector.shape_cast %81 : vector<16x3xf32> to vector<1x1x16x3xf32>
    tpu.vector_store %arg9[%c0_73, %c3_74, %c0_75, %c0_76], %84 {strides = array<i32>} : memref<1x4x16x3xf32, #tpu.memory_space<vmem>>, vector<1x1x16x3xf32>,
    return
  }
  func.func @transform_0(%arg0: i32, %arg1: i32) -> (i32, i32, i32) {
    %c0_i32 = arith.constant 0 : i32
    %c0_i32_0 = arith.constant 0 : i32
    return %arg0, %arg1, %c0_i32 : i32, i32, i32
  }
  func.func @transform_1(%arg0: i32, %arg1: i32) -> (i32, i32, i32, i32) {
    %c0_i32 = arith.constant 0 : i32
    %c0_i32_0 = arith.constant 0 : i32
    %c0_i32_1 = arith.constant 0 : i32
    return %arg0, %c0_i32, %arg1, %c0_i32_0 : i32, i32, i32, i32
  }
  func.func @transform_2(%arg0: i32, %arg1: i32) -> (i32, i32) {
    %c0_i32 = arith.constant 0 : i32
    %c0_i32_0 = arith.constant 0 : i32
    %c0_i32_1 = arith.constant 0 : i32
    return %c0_i32, %c0_i32_0 : i32, i32
  }
  func.func @transform_3(%arg0: i32, %arg1: i32) -> (i32, i32) {
    %c0_i32 = arith.constant 0 : i32
    %c0_i32_0 = arith.constant 0 : i32
    %c0_i32_1 = arith.constant 0 : i32
    return %c0_i32, %c0_i32_0 : i32, i32
  }
  func.func @transform_4(%arg0: i32, %arg1: i32) -> (i32, i32) {
    %c0_i32 = arith.constant 0 : i32
    %c0_i32_0 = arith.constant 0 : i32
    %c0_i32_1 = arith.constant 0 : i32
    return %c0_i32, %c0_i32_0 : i32, i32
  }
  func.func @transform_5(%arg0: i32, %arg1: i32) -> (i32, i32) {
    %c0_i32 = arith.constant 0 : i32
    %c0_i32_0 = arith.constant 0 : i32
    %c0_i32_1 = arith.constant 0 : i32
    return %c0_i32, %c0_i32_0 : i32, i32
  }
  func.func @transform_6(%arg0: i32, %arg1: i32) -> (i32, i32) {
    %c0_i32 = arith.constant 0 : i32
    %c0_i32_0 = arith.constant 0 : i32
    %c0_i32_1 = arith.constant 0 : i32
    return %c0_i32, %c0_i32_0 : i32, i32
  }
  func.func @transform_7(%arg0: i32, %arg1: i32) -> (i32, i32, i32, i32) {
    %c0_i32 = arith.constant 0 : i32
    %c0_i32_0 = arith.constant 0 : i32
    %c0_i32_1 = arith.constant 0 : i32
    return %arg0, %c0_i32, %arg1, %c0_i32_0 : i32, i32, i32, i32
  }
}

</mosaic_0001>

<llo_original>
// kernel: point_ae_forward.5
$region0: #{point_ae_forward.5}
  #allocation0 [shape = 'u32[]', space=smem, size = 0x4, offset = 0x4, fixed_abs, tag = 'smem constant byte address 0x4 - core index']
  #allocation1 [shape = 'u32[72,128]{1,0:T(1,128)}', space=vmem, size = 0x9000, scoped, tag = 'internal scratch']
  %s0 = inlined_call_operand.vmem [shape: f32[2,4,16,3], index: 0, kind: input, shape index: {}, may-alias: {0,1}]
  %s1 = inlined_call_operand.vmem [shape: f32[2,4,16,3], index: 1, kind: input, shape index: {}, may-alias: {0,1}]
  %s2 = inlined_call_operand.vmem [shape: bf16[3,32], index: 2, kind: input, shape index: {}]
  %s3 = inlined_call_operand.vmem [shape: bf16[3,32], index: 3, kind: input, shape index: {}]
  %s4 = inlined_call_operand.vmem [shape: f32[1,32], index: 4, kind: input, shape index: {}]
  %s5 = inlined_call_operand.vmem [shape: bf16[32,32], index: 5, kind: input, shape index: {}]
  %s6 = inlined_call_operand.vmem [shape: f32[1,32], index: 6, kind: input, shape index: {}]
  %s7 = inlined_call_operand.vmem [shape: f32[2,16,3], index: 7, kind: output, shape index: {0}]
  %s8 = inlined_call_operand.vmem [shape: f32[2,16,32], index: 8, kind: output, shape index: {1}]
  %9 = xla_tuple %s7, %s8
  %s10 = sld [smem:[#allocation0]]
  $region69: #{point_ae_forward.5} parent=0
    _
  %s12 = ssub.s32 1, %s10
  %s13 = scalar_select 0, %s12, %s10
  loop: start=0, step=1, limit=4
  $region2: #{point_ae_forward.5} parent=0 // loop_pre_header
    _
  $region3: #{point_ae_forward.5} parent=0 // loop_header
    %s15 = sphi 0, %s19
    %p16 = scmp.ge.s32.totalorder %s15, 4
    %s22 = sphi 0, %s34
    %s23 = sphi 0, %s30
    %s24 = sphi 0, %s22
    %s25 = sphi 0, %s23
    %s26 = sphi 0, %s24
    %s27 = sphi 0, %s25
    %s39 = sphi 0, %s41
    %s42 = sphi 0, %s39
    %s43 = sphi 0, %s42
    %s59 = sphi 0, %s43
    %s67 = sphi 0, %s69
    %s70 = sphi 0, %s67
    %s71 = sphi 0, %s70
    %s87 = sphi 0, %s71
    %s91 = sphi 0, %s91
    %s93 = sphi 0, %s91
    %s94 = sphi 0, %s93
    %s108 = sphi 0, %s94
    %s112 = sphi 0, %s112
    %s114 = sphi 0, %s112
    %s115 = sphi 0, %s114
    %s129 = sphi 0, %s115
    %s133 = sphi 0, %s133
    %s135 = sphi 0, %s133
    %s136 = sphi 0, %s135
    %s150 = sphi 0, %s136
    %s154 = sphi 0, %s154
    %s156 = sphi 0, %s154
    %s157 = sphi 0, %s156
    %s171 = sphi 0, %s157
    %s175 = sphi 0, %s175
    %s177 = sphi 0, %s175
    %s178 = sphi 0, %s177
    %s192 = sphi 0, %s178
    %s200 = sphi 0, %s202
    %s203 = sphi 0, %s200
    %s204 = sphi 0, %s203
    %s220 = sphi 0, %s204
    %s228 = sphi 0, %s230
    %s231 = sphi 0, %s228
    %s232 = sphi 0, %s231
    %s248 = sphi 0, %s232
  $region4: #{point_ae_forward.5} parent=0 // loop_header_branch
    %18 = sbr.rel (%p16) target = $region8
  $region5: #{point_ae_forward.5} parent=0 // loop_body
    %s20 = ssub.s32 %s15, 1
    %s21 = ssub.s32 %s15, 2
    %s28 = sadd.s32 1, %s23
    %p29 = scmp.ge.s32.totalorder %s28, 1
    %s30 = scalar_select %p29, 0, %s28
    %s31 = sadd.s32 1, %s22
    %s32 = scalar_select %p29, %s31, %s22
    %p33 = scmp.ge.s32.totalorder %s32, 2
    %s34 = scalar_select %p33, 0, %s32
    %s35 = ssub.s32 %s22, %s34
    %s36 = ssub.s32 %s23, %s30
    %s37 = sor.u32 %s35, %s36
    %p38 = scmp.eq.s32.totalorder %s37, 0
    %s40 = sadd.s32 %s39, 1
    %s41 = scalar_select %p38, %s39, %s40
    %p44 = pneg %p38
    %p45 = scmp.eq.s32.totalorder %s15, 1
    %p46 = por %p44, %p45
    %p47 = scmp.ne.s32.totalorder %s39, %s42
    %p48 = scmp.eq.s32.totalorder %s15, 0
    %p49 = por %p47, %p48
    %p50 = scmp.ne.s32.totalorder %s39, %s42
    %p51 = scmp.eq.s32.totalorder %s20, 1
    %p52 = por %p50, %p51
    %p53 = scmp.ne.s32.totalorder %s42, %s43
    %p54 = scmp.eq.s32.totalorder %s20, 0
    %p55 = por %p53, %p54
    %p56 = scmp.ne.s32.totalorder %s42, %s43
    %p57 = scmp.eq.s32.totalorder %s21, 1
    %p58 = por %p56, %p57
    %p60 = scmp.ne.s32.totalorder %s43, %s59
    %p61 = scmp.eq.s32.totalorder %s21, 0
    %p62 = por %p60, %p61
    %s63 = ssub.s32 %s22, %s34
    %s64 = ssub.s32 %s23, %s30
    %s65 = sor.u32 %s63, %s64
    %p66 = scmp.eq.s32.totalorder %s65, 0
    %s68 = sadd.s32 %s67, 1
    %s69 = scalar_select %p66, %s67, %s68
    %p72 = pneg %p66
    %p73 = scmp.eq.s32.totalorder %s15, 1
    %p74 = por %p72, %p73
    %p75 = scmp.ne.s32.totalorder %s67, %s70
    %p76 = scmp.eq.s32.totalorder %s15, 0
    %p77 = por %p75, %p76
    %p78 = scmp.ne.s32.totalorder %s67, %s70
    %p79 = scmp.eq.s32.totalorder %s20, 1
    %p80 = por %p78, %p79
    %p81 = scmp.ne.s32.totalorder %s70, %s71
    %p82 = scmp.eq.s32.totalorder %s20, 0
    %p83 = por %p81, %p82
    %p84 = scmp.ne.s32.totalorder %s70, %s71
    %p85 = scmp.eq.s32.totalorder %s21, 1
    %p86 = por %p84, %p85
    %p88 = scmp.ne.s32.totalorder %s71, %s87
    %p89 = scmp.eq.s32.totalorder %s21, 0
    %p90 = por %p88, %p89
    %s92 = sadd.s32 %s91, 1
    %p95 = scmp.eq.s32.totalorder %s15, 1
    %p96 = scmp.ne.s32.totalorder %s91, %s93
    %p97 = scmp.eq.s32.totalorder %s15, 0
    %p98 = por %p96, %p97
    %p99 = scmp.ne.s32.totalorder %s91, %s93
    %p100 = scmp.eq.s32.totalorder %s20, 1
    %p101 = por %p99, %p100
    %p102 = scmp.ne.s32.totalorder %s93, %s94
    %p103 = scmp.eq.s32.totalorder %s20, 0
    %p104 = por %p102, %p103
    %p105 = scmp.ne.s32.totalorder %s93, %s94
    %p106 = scmp.eq.s32.totalorder %s21, 1
    %p107 = por %p105, %p106
    %p109 = scmp.ne.s32.totalorder %s94, %s108
    %p110 = scmp.eq.s32.totalorder %s21, 0
    %p111 = por %p109, %p110
    %s113 = sadd.s32 %s112, 1
    %p116 = scmp.eq.s32.totalorder %s15, 1
    %p117 = scmp.ne.s32.totalorder %s112, %s114
    %p118 = scmp.eq.s32.totalorder %s15, 0
    %p119 = por %p117, %p118
    %p120 = scmp.ne.s32.totalorder %s112, %s114
    %p121 = scmp.eq.s32.totalorder %s20, 1
    %p122 = por %p120, %p121
    %p123 = scmp.ne.s32.totalorder %s114, %s115
    %p124 = scmp.eq.s32.totalorder %s20, 0
    %p125 = por %p123, %p124
    %p126 = scmp.ne.s32.totalorder %s114, %s115
    %p127 = scmp.eq.s32.totalorder %s21, 1
    %p128 = por %p126, %p127
    %p130 = scmp.ne.s32.totalorder %s115, %s129
    %p131 = scmp.eq.s32.totalorder %s21, 0
    %p132 = por %p130, %p131
    %s134 = sadd.s32 %s133, 1
    %p137 = scmp.eq.s32.totalorder %s15, 1
    %p138 = scmp.ne.s32.totalorder %s133, %s135
    %p139 = scmp.eq.s32.totalorder %s15, 0
    %p140 = por %p138, %p139
    %p141 = scmp.ne.s32.totalorder %s133, %s135
    %p142 = scmp.eq.s32.totalorder %s20, 1
    %p143 = por %p141, %p142
    %p144 = scmp.ne.s32.totalorder %s135, %s136
    %p145 = scmp.eq.s32.totalorder %s20, 0
    %p146 = por %p144, %p145
    %p147 = scmp.ne.s32.totalorder %s135, %s136
    %p148 = scmp.eq.s32.totalorder %s21, 1
    %p149 = por %p147, %p148
    %p151 = scmp.ne.s32.totalorder %s136, %s150
    %p152 = scmp.eq.s32.totalorder %s21, 0
    %p153 = por %p151, %p152
    %s155 = sadd.s32 %s154, 1
    %p158 = scmp.eq.s32.totalorder %s15, 1
    %p159 = scmp.ne.s32.totalorder %s154, %s156
    %p160 = scmp.eq.s32.totalorder %s15, 0
    %p161 = por %p159, %p160
    %p162 = scmp.ne.s32.totalorder %s154, %s156
    %p163 = scmp.eq.s32.totalorder %s20, 1
    %p164 = por %p162, %p163
    %p165 = scmp.ne.s32.totalorder %s156, %s157
    %p166 = scmp.eq.s32.totalorder %s20, 0
    %p167 = por %p165, %p166
    %p168 = scmp.ne.s32.totalorder %s156, %s157
    %p169 = scmp.eq.s32.totalorder %s21, 1
    %p170 = por %p168, %p169
    %p172 = scmp.ne.s32.totalorder %s157, %s171
    %p173 = scmp.eq.s32.totalorder %s21, 0
    %p174 = por %p172, %p173
    %s176 = sadd.s32 %s175, 1
    %p179 = scmp.eq.s32.totalorder %s15, 1
    %p180 = scmp.ne.s32.totalorder %s175, %s177
    %p181 = scmp.eq.s32.totalorder %s15, 0
    %p182 = por %p180, %p181
    %p183 = scmp.ne.s32.totalorder %s175, %s177
    %p184 = scmp.eq.s32.totalorder %s20, 1
    %p185 = por %p183, %p184
    %p186 = scmp.ne.s32.totalorder %s177, %s178
    %p187 = scmp.eq.s32.totalorder %s20, 0
    %p188 = por %p186, %p187
    %p189 = scmp.ne.s32.totalorder %s177, %s178
    %p190 = scmp.eq.s32.totalorder %s21, 1
    %p191 = por %p189, %p190
    %p193 = scmp.ne.s32.totalorder %s178, %s192
    %p194 = scmp.eq.s32.totalorder %s21, 0
    %p195 = por %p193, %p194
    %s196 = ssub.s32 %s22, %s34
    %s197 = ssub.s32 %s23, %s30
    %s198 = sor.u32 %s196, %s197
    %p199 = scmp.eq.s32.totalorder %s198, 0
    %s201 = sadd.s32 %s200, 1
    %s202 = scalar_select %p199, %s200, %s201
    %p205 = pneg %p199
    %p206 = scmp.eq.s32.totalorder %s15, 1
    %p207 = por %p205, %p206
    %p208 = scmp.ne.s32.totalorder %s200, %s203
    %p209 = scmp.eq.s32.totalorder %s15, 0
    %p210 = por %p208, %p209
    %p211 = scmp.ne.s32.totalorder %s200, %s203
    %p212 = scmp.eq.s32.totalorder %s20, 1
    %p213 = por %p211, %p212
    %p214 = scmp.ne.s32.totalorder %s203, %s204
    %p215 = scmp.eq.s32.totalorder %s20, 0
    %p216 = por %p214, %p215
    %p217 = scmp.ne.s32.totalorder %s203, %s204
    %p218 = scmp.eq.s32.totalorder %s21, 1
    %p219 = por %p217, %p218
    %p221 = scmp.ne.s32.totalorder %s204, %s220
    %p222 = scmp.eq.s32.totalorder %s21, 0
    %p223 = por %p221, %p222
    %s224 = ssub.s32 %s22, %s34
    %s225 = ssub.s32 %s23, %s30
    %s226 = sor.u32 %s224, %s225
    %p227 = scmp.eq.s32.totalorder %s226, 0
    %s229 = sadd.s32 %s228, 1
    %s230 = scalar_select %p227, %s228, %s229
    %p233 = pneg %p227
    %p234 = scmp.eq.s32.totalorder %s15, 1
    %p235 = por %p233, %p234
    %p236 = scmp.ne.s32.totalorder %s228, %s231
    %p237 = scmp.eq.s32.totalorder %s15, 0
    %p238 = por %p236, %p237
    %p239 = scmp.ne.s32.totalorder %s228, %s231
    %p240 = scmp.eq.s32.totalorder %s20, 1
    %p241 = por %p239, %p240
    %p242 = scmp.ne.s32.totalorder %s231, %s232
    %p243 = scmp.eq.s32.totalorder %s20, 0
    %p244 = por %p242, %p243
    %p245 = scmp.ne.s32.totalorder %s231, %s232
    %p246 = scmp.eq.s32.totalorder %s21, 1
    %p247 = por %p245, %p246
    %p249 = scmp.ne.s32.totalorder %s232, %s248
    %p250 = scmp.eq.s32.totalorder %s21, 0
    %p251 = por %p249, %p250
    %p252 = scmp.le.s32.totalorder 1, %s15
    %p253 = scmp.lt.s32.totalorder %s15, 3
    %p254 = pnand %p252, %p253
    %p255 = pneg %p254
    // Predicated region
    $region9: #{point_ae_forward.5} parent=5 // pred_check
      _
    $region10: #{point_ae_forward.5} parent=5 // pred_check_branch
      %257 = sbr.rel (%p254) target = $region12
    $region11: #{point_ae_forward.5} parent=5 // pred_region
      %s258 = ssub.s32 %s15, 1
      // Predicated region
      $region13: #{point_ae_forward.5} parent=11 // pred_check
        %p259 = pneg %p104
      $region14: #{point_ae_forward.5} parent=11 // pred_check_branch
        %261 = sbr.rel (%p259) target = $region16
      $region15: #{point_ae_forward.5} parent=11 // pred_region
        _
      $region16: #{point_ae_forward.5} parent=11 // pred_fallthru
        _
      // Predicated region
      $region17: #{point_ae_forward.5} parent=11 // pred_check
        %p262 = pneg %p125
      $region18: #{point_ae_forward.5} parent=11 // pred_check_branch
        %264 = sbr.rel (%p262) target = $region20
      $region19: #{point_ae_forward.5} parent=11 // pred_region
        _
      $region20: #{point_ae_forward.5} parent=11 // pred_fallthru
        _
      // Predicated region
      $region21: #{point_ae_forward.5} parent=11 // pred_check
        %p265 = pneg %p146
      $region22: #{point_ae_forward.5} parent=11 // pred_check_branch
        %267 = sbr.rel (%p265) target = $region24
      $region23: #{point_ae_forward.5} parent=11 // pred_region
        _
      $region24: #{point_ae_forward.5} parent=11 // pred_fallthru
        _
      // Predicated region
      $region25: #{point_ae_forward.5} parent=11 // pred_check
        %p268 = pneg %p167
      $region26: #{point_ae_forward.5} parent=11 // pred_check_branch
        %270 = sbr.rel (%p268) target = $region28
      $region27: #{point_ae_forward.5} parent=11 // pred_region
        _
      $region28: #{point_ae_forward.5} parent=11 // pred_fallthru
        _
      // Predicated region
      $region29: #{point_ae_forward.5} parent=11 // pred_check
        %p271 = pneg %p188
      $region30: #{point_ae_forward.5} parent=11 // pred_check_branch
        %273 = sbr.rel (%p271) target = $region32
      $region31: #{point_ae_forward.5} parent=11 // pred_region
        _
      $region32: #{point_ae_forward.5} parent=11 // pred_fallthru
        _
    $region12: #{point_ae_forward.5} parent=5 // pred_fallthru
      _
    %p274 = scmp.lt.s32.totalorder %s15, 2
    // Predicated region
    $region33: #{point_ae_forward.5} parent=5 // pred_check
      %p275 = pneg %p274
    $region34: #{point_ae_forward.5} parent=5 // pred_check_branch
      %277 = sbr.rel (%p275) target = $region36
    $region35: #{point_ae_forward.5} parent=5 // pred_region
      // Predicated region
      $region37: #{point_ae_forward.5} parent=35 // pred_check
        %p278 = pneg %p49
      $region38: #{point_ae_forward.5} parent=35 // pred_check_branch
        %280 = sbr.rel (%p278) target = $region40
      $region39: #{point_ae_forward.5} parent=35 // pred_region
        %s281 = smul.u32 2, %s23
        %p282 = scmp.lt.s32.totalorder %s22, 1
        %s283 = scalar_select %p282, %s22, 1
        %p284 = scmp.lt.s32.totalorder %s281, 1
        %s285 = scalar_select %p284, %s281, 1
        %s286 = smul.addr %s283, 8
        %s287 = sadd.s32 %s285, %s286
        %s288 = smul.addr %s287, 8
        %s289 = scalar_lea.vmem %s0, %s288
        %s290 = smul.u32 2, %s23
      $region40: #{point_ae_forward.5} parent=35 // pred_fallthru
        _
      // Predicated region
      $region41: #{point_ae_forward.5} parent=35 // pred_check
        %p291 = pneg %p77
      $region42: #{point_ae_forward.5} parent=35 // pred_check_branch
        %293 = sbr.rel (%p291) target = $region44
      $region43: #{point_ae_forward.5} parent=35 // pred_region
        %s294 = smul.u32 2, %s23
        %p295 = scmp.lt.s32.totalorder %s22, 1
        %s296 = scalar_select %p295, %s22, 1
        %p297 = scmp.lt.s32.totalorder %s294, 1
        %s298 = scalar_select %p297, %s294, 1
        %s299 = smul.addr %s296, 8
        %s300 = sadd.s32 %s298, %s299
        %s301 = smul.addr %s300, 8
        %s302 = scalar_lea.vmem %s1, %s301
        %s303 = smul.u32 2, %s23
      $region44: #{point_ae_forward.5} parent=35 // pred_fallthru
        _
    $region36: #{point_ae_forward.5} parent=5 // pred_fallthru
      _
    %p304 = scmp.le.s32.totalorder 1, %s15
    %p305 = scmp.lt.s32.totalorder %s15, 3
    %p306 = pnand %p304, %p305
    %p307 = pneg %p306
    // Predicated region
    $region45: #{point_ae_forward.5} parent=5 // pred_check
      _
    $region46: #{point_ae_forward.5} parent=5 // pred_check_branch
      %309 = sbr.rel (%p306) target = $region48
    $region47: #{point_ae_forward.5} parent=5 // pred_region
      %s310 = ssub.s32 %s15, 1
      %s311 = smul.u32 2, %s25
      %p312 = scmp.lt.s32.totalorder %s24, 1
      %s313 = scalar_select %p312, %s24, 1
      %p314 = scmp.lt.s32.totalorder %s311, 1
      %s315 = scalar_select %p314, %s311, 1
      %s316 = smul.addr %s313, 8
      %s317 = sadd.s32 %s315, %s316
      %s318 = smul.addr %s317, 8
      %s319 = scalar_lea.vmem %s0, %s318
      %p320 = pneg %p55
      %p321 = pneg %p52
      %s322 = smul.u32 2, %s25
      %p323 = scmp.lt.s32.totalorder %s24, 1
      %s324 = scalar_select %p323, %s24, 1
      %p325 = scmp.lt.s32.totalorder %s322, 1
      %s326 = scalar_select %p325, %s322, 1
      %s327 = smul.addr %s324, 8
      %s328 = sadd.s32 %s326, %s327
      %s329 = smul.addr %s328, 8
      %s330 = scalar_lea.vmem %s1, %s329
      %p331 = pneg %p83
      %p332 = pneg %p80
      %p333 = pneg %p104
      %p334 = pneg %p101
      %p335 = pneg %p125
      %p336 = pneg %p122
      %p337 = pneg %p146
      %p338 = pneg %p143
      %p339 = pneg %p167
      %p340 = pneg %p164
      %p341 = pneg %p188
      %p342 = pneg %p185
      %p343 = pneg %p216
      %p344 = pneg %p213
      %s345 = smul.u32 2, %s25
      %p346 = scmp.lt.s32.totalorder %s24, 1
      %s347 = scalar_select %p346, %s24, 1
      %p348 = scmp.lt.s32.totalorder %s345, 1
      %s349 = scalar_select %p348, %s345, 1
      %s350 = smul.addr %s347, 2
      %s351 = sadd.s32 %s349, %s350
      %s352 = smul.addr %s351, 8
      %s353 = scalar_lea.vmem %s7, %s352
      %p354 = pneg %p244
      %p355 = pneg %p241
      %s356 = smul.u32 2, %s25
      %p357 = scmp.lt.s32.totalorder %s24, 1
      %s358 = scalar_select %p357, %s24, 1
      %p359 = scmp.lt.s32.totalorder %s356, 1
      %s360 = scalar_select %p359, %s356, 1
      %s361 = smul.addr %s358, 2
      %s362 = sadd.s32 %s360, %s361
      %s363 = smul.addr %s362, 8
      %s364 = scalar_lea.vmem %s8, %s363
      %s365 = smul.u32 2, %s25
      %p366 = scmp.lt.s32.totalorder %s24, 1
      %s367 = scalar_select %p366, %s24, 1
      %p368 = scmp.lt.s32.totalorder %s365, 1
      %s369 = scalar_select %p368, %s365, 1
      %s370 = smul.addr %s367, 8
      %s371 = sadd.s32 %s369, %s370
      %s372 = smul.addr %s371, 8
      %s373 = scalar_lea.vmem %s0, %s372
      %s374 = smul.u32 2, %s25
      %s375 = smul.u32 2, %s25
      %p376 = scmp.lt.s32.totalorder %s24, 1
      %s377 = scalar_select %p376, %s24, 1
      %p378 = scmp.lt.s32.totalorder %s375, 1
      %s379 = scalar_select %p378, %s375, 1
      %s380 = smul.addr %s377, 8
      %s381 = sadd.s32 %s379, %s380
      %s382 = smul.addr %s381, 8
      %s383 = scalar_lea.vmem %s1, %s382
      %s384 = smul.u32 2, %s25
      %s385 = smul.u32 2, %s25
      %p386 = scmp.lt.s32.totalorder %s24, 1
      %s387 = scalar_select %p386, %s24, 1
      %p388 = scmp.lt.s32.totalorder %s385, 1
      %s389 = scalar_select %p388, %s385, 1
      %s390 = smul.addr %s387, 2
      %s391 = sadd.s32 %s389, %s390
      %s392 = smul.addr %s391, 8
      %s393 = scalar_lea.vmem %s7, %s392
      %s394 = smul.u32 2, %s25
      %s395 = smul.u32 2, %s25
      %p396 = scmp.lt.s32.totalorder %s24, 1
      %s397 = scalar_select %p396, %s24, 1
      %p398 = scmp.lt.s32.totalorder %s395, 1
      %s399 = scalar_select %p398, %s395, 1
      %s400 = smul.addr %s397, 2
      %s401 = sadd.s32 %s399, %s400
      %s402 = smul.addr %s401, 8
      %s403 = scalar_lea.vmem %s8, %s402
      %s404 = smul.u32 2, %s25
      %v406 = vld [vmem:[%s373] sm:$0xff]
      %v407 = vld [vmem:[%s373 + $0x8] sm:$0xff]
      %s408 = scalar_lea.vmem %s373, 16
      %v409 = vld [vmem:[%s408] sm:$0xff]
      %v410 = vld [vmem:[%s408 + $0x8] sm:$0xff]
      %s411 = scalar_lea.vmem %s373, 32
      %v412 = vld [vmem:[%s411] sm:$0xff]
      %v413 = vld [vmem:[%s411 + $0x8] sm:$0xff]
      %s414 = scalar_lea.vmem %s373, 48
      %v415 = vld [vmem:[%s414] sm:$0xff]
      %v416 = vld [vmem:[%s414 + $0x8] sm:$0xff]
      %v417 = vadd.f32 %v406, %v409
      %v418 = vadd.f32 %v407, %v410
      %v419 = vadd.f32 %v417, %v412
      %v420 = vadd.f32 %v418, %v413
      %v421 = vadd.f32 %v419, %v415
      %v422 = vadd.f32 %v420, %v416
      %v423 = vmul.f32 %v421, 0.25
      %v424 = vmul.f32 %v422, 0.25
      %v425 = vsub.f32 %v406, %v423
      %v426 = vsub.f32 %v407, %v424
      %v427 = vld [vmem:[%s383] sm:$0xff]
      %v428 = vld [vmem:[%s383 + $0x8] sm:$0xff]
      %v429 = vld [vmem:[%s2] sm:$0x3]
      %v430 = vpack.c.bf16 %v426, %v425
      %v431 = vld [vmem:[%s3] sm:$0x3]
      %v432 = vpack.c.bf16 %v428, %v427
      %vm433 = vcmask 23552
      %v435 = vsel %vm433, %v432, 0
      %vm437 = vcmask 1040384
      %vm438 = vcmask 1041408
      %v439 = vsel %vm437, 4294967295, 65535
      %v440 = vsel %vm438, %v439, 0
      %v442 = vand.u32 %v431, %v440
      %444 = vmatpush.bf16.msra.mxu0 0
      %445 = vmatpush.bf16.msra.mxu0 0
      %446 = vmatpush.bf16.msra.mxu0 0
      %447 = vmatpush.bf16.msra.mxu0 0
      %448 = vmatpush.bf16.msra.mxu0 0
      %449 = vmatpush.bf16.msra.mxu0 0
      %450 = vmatpush.bf16.msra.mxu0 0
      %451 = vmatpush.bf16.msra.mxu0 %v442
      %452 = vmatmul.bf16.gmra.mxu0 %v435
      %v453 = vpop.f32.mrf.mxu0
      %v454 = vadd.f32 0.0, %v453
      %v455 = vpop.f32.mrf.mxu0
      %v456 = vadd.f32 0.0, %v455
      %457 = vdwg.mxu0
      %v459 = vsel %vm433, %v430, 0
      %v462 = vand.u32 %v429, %v440
      %464 = vmatpush.bf16.msra.mxu0 0
      %465 = vmatpush.bf16.msra.mxu0 0
      %466 = vmatpush.bf16.msra.mxu0 0
      %467 = vmatpush.bf16.msra.mxu0 0
      %468 = vmatpush.bf16.msra.mxu0 0
      %469 = vmatpush.bf16.msra.mxu0 0
      %470 = vmatpush.bf16.msra.mxu0 0
      %471 = vmatpush.bf16.msra.mxu0 %v462
      %472 = vmatmul.bf16.gmra.mxu0 %v459
      %v473 = vpop.f32.mrf.mxu0
      %v474 = vadd.f32 %v454, %v473
      %v475 = vpop.f32.mrf.mxu0
      %v476 = vadd.f32 %v456, %v475
      %477 = vdwg.mxu0
      %v478 = vld [vmem:[%s4] sm:$0x1]
      %v480 = vperm.slane %v478, 0
      %v482 = vadd.f32 %v474, %v480
      %v483 = vadd.f32 %v476, %v480
      %v484 = vmax.f32 %v482, 0.0
      %v485 = vmax.f32 %v483, 0.0
      %v486 = vld [vmem:[%s5] sm:$0xf]
      %v487 = vld [vmem:[%s5 + $0x4] sm:$0xf]
      %v488 = vld [vmem:[%s5 + $0x8] sm:$0xf]
      %v489 = vld [vmem:[%s5 + $0xc] sm:$0xf]
      %v490 = vpack.c.bf16 %v485, %v484
      %v491 = vld [vmem:[%s6] sm:$0x1]
      %v493 = vperm.slane %v491, 0
      %v499 = vunpack.c.l.b16 %v486
      %v500 = vunpack.c.l.b16 %v487
      %v501 = vunpack.c.l.b16 %v488
      %v502 = vunpack.c.l.b16 %v489
      %v503 = vpack.c.b16 %v500, %v499
      %v504 = vpack.c.b16 %v502, %v501
      %vm507 = vcmask 261120
      %v509 = vsel %vm507, %v490, 0
      %511 = vmatpush.bf16.msra.mxu0 0
      %512 = vmatpush.bf16.msra.mxu0 0
      %513 = vmatpush.bf16.msra.mxu0 0
      %514 = vmatpush.bf16.msra.mxu0 0
      %515 = vmatpush.bf16.msra.mxu0 0
      %516 = vmatpush.bf16.msra.mxu0 0
      %517 = vmatpush.bf16.msra.mxu0 %v504
      %518 = vmatpush.bf16.msra.mxu0 %v503
      %519 = vmatmul.bf16.gmra.mxu0 %v509
      %v520 = vpop.f32.mrf.mxu0
      %v521 = vadd.f32 %v493, %v520
      %v522 = vpop.f32.mrf.mxu0
      %v523 = vadd.f32 %v493, %v522
      %524 = vdwg.mxu0
      %v525 = vmax.f32 %v521, 0.0
      %v526 = vmax.f32 %v523, 0.0
      %v527 = vsub.f32 %v409, %v423
      %v528 = vsub.f32 %v410, %v424
      %s529 = scalar_lea.vmem %s383, 16
      %v530 = vld [vmem:[%s529] sm:$0xff]
      %v531 = vld [vmem:[%s529 + $0x8] sm:$0xff]
      %v532 = vpack.c.bf16 %v528, %v527
      %v533 = vpack.c.bf16 %v531, %v530
      %v535 = vsel %vm433, %v533, 0
      %537 = vmatpush.bf16.msra.mxu0 0
      %538 = vmatpush.bf16.msra.mxu0 0
      %539 = vmatpush.bf16.msra.mxu0 0
      %540 = vmatpush.bf16.msra.mxu0 0
      %541 = vmatpush.bf16.msra.mxu0 0
      %542 = vmatpush.bf16.msra.mxu0 0
      %543 = vmatpush.bf16.msra.mxu0 0
      %544 = vmatpush.bf16.msra.mxu0 %v442
      %545 = vmatmul.bf16.gmra.mxu0 %v535
      %v546 = vpop.f32.mrf.mxu0
      %v547 = vadd.f32 0.0, %v546
      %v548 = vpop.f32.mrf.mxu0
      %v549 = vadd.f32 0.0, %v548
      %550 = vdwg.mxu0
      %v552 = vsel %vm433, %v532, 0
      %554 = vmatpush.bf16.msra.mxu0 0
      %555 = vmatpush.bf16.msra.mxu0 0
      %556 = vmatpush.bf16.msra.mxu0 0
      %557 = vmatpush.bf16.msra.mxu0 0
      %558 = vmatpush.bf16.msra.mxu0 0
      %559 = vmatpush.bf16.msra.mxu0 0
      %560 = vmatpush.bf16.msra.mxu0 0
      %561 = vmatpush.bf16.msra.mxu0 %v462
      %562 = vmatmul.bf16.gmra.mxu0 %v552
      %v563 = vpop.f32.mrf.mxu0
      %v564 = vadd.f32 %v547, %v563
      %v565 = vpop.f32.mrf.mxu0
      %v566 = vadd.f32 %v549, %v565
      %567 = vdwg.mxu0
      %v568 = vadd.f32 %v564, %v480
      %v569 = vadd.f32 %v566, %v480
      %v570 = vmax.f32 %v568, 0.0
      %v571 = vmax.f32 %v569, 0.0
      %v572 = vpack.c.bf16 %v571, %v570
      %v574 = vsel %vm507, %v572, 0
      %576 = vmatpush.bf16.msra.mxu0 0
      %577 = vmatpush.bf16.msra.mxu0 0
      %578 = vmatpush.bf16.msra.mxu0 0
      %579 = vmatpush.bf16.msra.mxu0 0
      %580 = vmatpush.bf16.msra.mxu0 0
      %581 = vmatpush.bf16.msra.mxu0 0
      %582 = vmatpush.bf16.msra.mxu0 %v504
      %583 = vmatpush.bf16.msra.mxu0 %v503
      %584 = vmatmul.bf16.gmra.mxu0 %v574
      %v585 = vpop.f32.mrf.mxu0
      %v586 = vadd.f32 %v493, %v585
      %v587 = vpop.f32.mrf.mxu0
      %v588 = vadd.f32 %v493, %v587
      %589 = vdwg.mxu0
      %v590 = vmax.f32 %v586, 0.0
      %v591 = vmax.f32 %v588, 0.0
      %v592 = vmax.f32 %v525, %v590
      %v593 = vmax.f32 %v526, %v591
      %v594 = vsub.f32 %v412, %v423
      %v595 = vsub.f32 %v413, %v424
      %s596 = scalar_lea.vmem %s383, 32
      %v597 = vld [vmem:[%s596] sm:$0xff]
      %v598 = vld [vmem:[%s596 + $0x8] sm:$0xff]
      %v599 = vpack.c.bf16 %v595, %v594
      %v600 = vpack.c.bf16 %v598, %v597
      %v602 = vsel %vm433, %v600, 0
      %604 = vmatpush.bf16.msra.mxu0 0
      %605 = vmatpush.bf16.msra.mxu0 0
      %606 = vmatpush.bf16.msra.mxu0 0
      %607 = vmatpush.bf16.msra.mxu0 0
      %608 = vmatpush.bf16.msra.mxu0 0
      %609 = vmatpush.bf16.msra.mxu0 0
      %610 = vmatpush.bf16.msra.mxu0 0
      %611 = vmatpush.bf16.msra.mxu0 %v442
      %612 = vmatmul.bf16.gmra.mxu0 %v602
      %v613 = vpop.f32.mrf.mxu0
      %v614 = vadd.f32 0.0, %v613
      %v615 = vpop.f32.mrf.mxu0
      %v616 = vadd.f32 0.0, %v615
      %617 = vdwg.mxu0
      %v619 = vsel %vm433, %v599, 0
      %621 = vmatpush.bf16.msra.mxu0 0
      %622 = vmatpush.bf16.msra.mxu0 0
      %623 = vmatpush.bf16.msra.mxu0 0
      %624 = vmatpush.bf16.msra.mxu0 0
      %625 = vmatpush.bf16.msra.mxu0 0
      %626 = vmatpush.bf16.msra.mxu0 0
      %627 = vmatpush.bf16.msra.mxu0 0
      %628 = vmatpush.bf16.msra.mxu0 %v462
      %629 = vmatmul.bf16.gmra.mxu0 %v619
      %v630 = vpop.f32.mrf.mxu0
      %v631 = vadd.f32 %v614, %v630
      %v632 = vpop.f32.mrf.mxu0
      %v633 = vadd.f32 %v616, %v632
      %634 = vdwg.mxu0
      %v635 = vadd.f32 %v631, %v480
      %v636 = vadd.f32 %v633, %v480
      %v637 = vmax.f32 %v635, 0.0
      %v638 = vmax.f32 %v636, 0.0
      %v639 = vpack.c.bf16 %v638, %v637
      %v641 = vsel %vm507, %v639, 0
      %643 = vmatpush.bf16.msra.mxu0 0
      %644 = vmatpush.bf16.msra.mxu0 0
      %645 = vmatpush.bf16.msra.mxu0 0
      %646 = vmatpush.bf16.msra.mxu0 0
      %647 = vmatpush.bf16.msra.mxu0 0
      %648 = vmatpush.bf16.msra.mxu0 0
      %649 = vmatpush.bf16.msra.mxu0 %v504
      %650 = vmatpush.bf16.msra.mxu0 %v503
      %651 = vmatmul.bf16.gmra.mxu0 %v641
      %v652 = vpop.f32.mrf.mxu0
      %v653 = vadd.f32 %v493, %v652
      %v654 = vpop.f32.mrf.mxu0
      %v655 = vadd.f32 %v493, %v654
      %656 = vdwg.mxu0
      %v657 = vmax.f32 %v653, 0.0
      %v658 = vmax.f32 %v655, 0.0
      %v659 = vmax.f32 %v592, %v657
      %v660 = vmax.f32 %v593, %v658
      %v661 = vsub.f32 %v415, %v423
      %v662 = vsub.f32 %v416, %v424
      %s663 = scalar_lea.vmem %s383, 48
      %v664 = vld [vmem:[%s663] sm:$0xff]
      %v665 = vld [vmem:[%s663 + $0x8] sm:$0xff]
      %v666 = vpack.c.bf16 %v662, %v661
      %v667 = vpack.c.bf16 %v665, %v664
      %v669 = vsel %vm433, %v667, 0
      %671 = vmatpush.bf16.msra.mxu0 0
      %672 = vmatpush.bf16.msra.mxu0 0
      %673 = vmatpush.bf16.msra.mxu0 0
      %674 = vmatpush.bf16.msra.mxu0 0
      %675 = vmatpush.bf16.msra.mxu0 0
      %676 = vmatpush.bf16.msra.mxu0 0
      %677 = vmatpush.bf16.msra.mxu0 0
      %678 = vmatpush.bf16.msra.mxu0 %v442
      %679 = vmatmul.bf16.gmra.mxu0 %v669
      %v680 = vpop.f32.mrf.mxu0
      %v681 = vadd.f32 0.0, %v680
      %v682 = vpop.f32.mrf.mxu0
      %v683 = vadd.f32 0.0, %v682
      %684 = vdwg.mxu0
      %v686 = vsel %vm433, %v666, 0
      %688 = vmatpush.bf16.msra.mxu0 0
      %689 = vmatpush.bf16.msra.mxu0 0
      %690 = vmatpush.bf16.msra.mxu0 0
      %691 = vmatpush.bf16.msra.mxu0 0
      %692 = vmatpush.bf16.msra.mxu0 0
      %693 = vmatpush.bf16.msra.mxu0 0
      %694 = vmatpush.bf16.msra.mxu0 0
      %695 = vmatpush.bf16.msra.mxu0 %v462
      %696 = vmatmul.bf16.gmra.mxu0 %v686
      %v697 = vpop.f32.mrf.mxu0
      %v698 = vadd.f32 %v681, %v697
      %v699 = vpop.f32.mrf.mxu0
      %v700 = vadd.f32 %v683, %v699
      %701 = vdwg.mxu0
      %v702 = vadd.f32 %v698, %v480
      %v703 = vadd.f32 %v700, %v480
      %v704 = vmax.f32 %v702, 0.0
      %v705 = vmax.f32 %v703, 0.0
      %v706 = vpack.c.bf16 %v705, %v704
      %v708 = vsel %vm507, %v706, 0
      %710 = vmatpush.bf16.msra.mxu0 0
      %711 = vmatpush.bf16.msra.mxu0 0
      %712 = vmatpush.bf16.msra.mxu0 0
      %713 = vmatpush.bf16.msra.mxu0 0
      %714 = vmatpush.bf16.msra.mxu0 0
      %715 = vmatpush.bf16.msra.mxu0 0
      %716 = vmatpush.bf16.msra.mxu0 %v504
      %717 = vmatpush.bf16.msra.mxu0 %v503
      %718 = vmatmul.bf16.gmra.mxu0 %v708
      %v719 = vpop.f32.mrf.mxu0
      %v720 = vadd.f32 %v493, %v719
      %v721 = vpop.f32.mrf.mxu0
      %v722 = vadd.f32 %v493, %v721
      %723 = vdwg.mxu0
      %v724 = vmax.f32 %v720, 0.0
      %v725 = vmax.f32 %v722, 0.0
      %v726 = vmax.f32 %v659, %v724
      %v727 = vmax.f32 %v660, %v725
      %728 = vst.msk [vmem:[%s393] sm:$0xff] %vm433, %v423
      %729 = vst.msk [vmem:[%s393 + $0x8] sm:$0xff] %vm433, %v424
      %730 = vst.msk [vmem:[%s403] sm:$0xff] %vm507, %v726
      %731 = vst.msk [vmem:[%s403 + $0x8] sm:$0xff] %vm507, %v727
      %s732 = smul.u32 2, %s25
      %p733 = scmp.lt.s32.totalorder %s24, 1
      %s734 = scalar_select %p733, %s24, 1
      %p735 = scmp.lt.s32.totalorder %s732, 1
      %s736 = scalar_select %p735, %s732, 1
      %s737 = smul.addr %s734, 2
      %s738 = sadd.s32 %s736, %s737
      %s739 = smul.addr %s738, 8
      %s740 = scalar_lea.vmem %s7, %s739
      %s741 = smul.u32 2, %s25
      %p742 = scmp.lt.s32.totalorder %s24, 1
      %s743 = scalar_select %p742, %s24, 1
      %p744 = scmp.lt.s32.totalorder %s741, 1
      %s745 = scalar_select %p744, %s741, 1
      %s746 = smul.addr %s743, 2
      %s747 = sadd.s32 %s745, %s746
      %s748 = smul.addr %s747, 8
      %s749 = scalar_lea.vmem %s8, %s748
      // Predicated region
      $region49: #{point_ae_forward.5} parent=47 // pred_check
        %p750 = pneg %p213
      $region50: #{point_ae_forward.5} parent=47 // pred_check_branch
        %752 = sbr.rel (%p750) target = $region52
      $region51: #{point_ae_forward.5} parent=47 // pred_region
        %s753 = smul.u32 2, %s25
      $region52: #{point_ae_forward.5} parent=47 // pred_fallthru
        _
      // Predicated region
      $region53: #{point_ae_forward.5} parent=47 // pred_check
        %p754 = pneg %p241
      $region54: #{point_ae_forward.5} parent=47 // pred_check_branch
        %756 = sbr.rel (%p754) target = $region56
      $region55: #{point_ae_forward.5} parent=47 // pred_region
        %s757 = smul.u32 2, %s25
      $region56: #{point_ae_forward.5} parent=47 // pred_fallthru
        _
    $region48: #{point_ae_forward.5} parent=5 // pred_fallthru
      _
    %p758 = scmp.le.s32.totalorder 2, %s15
    // Predicated region
    $region57: #{point_ae_forward.5} parent=5 // pred_check
      %p759 = pneg %p758
    $region58: #{point_ae_forward.5} parent=5 // pred_check_branch
      %761 = sbr.rel (%p759) target = $region60
    $region59: #{point_ae_forward.5} parent=5 // pred_region
      %s762 = ssub.s32 %s15, 2
      // Predicated region
      $region61: #{point_ae_forward.5} parent=59 // pred_check
        %p763 = pneg %p219
      $region62: #{point_ae_forward.5} parent=59 // pred_check_branch
        %765 = sbr.rel (%p763) target = $region64
      $region63: #{point_ae_forward.5} parent=59 // pred_region
        %s766 = smul.u32 2, %s27
        %p767 = scmp.lt.s32.totalorder %s26, 1
        %s768 = scalar_select %p767, %s26, 1
        %p769 = scmp.lt.s32.totalorder %s766, 1
        %s770 = scalar_select %p769, %s766, 1
        %s771 = smul.addr %s768, 2
        %s772 = sadd.s32 %s770, %s771
        %s773 = smul.addr %s772, 8
        %s774 = scalar_lea.vmem %s7, %s773
      $region64: #{point_ae_forward.5} parent=59 // pred_fallthru
        _
      // Predicated region
      $region65: #{point_ae_forward.5} parent=59 // pred_check
        %p775 = pneg %p247
      $region66: #{point_ae_forward.5} parent=59 // pred_check_branch
        %777 = sbr.rel (%p775) target = $region68
      $region67: #{point_ae_forward.5} parent=59 // pred_region
        %s778 = smul.u32 2, %s27
        %p779 = scmp.lt.s32.totalorder %s26, 1
        %s780 = scalar_select %p779, %s26, 1
        %p781 = scmp.lt.s32.totalorder %s778, 1
        %s782 = scalar_select %p781, %s778, 1
        %s783 = smul.addr %s780, 2
        %s784 = sadd.s32 %s782, %s783
        %s785 = smul.addr %s784, 8
        %s786 = scalar_lea.vmem %s8, %s785
      $region68: #{point_ae_forward.5} parent=59 // pred_fallthru
        _
    $region60: #{point_ae_forward.5} parent=5 // pred_fallthru
      _
  $region6: #{point_ae_forward.5} parent=0 // loop_footer
    %s19 = sadd.s32 1, %s15
  $region7: #{point_ae_forward.5} parent=0 // loop_footer_branch
    %14 = sbr.rel target = $region3
  $region8: #{point_ae_forward.5} parent=0 // loop_exit
    _

// kernel: point_ae_forward.6
$region0: #{point_ae_forward.6}
  #allocation0 [shape = 'u32[]', space=smem, size = 0x4, offset = 0x4, fixed_abs, tag = 'smem constant byte address 0x4 - core index']
  #allocation1 [shape = 'u32[72,128]{1,0:T(1,128)}', space=vmem, size = 0x9000, scoped, tag = 'internal scratch']
  %s0 = inlined_call_operand.vmem [shape: f32[2,4,4,3], index: 0, kind: input, shape index: {}]
  %s1 = inlined_call_operand.vmem [shape: f32[2,4,4,32], index: 1, kind: input, shape index: {}]
  %s2 = inlined_call_operand.vmem [shape: bf16[3,64], index: 2, kind: input, shape index: {}]
  %s3 = inlined_call_operand.vmem [shape: bf16[32,64], index: 3, kind: input, shape index: {}]
  %s4 = inlined_call_operand.vmem [shape: f32[1,64], index: 4, kind: input, shape index: {}]
  %s5 = inlined_call_operand.vmem [shape: bf16[64,64], index: 5, kind: input, shape index: {}]
  %s6 = inlined_call_operand.vmem [shape: f32[1,64], index: 6, kind: input, shape index: {}]
  %s7 = inlined_call_operand.vmem [shape: f32[2,4,3], index: 7, kind: output, shape index: {0}]
  %s8 = inlined_call_operand.vmem [shape: f32[2,4,64], index: 8, kind: output, shape index: {1}]
  %9 = xla_tuple %s7, %s8
  %s10 = sld [smem:[#allocation0]]
  $region69: #{point_ae_forward.6} parent=0
    _
  %s12 = ssub.s32 1, %s10
  %s13 = scalar_select 0, %s12, %s10
  loop: start=0, step=1, limit=4
  $region2: #{point_ae_forward.6} parent=0 // loop_pre_header
    _
  $region3: #{point_ae_forward.6} parent=0 // loop_header
    %s15 = sphi 0, %s19
    %p16 = scmp.ge.s32.totalorder %s15, 4
    %s22 = sphi 0, %s34
    %s23 = sphi 0, %s30
    %s24 = sphi 0, %s22
    %s25 = sphi 0, %s23
    %s26 = sphi 0, %s24
    %s27 = sphi 0, %s25
    %s39 = sphi 0, %s41
    %s42 = sphi 0, %s39
    %s43 = sphi 0, %s42
    %s59 = sphi 0, %s43
    %s67 = sphi 0, %s69
    %s70 = sphi 0, %s67
    %s71 = sphi 0, %s70
    %s87 = sphi 0, %s71
    %s91 = sphi 0, %s91
    %s93 = sphi 0, %s91
    %s94 = sphi 0, %s93
    %s108 = sphi 0, %s94
    %s112 = sphi 0, %s112
    %s114 = sphi 0, %s112
    %s115 = sphi 0, %s114
    %s129 = sphi 0, %s115
    %s133 = sphi 0, %s133
    %s135 = sphi 0, %s133
    %s136 = sphi 0, %s135
    %s150 = sphi 0, %s136
    %s154 = sphi 0, %s154
    %s156 = sphi 0, %s154
    %s157 = sphi 0, %s156
    %s171 = sphi 0, %s157
    %s175 = sphi 0, %s175
    %s177 = sphi 0, %s175
    %s178 = sphi 0, %s177
    %s192 = sphi 0, %s178
    %s200 = sphi 0, %s202
    %s203 = sphi 0, %s200
    %s204 = sphi 0, %s203
    %s220 = sphi 0, %s204
    %s228 = sphi 0, %s230
    %s231 = sphi 0, %s228
    %s232 = sphi 0, %s231
    %s248 = sphi 0, %s232
  $region4: #{point_ae_forward.6} parent=0 // loop_header_branch
    %18 = sbr.rel (%p16) target = $region8
  $region5: #{point_ae_forward.6} parent=0 // loop_body
    %s20 = ssub.s32 %s15, 1
    %s21 = ssub.s32 %s15, 2
    %s28 = sadd.s32 1, %s23
    %p29 = scmp.ge.s32.totalorder %s28, 1
    %s30 = scalar_select %p29, 0, %s28
    %s31 = sadd.s32 1, %s22
    %s32 = scalar_select %p29, %s31, %s22
    %p33 = scmp.ge.s32.totalorder %s32, 2
    %s34 = scalar_select %p33, 0, %s32
    %s35 = ssub.s32 %s22, %s34
    %s36 = ssub.s32 %s23, %s30
    %s37 = sor.u32 %s35, %s36
    %p38 = scmp.eq.s32.totalorder %s37, 0
    %s40 = sadd.s32 %s39, 1
    %s41 = scalar_select %p38, %s39, %s40
    %p44 = pneg %p38
    %p45 = scmp.eq.s32.totalorder %s15, 1
    %p46 = por %p44, %p45
    %p47 = scmp.ne.s32.totalorder %s39, %s42
    %p48 = scmp.eq.s32.totalorder %s15, 0
    %p49 = por %p47, %p48
    %p50 = scmp.ne.s32.totalorder %s39, %s42
    %p51 = scmp.eq.s32.totalorder %s20, 1
    %p52 = por %p50, %p51
    %p53 = scmp.ne.s32.totalorder %s42, %s43
    %p54 = scmp.eq.s32.totalorder %s20, 0
    %p55 = por %p53, %p54
    %p56 = scmp.ne.s32.totalorder %s42, %s43
    %p57 = scmp.eq.s32.totalorder %s21, 1
    %p58 = por %p56, %p57
    %p60 = scmp.ne.s32.totalorder %s43, %s59
    %p61 = scmp.eq.s32.totalorder %s21, 0
    %p62 = por %p60, %p61
    %s63 = ssub.s32 %s22, %s34
    %s64 = ssub.s32 %s23, %s30
    %s65 = sor.u32 %s63, %s64
    %p66 = scmp.eq.s32.totalorder %s65, 0
    %s68 = sadd.s32 %s67, 1
    %s69 = scalar_select %p66, %s67, %s68
    %p72 = pneg %p66
    %p73 = scmp.eq.s32.totalorder %s15, 1
    %p74 = por %p72, %p73
    %p75 = scmp.ne.s32.totalorder %s67, %s70
    %p76 = scmp.eq.s32.totalorder %s15, 0
    %p77 = por %p75, %p76
    %p78 = scmp.ne.s32.totalorder %s67, %s70
    %p79 = scmp.eq.s32.totalorder %s20, 1
    %p80 = por %p78, %p79
    %p81 = scmp.ne.s32.totalorder %s70, %s71
    %p82 = scmp.eq.s32.totalorder %s20, 0
    %p83 = por %p81, %p82
    %p84 = scmp.ne.s32.totalorder %s70, %s71
    %p85 = scmp.eq.s32.totalorder %s21, 1
    %p86 = por %p84, %p85
    %p88 = scmp.ne.s32.totalorder %s71, %s87
    %p89 = scmp.eq.s32.totalorder %s21, 0
    %p90 = por %p88, %p89
    %s92 = sadd.s32 %s91, 1
    %p95 = scmp.eq.s32.totalorder %s15, 1
    %p96 = scmp.ne.s32.totalorder %s91, %s93
    %p97 = scmp.eq.s32.totalorder %s15, 0
    %p98 = por %p96, %p97
    %p99 = scmp.ne.s32.totalorder %s91, %s93
    %p100 = scmp.eq.s32.totalorder %s20, 1
    %p101 = por %p99, %p100
    %p102 = scmp.ne.s32.totalorder %s93, %s94
    %p103 = scmp.eq.s32.totalorder %s20, 0
    %p104 = por %p102, %p103
    %p105 = scmp.ne.s32.totalorder %s93, %s94
    %p106 = scmp.eq.s32.totalorder %s21, 1
    %p107 = por %p105, %p106
    %p109 = scmp.ne.s32.totalorder %s94, %s108
    %p110 = scmp.eq.s32.totalorder %s21, 0
    %p111 = por %p109, %p110
    %s113 = sadd.s32 %s112, 1
    %p116 = scmp.eq.s32.totalorder %s15, 1
    %p117 = scmp.ne.s32.totalorder %s112, %s114
    %p118 = scmp.eq.s32.totalorder %s15, 0
    %p119 = por %p117, %p118
    %p120 = scmp.ne.s32.totalorder %s112, %s114
    %p121 = scmp.eq.s32.totalorder %s20, 1
    %p122 = por %p120, %p121
    %p123 = scmp.ne.s32.totalorder %s114, %s115
    %p124 = scmp.eq.s32.totalorder %s20, 0
    %p125 = por %p123, %p124
    %p126 = scmp.ne.s32.totalorder %s114, %s115
    %p127 = scmp.eq.s32.totalorder %s21, 1
    %p128 = por %p126, %p127
    %p130 = scmp.ne.s32.totalorder %s115, %s129
    %p131 = scmp.eq.s32.totalorder %s21, 0
    %p132 = por %p130, %p131
    %s134 = sadd.s32 %s133, 1
    %p137 = scmp.eq.s32.totalorder %s15, 1
    %p138 = scmp.ne.s32.totalorder %s133, %s135
    %p139 = scmp.eq.s32.totalorder %s15, 0
    %p140 = por %p138, %p139
    %p141 = scmp.ne.s32.totalorder %s133, %s135
    %p142 = scmp.eq.s32.totalorder %s20, 1
    %p143 = por %p141, %p142
    %p144 = scmp.ne.s32.totalorder %s135, %s136
    %p145 = scmp.eq.s32.totalorder %s20, 0
    %p146 = por %p144, %p145
    %p147 = scmp.ne.s32.totalorder %s135, %s136
    %p148 = scmp.eq.s32.totalorder %s21, 1
    %p149 = por %p147, %p148
    %p151 = scmp.ne.s32.totalorder %s136, %s150
    %p152 = scmp.eq.s32.totalorder %s21, 0
    %p153 = por %p151, %p152
    %s155 = sadd.s32 %s154, 1
    %p158 = scmp.eq.s32.totalorder %s15, 1
    %p159 = scmp.ne.s32.totalorder %s154, %s156
    %p160 = scmp.eq.s32.totalorder %s15, 0
    %p161 = por %p159, %p160
    %p162 = scmp.ne.s32.totalorder %s154, %s156
    %p163 = scmp.eq.s32.totalorder %s20, 1
    %p164 = por %p162, %p163
    %p165 = scmp.ne.s32.totalorder %s156, %s157
    %p166 = scmp.eq.s32.totalorder %s20, 0
    %p167 = por %p165, %p166
    %p168 = scmp.ne.s32.totalorder %s156, %s157
    %p169 = scmp.eq.s32.totalorder %s21, 1
    %p170 = por %p168, %p169
    %p172 = scmp.ne.s32.totalorder %s157, %s171
    %p173 = scmp.eq.s32.totalorder %s21, 0
    %p174 = por %p172, %p173
    %s176 = sadd.s32 %s175, 1
    %p179 = scmp.eq.s32.totalorder %s15, 1
    %p180 = scmp.ne.s32.totalorder %s175, %s177
    %p181 = scmp.eq.s32.totalorder %s15, 0
    %p182 = por %p180, %p181
    %p183 = scmp.ne.s32.totalorder %s175, %s177
    %p184 = scmp.eq.s32.totalorder %s20, 1
    %p185 = por %p183, %p184
    %p186 = scmp.ne.s32.totalorder %s177, %s178
    %p187 = scmp.eq.s32.totalorder %s20, 0
    %p188 = por %p186, %p187
    %p189 = scmp.ne.s32.totalorder %s177, %s178
    %p190 = scmp.eq.s32.totalorder %s21, 1
    %p191 = por %p189, %p190
    %p193 = scmp.ne.s32.totalorder %s178, %s192
    %p194 = scmp.eq.s32.totalorder %s21, 0
    %p195 = por %p193, %p194
    %s196 = ssub.s32 %s22, %s34
    %s197 = ssub.s32 %s23, %s30
    %s198 = sor.u32 %s196, %s197
    %p199 = scmp.eq.s32.totalorder %s198, 0
    %s201 = sadd.s32 %s200, 1
    %s202 = scalar_select %p199, %s200, %s201
    %p205 = pneg %p199
    %p206 = scmp.eq.s32.totalorder %s15, 1
    %p207 = por %p205, %p206
    %p208 = scmp.ne.s32.totalorder %s200, %s203
    %p209 = scmp.eq.s32.totalorder %s15, 0
    %p210 = por %p208, %p209
    %p211 = scmp.ne.s32.totalorder %s200, %s203
    %p212 = scmp.eq.s32.totalorder %s20, 1
    %p213 = por %p211, %p212
    %p214 = scmp.ne.s32.totalorder %s203, %s204
    %p215 = scmp.eq.s32.totalorder %s20, 0
    %p216 = por %p214, %p215
    %p217 = scmp.ne.s32.totalorder %s203, %s204
    %p218 = scmp.eq.s32.totalorder %s21, 1
    %p219 = por %p217, %p218
    %p221 = scmp.ne.s32.totalorder %s204, %s220
    %p222 = scmp.eq.s32.totalorder %s21, 0
    %p223 = por %p221, %p222
    %s224 = ssub.s32 %s22, %s34
    %s225 = ssub.s32 %s23, %s30
    %s226 = sor.u32 %s224, %s225
    %p227 = scmp.eq.s32.totalorder %s226, 0
    %s229 = sadd.s32 %s228, 1
    %s230 = scalar_select %p227, %s228, %s229
    %p233 = pneg %p227
    %p234 = scmp.eq.s32.totalorder %s15, 1
    %p235 = por %p233, %p234
    %p236 = scmp.ne.s32.totalorder %s228, %s231
    %p237 = scmp.eq.s32.totalorder %s15, 0
    %p238 = por %p236, %p237
    %p239 = scmp.ne.s32.totalorder %s228, %s231
    %p240 = scmp.eq.s32.totalorder %s20, 1
    %p241 = por %p239, %p240
    %p242 = scmp.ne.s32.totalorder %s231, %s232
    %p243 = scmp.eq.s32.totalorder %s20, 0
    %p244 = por %p242, %p243
    %p245 = scmp.ne.s32.totalorder %s231, %s232
    %p246 = scmp.eq.s32.totalorder %s21, 1
    %p247 = por %p245, %p246
    %p249 = scmp.ne.s32.totalorder %s232, %s248
    %p250 = scmp.eq.s32.totalorder %s21, 0
    %p251 = por %p249, %p250
    %p252 = scmp.le.s32.totalorder 1, %s15
    %p253 = scmp.lt.s32.totalorder %s15, 3
    %p254 = pnand %p252, %p253
    %p255 = pneg %p254
    // Predicated region
    $region9: #{point_ae_forward.6} parent=5 // pred_check
      _
    $region10: #{point_ae_forward.6} parent=5 // pred_check_branch
      %257 = sbr.rel (%p254) target = $region12
    $region11: #{point_ae_forward.6} parent=5 // pred_region
      %s258 = ssub.s32 %s15, 1
      // Predicated region
      $region13: #{point_ae_forward.6} parent=11 // pred_check
        %p259 = pneg %p104
      $region14: #{point_ae_forward.6} parent=11 // pred_check_branch
        %261 = sbr.rel (%p259) target = $region16
      $region15: #{point_ae_forward.6} parent=11 // pred_region
        _
      $region16: #{point_ae_forward.6} parent=11 // pred_fallthru
        _
      // Predicated region
      $region17: #{point_ae_forward.6} parent=11 // pred_check
        %p262 = pneg %p125
      $region18: #{point_ae_forward.6} parent=11 // pred_check_branch
        %264 = sbr.rel (%p262) target = $region20
      $region19: #{point_ae_forward.6} parent=11 // pred_region
        _
      $region20: #{point_ae_forward.6} parent=11 // pred_fallthru
        _
      // Predicated region
      $region21: #{point_ae_forward.6} parent=11 // pred_check
        %p265 = pneg %p146
      $region22: #{point_ae_forward.6} parent=11 // pred_check_branch
        %267 = sbr.rel (%p265) target = $region24
      $region23: #{point_ae_forward.6} parent=11 // pred_region
        _
      $region24: #{point_ae_forward.6} parent=11 // pred_fallthru
        _
      // Predicated region
      $region25: #{point_ae_forward.6} parent=11 // pred_check
        %p268 = pneg %p167
      $region26: #{point_ae_forward.6} parent=11 // pred_check_branch
        %270 = sbr.rel (%p268) target = $region28
      $region27: #{point_ae_forward.6} parent=11 // pred_region
        _
      $region28: #{point_ae_forward.6} parent=11 // pred_fallthru
        _
      // Predicated region
      $region29: #{point_ae_forward.6} parent=11 // pred_check
        %p271 = pneg %p188
      $region30: #{point_ae_forward.6} parent=11 // pred_check_branch
        %273 = sbr.rel (%p271) target = $region32
      $region31: #{point_ae_forward.6} parent=11 // pred_region
        _
      $region32: #{point_ae_forward.6} parent=11 // pred_fallthru
        _
    $region12: #{point_ae_forward.6} parent=5 // pred_fallthru
      _
    %p274 = scmp.lt.s32.totalorder %s15, 2
    // Predicated region
    $region33: #{point_ae_forward.6} parent=5 // pred_check
      %p275 = pneg %p274
    $region34: #{point_ae_forward.6} parent=5 // pred_check_branch
      %277 = sbr.rel (%p275) target = $region36
    $region35: #{point_ae_forward.6} parent=5 // pred_region
      // Predicated region
      $region37: #{point_ae_forward.6} parent=35 // pred_check
        %p278 = pneg %p49
      $region38: #{point_ae_forward.6} parent=35 // pred_check_branch
        %280 = sbr.rel (%p278) target = $region40
      $region39: #{point_ae_forward.6} parent=35 // pred_region
        %p281 = scmp.lt.s32.totalorder %s22, 1
        %s282 = scalar_select %p281, %s22, 1
        %p283 = scmp.lt.s32.totalorder %s23, 0
        %s284 = scalar_select %p283, %s23, 0
        %s285 = smul.addr %s282, 4
        %s286 = sadd.s32 %s284, %s285
        %s287 = smul.addr %s286, 4
        %s288 = scalar_lea.vmem %s0, %s287
      $region40: #{point_ae_forward.6} parent=35 // pred_fallthru
        _
      // Predicated region
      $region41: #{point_ae_forward.6} parent=35 // pred_check
        %p289 = pneg %p77
      $region42: #{point_ae_forward.6} parent=35 // pred_check_branch
        %291 = sbr.rel (%p289) target = $region44
      $region43: #{point_ae_forward.6} parent=35 // pred_region
        %p292 = scmp.lt.s32.totalorder %s22, 1
        %s293 = scalar_select %p292, %s22, 1
        %p294 = scmp.lt.s32.totalorder %s23, 0
        %s295 = scalar_select %p294, %s23, 0
        %s296 = smul.addr %s293, 4
        %s297 = sadd.s32 %s295, %s296
        %s298 = smul.addr %s297, 4
        %s299 = scalar_lea.vmem %s1, %s298
      $region44: #{point_ae_forward.6} parent=35 // pred_fallthru
        _
    $region36: #{point_ae_forward.6} parent=5 // pred_fallthru
      _
    %p300 = scmp.le.s32.totalorder 1, %s15
    %p301 = scmp.lt.s32.totalorder %s15, 3
    %p302 = pnand %p300, %p301
    %p303 = pneg %p302
    // Predicated region
    $region45: #{point_ae_forward.6} parent=5 // pred_check
      _
    $region46: #{point_ae_forward.6} parent=5 // pred_check_branch
      %305 = sbr.rel (%p302) target = $region48
    $region47: #{point_ae_forward.6} parent=5 // pred_region
      %s306 = ssub.s32 %s15, 1
      %p307 = scmp.lt.s32.totalorder %s24, 1
      %s308 = scalar_select %p307, %s24, 1
      %p309 = scmp.lt.s32.totalorder %s25, 0
      %s310 = scalar_select %p309, %s25, 0
      %s311 = smul.addr %s308, 4
      %s312 = sadd.s32 %s310, %s311
      %s313 = smul.addr %s312, 4
      %s314 = scalar_lea.vmem %s0, %s313
      %p315 = pneg %p55
      %p316 = pneg %p52
      %p317 = scmp.lt.s32.totalorder %s24, 1
      %s318 = scalar_select %p317, %s24, 1
      %p319 = scmp.lt.s32.totalorder %s25, 0
      %s320 = scalar_select %p319, %s25, 0
      %s321 = smul.addr %s318, 4
      %s322 = sadd.s32 %s320, %s321
      %s323 = smul.addr %s322, 4
      %s324 = scalar_lea.vmem %s1, %s323
      %p325 = pneg %p83
      %p326 = pneg %p80
      %p327 = pneg %p104
      %p328 = pneg %p101
      %p329 = pneg %p125
      %p330 = pneg %p122
      %p331 = pneg %p146
      %p332 = pneg %p143
      %p333 = pneg %p167
      %p334 = pneg %p164
      %p335 = pneg %p188
      %p336 = pneg %p185
      %p337 = pneg %p216
      %p338 = pneg %p213
      %p339 = scmp.lt.s32.totalorder %s24, 1
      %s340 = scalar_select %p339, %s24, 1
      %p341 = scmp.lt.s32.totalorder %s25, 0
      %s342 = scalar_select %p341, %s25, 0
      %s343 = sadd.s32 %s342, %s340
      %s344 = smul.addr %s343, 4
      %s345 = scalar_lea.vmem %s7, %s344
      %p346 = pneg %p244
      %p347 = pneg %p241
      %p348 = scmp.lt.s32.totalorder %s24, 1
      %s349 = scalar_select %p348, %s24, 1
      %p350 = scmp.lt.s32.totalorder %s25, 0
      %s351 = scalar_select %p350, %s25, 0
      %s352 = sadd.s32 %s351, %s349
      %s353 = smul.addr %s352, 4
      %s354 = scalar_lea.vmem %s8, %s353
      %p355 = scmp.lt.s32.totalorder %s24, 1
      %s356 = scalar_select %p355, %s24, 1
      %p357 = scmp.lt.s32.totalorder %s25, 0
      %s358 = scalar_select %p357, %s25, 0
      %s359 = smul.addr %s356, 4
      %s360 = sadd.s32 %s358, %s359
      %s361 = smul.addr %s360, 4
      %s362 = scalar_lea.vmem %s0, %s361
      %p363 = scmp.lt.s32.totalorder %s24, 1
      %s364 = scalar_select %p363, %s24, 1
      %p365 = scmp.lt.s32.totalorder %s25, 0
      %s366 = scalar_select %p365, %s25, 0
      %s367 = smul.addr %s364, 4
      %s368 = sadd.s32 %s366, %s367
      %s369 = smul.addr %s368, 4
      %s370 = scalar_lea.vmem %s1, %s369
      %p371 = scmp.lt.s32.totalorder %s24, 1
      %s372 = scalar_select %p371, %s24, 1
      %p373 = scmp.lt.s32.totalorder %s25, 0
      %s374 = scalar_select %p373, %s25, 0
      %s375 = sadd.s32 %s374, %s372
      %s376 = smul.addr %s375, 4
      %s377 = scalar_lea.vmem %s7, %s376
      %p378 = scmp.lt.s32.totalorder %s24, 1
      %s379 = scalar_select %p378, %s24, 1
      %p380 = scmp.lt.s32.totalorder %s25, 0
      %s381 = scalar_select %p380, %s25, 0
      %s382 = sadd.s32 %s381, %s379
      %s383 = smul.addr %s382, 4
      %s384 = scalar_lea.vmem %s8, %s383
      %v386 = vld [vmem:[%s362] sm:$0xf]
      %s387 = scalar_lea.vmem %s362, 4
      %v388 = vld [vmem:[%s387] sm:$0xf]
      %s389 = scalar_lea.vmem %s362, 8
      %v390 = vld [vmem:[%s389] sm:$0xf]
      %s391 = scalar_lea.vmem %s362, 12
      %v392 = vld [vmem:[%s391] sm:$0xf]
      %v393 = vadd.f32 %v386, %v388
      %v394 = vadd.f32 %v393, %v390
      %v395 = vadd.f32 %v394, %v392
      %v396 = vmul.f32 %v395, 0.25
      %v397 = vsub.f32 %v386, %v396
      %v398 = vld [vmem:[%s370] sm:$0xf]
      %v399 = vld [vmem:[%s2] sm:$0x3]
      %v400 = vpack.c.bf16 %v397, %v397
      %v401 = vld [vmem:[%s3] sm:$0xf]
      %v402 = vld [vmem:[%s3 + $0x4] sm:$0xf]
      %v403 = vld [vmem:[%s3 + $0x8] sm:$0xf]
      %v404 = vld [vmem:[%s3 + $0xc] sm:$0xf]
      %v405 = vpack.c.bf16 %v398, %v398
      %v410 = vunpack.c.l.b16 %v401
      %v411 = vunpack.c.l.b16 %v402
      %v412 = vunpack.c.l.b16 %v403
      %v413 = vunpack.c.l.b16 %v404
      %v414 = vpack.c.b16 %v411, %v410
      %v415 = vpack.c.b16 %v413, %v412
      %vm418 = vcmask 261120
      %v420 = vsel %vm418, %v405, 0
      %422 = vmatpush.bf16.msra.mxu0 0
      %423 = vmatpush.bf16.msra.mxu0 0
      %424 = vmatpush.bf16.msra.mxu0 0
      %425 = vmatpush.bf16.msra.mxu0 0
      %426 = vmatpush.bf16.msra.mxu0 0
      %427 = vmatpush.bf16.msra.mxu0 0
      %428 = vmatpush.bf16.msra.mxu0 %v415
      %429 = vmatpush.bf16.msra.mxu0 %v414
      %430 = vmatmul.bf16.gmra.mxu0 %v420
      %v431 = vpop.f32.mrf.mxu0
      %v432 = vadd.f32 0.0, %v431
      %v433 = vpop.f32.mrf.mxu0
      %434 = vdwg.mxu0
      %vm435 = vcmask 23552
      %v437 = vsel %vm435, %v400, 0
      %vm439 = vcmask 1040384
      %vm440 = vcmask 1041408
      %v441 = vsel %vm439, 4294967295, 65535
      %v442 = vsel %vm440, %v441, 0
      %v444 = vand.u32 %v399, %v442
      %446 = vmatpush.bf16.msra.mxu0 0
      %447 = vmatpush.bf16.msra.mxu0 0
      %448 = vmatpush.bf16.msra.mxu0 0
      %449 = vmatpush.bf16.msra.mxu0 0
      %450 = vmatpush.bf16.msra.mxu0 0
      %451 = vmatpush.bf16.msra.mxu0 0
      %452 = vmatpush.bf16.msra.mxu0 0
      %453 = vmatpush.bf16.msra.mxu0 %v444
      %454 = vmatmul.bf16.gmra.mxu0 %v437
      %v455 = vpop.f32.mrf.mxu0
      %v456 = vadd.f32 %v432, %v455
      %v457 = vpop.f32.mrf.mxu0
      %458 = vdwg.mxu0
      %v459 = vld [vmem:[%s4] sm:$0x1]
      %v461 = vperm.slane %v459, 0
      %v463 = vadd.f32 %v456, %v461
      %v464 = vmax.f32 %v463, 0.0
      %v465 = vld [vmem:[%s5] sm:$0xf]
      %v466 = vld [vmem:[%s5 + $0x4] sm:$0xf]
      %v467 = vld [vmem:[%s5 + $0x8] sm:$0xf]
      %v468 = vld [vmem:[%s5 + $0xc] sm:$0xf]
      %v469 = vld [vmem:[%s5 + $0x10] sm:$0xf]
      %v470 = vld [vmem:[%s5 + $0x14] sm:$0xf]
      %v471 = vld [vmem:[%s5 + $0x18] sm:$0xf]
      %v472 = vld [vmem:[%s5 + $0x1c] sm:$0xf]
      %v473 = vpack.c.bf16 %v464, %v464
      %v474 = vld [vmem:[%s6] sm:$0x1]
      %v476 = vperm.slane %v474, 0
      %v486 = vunpack.c.l.b16 %v465
      %v487 = vunpack.c.l.b16 %v466
      %v488 = vunpack.c.l.b16 %v467
      %v489 = vunpack.c.l.b16 %v468
      %v490 = vunpack.c.l.b16 %v469
      %v491 = vunpack.c.l.b16 %v470
      %v492 = vunpack.c.l.b16 %v471
      %v493 = vunpack.c.l.b16 %v472
      %v494 = vpack.c.b16 %v487, %v486
      %v495 = vpack.c.b16 %v489, %v488
      %v496 = vpack.c.b16 %v491, %v490
      %v497 = vpack.c.b16 %v493, %v492
      %vm502 = vcmask 523264
      %v504 = vsel %vm502, %v473, 0
      %506 = vmatpush.bf16.msra.mxu0 0
      %507 = vmatpush.bf16.msra.mxu0 0
      %508 = vmatpush.bf16.msra.mxu0 0
      %509 = vmatpush.bf16.msra.mxu0 0
      %510 = vmatpush.bf16.msra.mxu0 %v497
      %511 = vmatpush.bf16.msra.mxu0 %v496
      %512 = vmatpush.bf16.msra.mxu0 %v495
      %513 = vmatpush.bf16.msra.mxu0 %v494
      %514 = vmatmul.bf16.gmra.mxu0 %v504
      %v515 = vpop.f32.mrf.mxu0
      %v516 = vadd.f32 %v476, %v515
      %v517 = vpop.f32.mrf.mxu0
      %518 = vdwg.mxu0
      %v519 = vmax.f32 %v516, 0.0
      %v520 = vsub.f32 %v388, %v396
      %s521 = scalar_lea.vmem %s370, 4
      %v522 = vld [vmem:[%s521] sm:$0xf]
      %v523 = vpack.c.bf16 %v520, %v520
      %v524 = vpack.c.bf16 %v522, %v522
      %v526 = vsel %vm418, %v524, 0
      %528 = vmatpush.bf16.msra.mxu0 0
      %529 = vmatpush.bf16.msra.mxu0 0
      %530 = vmatpush.bf16.msra.mxu0 0
      %531 = vmatpush.bf16.msra.mxu0 0
      %532 = vmatpush.bf16.msra.mxu0 0
      %533 = vmatpush.bf16.msra.mxu0 0
      %534 = vmatpush.bf16.msra.mxu0 %v415
      %535 = vmatpush.bf16.msra.mxu0 %v414
      %536 = vmatmul.bf16.gmra.mxu0 %v526
      %v537 = vpop.f32.mrf.mxu0
      %v538 = vadd.f32 0.0, %v537
      %v539 = vpop.f32.mrf.mxu0
      %540 = vdwg.mxu0
      %v542 = vsel %vm435, %v523, 0
      %544 = vmatpush.bf16.msra.mxu0 0
      %545 = vmatpush.bf16.msra.mxu0 0
      %546 = vmatpush.bf16.msra.mxu0 0
      %547 = vmatpush.bf16.msra.mxu0 0
      %548 = vmatpush.bf16.msra.mxu0 0
      %549 = vmatpush.bf16.msra.mxu0 0
      %550 = vmatpush.bf16.msra.mxu0 0
      %551 = vmatpush.bf16.msra.mxu0 %v444
      %552 = vmatmul.bf16.gmra.mxu0 %v542
      %v553 = vpop.f32.mrf.mxu0
      %v554 = vadd.f32 %v538, %v553
      %v555 = vpop.f32.mrf.mxu0
      %556 = vdwg.mxu0
      %v557 = vadd.f32 %v554, %v461
      %v558 = vmax.f32 %v557, 0.0
      %v559 = vpack.c.bf16 %v558, %v558
      %v561 = vsel %vm502, %v559, 0
      %563 = vmatpush.bf16.msra.mxu0 0
      %564 = vmatpush.bf16.msra.mxu0 0
      %565 = vmatpush.bf16.msra.mxu0 0
      %566 = vmatpush.bf16.msra.mxu0 0
      %567 = vmatpush.bf16.msra.mxu0 %v497
      %568 = vmatpush.bf16.msra.mxu0 %v496
      %569 = vmatpush.bf16.msra.mxu0 %v495
      %570 = vmatpush.bf16.msra.mxu0 %v494
      %571 = vmatmul.bf16.gmra.mxu0 %v561
      %v572 = vpop.f32.mrf.mxu0
      %v573 = vadd.f32 %v476, %v572
      %v574 = vpop.f32.mrf.mxu0
      %575 = vdwg.mxu0
      %v576 = vmax.f32 %v573, 0.0
      %v577 = vmax.f32 %v519, %v576
      %v578 = vsub.f32 %v390, %v396
      %s579 = scalar_lea.vmem %s370, 8
      %v580 = vld [vmem:[%s579] sm:$0xf]
      %v581 = vpack.c.bf16 %v578, %v578
      %v582 = vpack.c.bf16 %v580, %v580
      %v584 = vsel %vm418, %v582, 0
      %586 = vmatpush.bf16.msra.mxu0 0
      %587 = vmatpush.bf16.msra.mxu0 0
      %588 = vmatpush.bf16.msra.mxu0 0
      %589 = vmatpush.bf16.msra.mxu0 0
      %590 = vmatpush.bf16.msra.mxu0 0
      %591 = vmatpush.bf16.msra.mxu0 0
      %592 = vmatpush.bf16.msra.mxu0 %v415
      %593 = vmatpush.bf16.msra.mxu0 %v414
      %594 = vmatmul.bf16.gmra.mxu0 %v584
      %v595 = vpop.f32.mrf.mxu0
      %v596 = vadd.f32 0.0, %v595
      %v597 = vpop.f32.mrf.mxu0
      %598 = vdwg.mxu0
      %v600 = vsel %vm435, %v581, 0
      %602 = vmatpush.bf16.msra.mxu0 0
      %603 = vmatpush.bf16.msra.mxu0 0
      %604 = vmatpush.bf16.msra.mxu0 0
      %605 = vmatpush.bf16.msra.mxu0 0
      %606 = vmatpush.bf16.msra.mxu0 0
      %607 = vmatpush.bf16.msra.mxu0 0
      %608 = vmatpush.bf16.msra.mxu0 0
      %609 = vmatpush.bf16.msra.mxu0 %v444
      %610 = vmatmul.bf16.gmra.mxu0 %v600
      %v611 = vpop.f32.mrf.mxu0
      %v612 = vadd.f32 %v596, %v611
      %v613 = vpop.f32.mrf.mxu0
      %614 = vdwg.mxu0
      %v615 = vadd.f32 %v612, %v461
      %v616 = vmax.f32 %v615, 0.0
      %v617 = vpack.c.bf16 %v616, %v616
      %v619 = vsel %vm502, %v617, 0
      %621 = vmatpush.bf16.msra.mxu0 0
      %622 = vmatpush.bf16.msra.mxu0 0
      %623 = vmatpush.bf16.msra.mxu0 0
      %624 = vmatpush.bf16.msra.mxu0 0
      %625 = vmatpush.bf16.msra.mxu0 %v497
      %626 = vmatpush.bf16.msra.mxu0 %v496
      %627 = vmatpush.bf16.msra.mxu0 %v495
      %628 = vmatpush.bf16.msra.mxu0 %v494
      %629 = vmatmul.bf16.gmra.mxu0 %v619
      %v630 = vpop.f32.mrf.mxu0
      %v631 = vadd.f32 %v476, %v630
      %v632 = vpop.f32.mrf.mxu0
      %633 = vdwg.mxu0
      %v634 = vmax.f32 %v631, 0.0
      %v635 = vmax.f32 %v577, %v634
      %v636 = vsub.f32 %v392, %v396
      %s637 = scalar_lea.vmem %s370, 12
      %v638 = vld [vmem:[%s637] sm:$0xf]
      %v639 = vpack.c.bf16 %v636, %v636
      %v640 = vpack.c.bf16 %v638, %v638
      %v642 = vsel %vm418, %v640, 0
      %644 = vmatpush.bf16.msra.mxu0 0
      %645 = vmatpush.bf16.msra.mxu0 0
      %646 = vmatpush.bf16.msra.mxu0 0
      %647 = vmatpush.bf16.msra.mxu0 0
      %648 = vmatpush.bf16.msra.mxu0 0
      %649 = vmatpush.bf16.msra.mxu0 0
      %650 = vmatpush.bf16.msra.mxu0 %v415
      %651 = vmatpush.bf16.msra.mxu0 %v414
      %652 = vmatmul.bf16.gmra.mxu0 %v642
      %v653 = vpop.f32.mrf.mxu0
      %v654 = vadd.f32 0.0, %v653
      %v655 = vpop.f32.mrf.mxu0
      %656 = vdwg.mxu0
      %v658 = vsel %vm435, %v639, 0
      %660 = vmatpush.bf16.msra.mxu0 0
      %661 = vmatpush.bf16.msra.mxu0 0
      %662 = vmatpush.bf16.msra.mxu0 0
      %663 = vmatpush.bf16.msra.mxu0 0
      %664 = vmatpush.bf16.msra.mxu0 0
      %665 = vmatpush.bf16.msra.mxu0 0
      %666 = vmatpush.bf16.msra.mxu0 0
      %667 = vmatpush.bf16.msra.mxu0 %v444
      %668 = vmatmul.bf16.gmra.mxu0 %v658
      %v669 = vpop.f32.mrf.mxu0
      %v670 = vadd.f32 %v654, %v669
      %v671 = vpop.f32.mrf.mxu0
      %672 = vdwg.mxu0
      %v673 = vadd.f32 %v670, %v461
      %v674 = vmax.f32 %v673, 0.0
      %v675 = vpack.c.bf16 %v674, %v674
      %v677 = vsel %vm502, %v675, 0
      %679 = vmatpush.bf16.msra.mxu0 0
      %680 = vmatpush.bf16.msra.mxu0 0
      %681 = vmatpush.bf16.msra.mxu0 0
      %682 = vmatpush.bf16.msra.mxu0 0
      %683 = vmatpush.bf16.msra.mxu0 %v497
      %684 = vmatpush.bf16.msra.mxu0 %v496
      %685 = vmatpush.bf16.msra.mxu0 %v495
      %686 = vmatpush.bf16.msra.mxu0 %v494
      %687 = vmatmul.bf16.gmra.mxu0 %v677
      %v688 = vpop.f32.mrf.mxu0
      %v689 = vadd.f32 %v476, %v688
      %v690 = vpop.f32.mrf.mxu0
      %691 = vdwg.mxu0
      %v692 = vmax.f32 %v689, 0.0
      %v693 = vmax.f32 %v635, %v692
      %vm694 = vcmask 19456
      %695 = vst.msk [vmem:[%s377] sm:$0xf] %vm694, %v396
      %vm696 = vcmask 519168
      %697 = vst.msk [vmem:[%s384] sm:$0xf] %vm696, %v693
      %p698 = scmp.lt.s32.totalorder %s24, 1
      %s699 = scalar_select %p698, %s24, 1
      %p700 = scmp.lt.s32.totalorder %s25, 0
      %s701 = scalar_select %p700, %s25, 0
      %s702 = sadd.s32 %s701, %s699
      %s703 = smul.addr %s702, 4
      %s704 = scalar_lea.vmem %s7, %s703
      %p705 = scmp.lt.s32.totalorder %s24, 1
      %s706 = scalar_select %p705, %s24, 1
      %p707 = scmp.lt.s32.totalorder %s25, 0
      %s708 = scalar_select %p707, %s25, 0
      %s709 = sadd.s32 %s708, %s706
      %s710 = smul.addr %s709, 4
      %s711 = scalar_lea.vmem %s8, %s710
      // Predicated region
      $region49: #{point_ae_forward.6} parent=47 // pred_check
        %p712 = pneg %p213
      $region50: #{point_ae_forward.6} parent=47 // pred_check_branch
        %714 = sbr.rel (%p712) target = $region52
      $region51: #{point_ae_forward.6} parent=47 // pred_region
        _
      $region52: #{point_ae_forward.6} parent=47 // pred_fallthru
        _
      // Predicated region
      $region53: #{point_ae_forward.6} parent=47 // pred_check
        %p715 = pneg %p241
      $region54: #{point_ae_forward.6} parent=47 // pred_check_branch
        %717 = sbr.rel (%p715) target = $region56
      $region55: #{point_ae_forward.6} parent=47 // pred_region
        _
      $region56: #{point_ae_forward.6} parent=47 // pred_fallthru
        _
    $region48: #{point_ae_forward.6} parent=5 // pred_fallthru
      _
    %p718 = scmp.le.s32.totalorder 2, %s15
    // Predicated region
    $region57: #{point_ae_forward.6} parent=5 // pred_check
      %p719 = pneg %p718
    $region58: #{point_ae_forward.6} parent=5 // pred_check_branch
      %721 = sbr.rel (%p719) target = $region60
    $region59: #{point_ae_forward.6} parent=5 // pred_region
      %s722 = ssub.s32 %s15, 2
      // Predicated region
      $region61: #{point_ae_forward.6} parent=59 // pred_check
        %p723 = pneg %p219
      $region62: #{point_ae_forward.6} parent=59 // pred_check_branch
        %725 = sbr.rel (%p723) target = $region64
      $region63: #{point_ae_forward.6} parent=59 // pred_region
        %p726 = scmp.lt.s32.totalorder %s26, 1
        %s727 = scalar_select %p726, %s26, 1
        %p728 = scmp.lt.s32.totalorder %s27, 0
        %s729 = scalar_select %p728, %s27, 0
        %s730 = sadd.s32 %s729, %s727
        %s731 = smul.addr %s730, 4
        %s732 = scalar_lea.vmem %s7, %s731
      $region64: #{point_ae_forward.6} parent=59 // pred_fallthru
        _
      // Predicated region
      $region65: #{point_ae_forward.6} parent=59 // pred_check
        %p733 = pneg %p247
      $region66: #{point_ae_forward.6} parent=59 // pred_check_branch
        %735 = sbr.rel (%p733) target = $region68
      $region67: #{point_ae_forward.6} parent=59 // pred_region
        %p736 = scmp.lt.s32.totalorder %s26, 1
        %s737 = scalar_select %p736, %s26, 1
        %p738 = scmp.lt.s32.totalorder %s27, 0
        %s739 = scalar_select %p738, %s27, 0
        %s740 = sadd.s32 %s739, %s737
        %s741 = smul.addr %s740, 4
        %s742 = scalar_lea.vmem %s8, %s741
      $region68: #{point_ae_forward.6} parent=59 // pred_fallthru
        _
    $region60: #{point_ae_forward.6} parent=5 // pred_fallthru
      _
  $region6: #{point_ae_forward.6} parent=0 // loop_footer
    %s19 = sadd.s32 1, %s15
  $region7: #{point_ae_forward.6} parent=0 // loop_footer_branch
    %14 = sbr.rel target = $region3
  $region8: #{point_ae_forward.6} parent=0 // loop_exit
    _

// kernel: point_ae_forward.8
$region0: #{point_ae_forward.8}
  #allocation0 [shape = 'u32[]', space=smem, size = 0x4, offset = 0x4, fixed_abs, tag = 'smem constant byte address 0x4 - core index']
  #allocation1 [shape = 'u32[72,128]{1,0:T(1,128)}', space=vmem, size = 0x9000, scoped, tag = 'internal scratch']
  %s0 = inlined_call_operand.vmem [shape: f32[2,4,64], index: 0, kind: input, shape index: {}]
  %s1 = inlined_call_operand.vmem [shape: f32[2,4,4,32], index: 1, kind: input, shape index: {}]
  %s2 = inlined_call_operand.vmem [shape: bf16[64,32], index: 2, kind: input, shape index: {}]
  %s3 = inlined_call_operand.vmem [shape: bf16[32,32], index: 3, kind: input, shape index: {}]
  %s4 = inlined_call_operand.vmem [shape: f32[1,32], index: 4, kind: input, shape index: {}]
  %s5 = inlined_call_operand.vmem [shape: f32[2,4,4,32], index: 5, kind: output, shape index: {}]
  %s6 = sld [smem:[#allocation0]]
  $region53: #{point_ae_forward.8} parent=0
    _
  %s8 = ssub.s32 1, %s6
  %s9 = scalar_select 0, %s8, %s6
  loop: start=0, step=1, limit=4
  $region2: #{point_ae_forward.8} parent=0 // loop_pre_header
    _
  $region3: #{point_ae_forward.8} parent=0 // loop_header
    %s11 = sphi 0, %s15
    %p12 = scmp.ge.s32.totalorder %s11, 4
    %s18 = sphi 0, %s30
    %s19 = sphi 0, %s26
    %s20 = sphi 0, %s18
    %s21 = sphi 0, %s19
    %s22 = sphi 0, %s20
    %s23 = sphi 0, %s21
    %s35 = sphi 0, %s37
    %s38 = sphi 0, %s35
    %s39 = sphi 0, %s38
    %s55 = sphi 0, %s39
    %s63 = sphi 0, %s65
    %s66 = sphi 0, %s63
    %s67 = sphi 0, %s66
    %s83 = sphi 0, %s67
    %s87 = sphi 0, %s87
    %s89 = sphi 0, %s87
    %s90 = sphi 0, %s89
    %s104 = sphi 0, %s90
    %s108 = sphi 0, %s108
    %s110 = sphi 0, %s108
    %s111 = sphi 0, %s110
    %s125 = sphi 0, %s111
    %s129 = sphi 0, %s129
    %s131 = sphi 0, %s129
    %s132 = sphi 0, %s131
    %s146 = sphi 0, %s132
    %s154 = sphi 0, %s156
    %s157 = sphi 0, %s154
    %s158 = sphi 0, %s157
    %s174 = sphi 0, %s158
  $region4: #{point_ae_forward.8} parent=0 // loop_header_branch
    %14 = sbr.rel (%p12) target = $region8
  $region5: #{point_ae_forward.8} parent=0 // loop_body
    %s16 = ssub.s32 %s11, 1
    %s17 = ssub.s32 %s11, 2
    %s24 = sadd.s32 1, %s19
    %p25 = scmp.ge.s32.totalorder %s24, 1
    %s26 = scalar_select %p25, 0, %s24
    %s27 = sadd.s32 1, %s18
    %s28 = scalar_select %p25, %s27, %s18
    %p29 = scmp.ge.s32.totalorder %s28, 2
    %s30 = scalar_select %p29, 0, %s28
    %s31 = ssub.s32 %s18, %s30
    %s32 = ssub.s32 %s19, %s26
    %s33 = sor.u32 %s31, %s32
    %p34 = scmp.eq.s32.totalorder %s33, 0
    %s36 = sadd.s32 %s35, 1
    %s37 = scalar_select %p34, %s35, %s36
    %p40 = pneg %p34
    %p41 = scmp.eq.s32.totalorder %s11, 1
    %p42 = por %p40, %p41
    %p43 = scmp.ne.s32.totalorder %s35, %s38
    %p44 = scmp.eq.s32.totalorder %s11, 0
    %p45 = por %p43, %p44
    %p46 = scmp.ne.s32.totalorder %s35, %s38
    %p47 = scmp.eq.s32.totalorder %s16, 1
    %p48 = por %p46, %p47
    %p49 = scmp.ne.s32.totalorder %s38, %s39
    %p50 = scmp.eq.s32.totalorder %s16, 0
    %p51 = por %p49, %p50
    %p52 = scmp.ne.s32.totalorder %s38, %s39
    %p53 = scmp.eq.s32.totalorder %s17, 1
    %p54 = por %p52, %p53
    %p56 = scmp.ne.s32.totalorder %s39, %s55
    %p57 = scmp.eq.s32.totalorder %s17, 0
    %p58 = por %p56, %p57
    %s59 = ssub.s32 %s18, %s30
    %s60 = ssub.s32 %s19, %s26
    %s61 = sor.u32 %s59, %s60
    %p62 = scmp.eq.s32.totalorder %s61, 0
    %s64 = sadd.s32 %s63, 1
    %s65 = scalar_select %p62, %s63, %s64
    %p68 = pneg %p62
    %p69 = scmp.eq.s32.totalorder %s11, 1
    %p70 = por %p68, %p69
    %p71 = scmp.ne.s32.totalorder %s63, %s66
    %p72 = scmp.eq.s32.totalorder %s11, 0
    %p73 = por %p71, %p72
    %p74 = scmp.ne.s32.totalorder %s63, %s66
    %p75 = scmp.eq.s32.totalorder %s16, 1
    %p76 = por %p74, %p75
    %p77 = scmp.ne.s32.totalorder %s66, %s67
    %p78 = scmp.eq.s32.totalorder %s16, 0
    %p79 = por %p77, %p78
    %p80 = scmp.ne.s32.totalorder %s66, %s67
    %p81 = scmp.eq.s32.totalorder %s17, 1
    %p82 = por %p80, %p81
    %p84 = scmp.ne.s32.totalorder %s67, %s83
    %p85 = scmp.eq.s32.totalorder %s17, 0
    %p86 = por %p84, %p85
    %s88 = sadd.s32 %s87, 1
    %p91 = scmp.eq.s32.totalorder %s11, 1
    %p92 = scmp.ne.s32.totalorder %s87, %s89
    %p93 = scmp.eq.s32.totalorder %s11, 0
    %p94 = por %p92, %p93
    %p95 = scmp.ne.s32.totalorder %s87, %s89
    %p96 = scmp.eq.s32.totalorder %s16, 1
    %p97 = por %p95, %p96
    %p98 = scmp.ne.s32.totalorder %s89, %s90
    %p99 = scmp.eq.s32.totalorder %s16, 0
    %p100 = por %p98, %p99
    %p101 = scmp.ne.s32.totalorder %s89, %s90
    %p102 = scmp.eq.s32.totalorder %s17, 1
    %p103 = por %p101, %p102
    %p105 = scmp.ne.s32.totalorder %s90, %s104
    %p106 = scmp.eq.s32.totalorder %s17, 0
    %p107 = por %p105, %p106
    %s109 = sadd.s32 %s108, 1
    %p112 = scmp.eq.s32.totalorder %s11, 1
    %p113 = scmp.ne.s32.totalorder %s108, %s110
    %p114 = scmp.eq.s32.totalorder %s11, 0
    %p115 = por %p113, %p114
    %p116 = scmp.ne.s32.totalorder %s108, %s110
    %p117 = scmp.eq.s32.totalorder %s16, 1
    %p118 = por %p116, %p117
    %p119 = scmp.ne.s32.totalorder %s110, %s111
    %p120 = scmp.eq.s32.totalorder %s16, 0
    %p121 = por %p119, %p120
    %p122 = scmp.ne.s32.totalorder %s110, %s111
    %p123 = scmp.eq.s32.totalorder %s17, 1
    %p124 = por %p122, %p123
    %p126 = scmp.ne.s32.totalorder %s111, %s125
    %p127 = scmp.eq.s32.totalorder %s17, 0
    %p128 = por %p126, %p127
    %s130 = sadd.s32 %s129, 1
    %p133 = scmp.eq.s32.totalorder %s11, 1
    %p134 = scmp.ne.s32.totalorder %s129, %s131
    %p135 = scmp.eq.s32.totalorder %s11, 0
    %p136 = por %p134, %p135
    %p137 = scmp.ne.s32.totalorder %s129, %s131
    %p138 = scmp.eq.s32.totalorder %s16, 1
    %p139 = por %p137, %p138
    %p140 = scmp.ne.s32.totalorder %s131, %s132
    %p141 = scmp.eq.s32.totalorder %s16, 0
    %p142 = por %p140, %p141
    %p143 = scmp.ne.s32.totalorder %s131, %s132
    %p144 = scmp.eq.s32.totalorder %s17, 1
    %p145 = por %p143, %p144
    %p147 = scmp.ne.s32.totalorder %s132, %s146
    %p148 = scmp.eq.s32.totalorder %s17, 0
    %p149 = por %p147, %p148
    %s150 = ssub.s32 %s18, %s30
    %s151 = ssub.s32 %s19, %s26
    %s152 = sor.u32 %s150, %s151
    %p153 = scmp.eq.s32.totalorder %s152, 0
    %s155 = sadd.s32 %s154, 1
    %s156 = scalar_select %p153, %s154, %s155
    %p159 = pneg %p153
    %p160 = scmp.eq.s32.totalorder %s11, 1
    %p161 = por %p159, %p160
    %p162 = scmp.ne.s32.totalorder %s154, %s157
    %p163 = scmp.eq.s32.totalorder %s11, 0
    %p164 = por %p162, %p163
    %p165 = scmp.ne.s32.totalorder %s154, %s157
    %p166 = scmp.eq.s32.totalorder %s16, 1
    %p167 = por %p165, %p166
    %p168 = scmp.ne.s32.totalorder %s157, %s158
    %p169 = scmp.eq.s32.totalorder %s16, 0
    %p170 = por %p168, %p169
    %p171 = scmp.ne.s32.totalorder %s157, %s158
    %p172 = scmp.eq.s32.totalorder %s17, 1
    %p173 = por %p171, %p172
    %p175 = scmp.ne.s32.totalorder %s158, %s174
    %p176 = scmp.eq.s32.totalorder %s17, 0
    %p177 = por %p175, %p176
    %p178 = scmp.le.s32.totalorder 1, %s11
    %p179 = scmp.lt.s32.totalorder %s11, 3
    %p180 = pnand %p178, %p179
    %p181 = pneg %p180
    // Predicated region
    $region9: #{point_ae_forward.8} parent=5 // pred_check
      _
    $region10: #{point_ae_forward.8} parent=5 // pred_check_branch
      %183 = sbr.rel (%p180) target = $region12
    $region11: #{point_ae_forward.8} parent=5 // pred_region
      %s184 = ssub.s32 %s11, 1
      // Predicated region
      $region13: #{point_ae_forward.8} parent=11 // pred_check
        %p185 = pneg %p100
      $region14: #{point_ae_forward.8} parent=11 // pred_check_branch
        %187 = sbr.rel (%p185) target = $region16
      $region15: #{point_ae_forward.8} parent=11 // pred_region
        _
      $region16: #{point_ae_forward.8} parent=11 // pred_fallthru
        _
      // Predicated region
      $region17: #{point_ae_forward.8} parent=11 // pred_check
        %p188 = pneg %p121
      $region18: #{point_ae_forward.8} parent=11 // pred_check_branch
        %190 = sbr.rel (%p188) target = $region20
      $region19: #{point_ae_forward.8} parent=11 // pred_region
        _
      $region20: #{point_ae_forward.8} parent=11 // pred_fallthru
        _
      // Predicated region
      $region21: #{point_ae_forward.8} parent=11 // pred_check
        %p191 = pneg %p142
      $region22: #{point_ae_forward.8} parent=11 // pred_check_branch
        %193 = sbr.rel (%p191) target = $region24
      $region23: #{point_ae_forward.8} parent=11 // pred_region
        _
      $region24: #{point_ae_forward.8} parent=11 // pred_fallthru
        _
    $region12: #{point_ae_forward.8} parent=5 // pred_fallthru
      _
    %p194 = scmp.lt.s32.totalorder %s11, 2
    // Predicated region
    $region25: #{point_ae_forward.8} parent=5 // pred_check
      %p195 = pneg %p194
    $region26: #{point_ae_forward.8} parent=5 // pred_check_branch
      %197 = sbr.rel (%p195) target = $region28
    $region27: #{point_ae_forward.8} parent=5 // pred_region
      // Predicated region
      $region29: #{point_ae_forward.8} parent=27 // pred_check
        %p198 = pneg %p45
      $region30: #{point_ae_forward.8} parent=27 // pred_check_branch
        %200 = sbr.rel (%p198) target = $region32
      $region31: #{point_ae_forward.8} parent=27 // pred_region
        %p201 = scmp.lt.s32.totalorder %s18, 1
        %s202 = scalar_select %p201, %s18, 1
        %p203 = scmp.lt.s32.totalorder %s19, 0
        %s204 = scalar_select %p203, %s19, 0
        %s205 = sadd.s32 %s204, %s202
        %s206 = smul.addr %s205, 4
        %s207 = scalar_lea.vmem %s0, %s206
      $region32: #{point_ae_forward.8} parent=27 // pred_fallthru
        _
      // Predicated region
      $region33: #{point_ae_forward.8} parent=27 // pred_check
        %p208 = pneg %p73
      $region34: #{point_ae_forward.8} parent=27 // pred_check_branch
        %210 = sbr.rel (%p208) target = $region36
      $region35: #{point_ae_forward.8} parent=27 // pred_region
        %p211 = scmp.lt.s32.totalorder %s18, 1
        %s212 = scalar_select %p211, %s18, 1
        %p213 = scmp.lt.s32.totalorder %s19, 0
        %s214 = scalar_select %p213, %s19, 0
        %s215 = smul.addr %s212, 4
        %s216 = sadd.s32 %s214, %s215
        %s217 = smul.addr %s216, 4
        %s218 = scalar_lea.vmem %s1, %s217
      $region36: #{point_ae_forward.8} parent=27 // pred_fallthru
        _
    $region28: #{point_ae_forward.8} parent=5 // pred_fallthru
      _
    %p219 = scmp.le.s32.totalorder 1, %s11
    %p220 = scmp.lt.s32.totalorder %s11, 3
    %p221 = pnand %p219, %p220
    %p222 = pneg %p221
    // Predicated region
    $region37: #{point_ae_forward.8} parent=5 // pred_check
      _
    $region38: #{point_ae_forward.8} parent=5 // pred_check_branch
      %224 = sbr.rel (%p221) target = $region40
    $region39: #{point_ae_forward.8} parent=5 // pred_region
      %s225 = ssub.s32 %s11, 1
      %p226 = scmp.lt.s32.totalorder %s20, 1
      %s227 = scalar_select %p226, %s20, 1
      %p228 = scmp.lt.s32.totalorder %s21, 0
      %s229 = scalar_select %p228, %s21, 0
      %s230 = sadd.s32 %s229, %s227
      %s231 = smul.addr %s230, 4
      %s232 = scalar_lea.vmem %s0, %s231
      %p233 = pneg %p51
      %p234 = pneg %p48
      %p235 = scmp.lt.s32.totalorder %s20, 1
      %s236 = scalar_select %p235, %s20, 1
      %p237 = scmp.lt.s32.totalorder %s21, 0
      %s238 = scalar_select %p237, %s21, 0
      %s239 = smul.addr %s236, 4
      %s240 = sadd.s32 %s238, %s239
      %s241 = smul.addr %s240, 4
      %s242 = scalar_lea.vmem %s1, %s241
      %p243 = pneg %p79
      %p244 = pneg %p76
      %p245 = pneg %p100
      %p246 = pneg %p97
      %p247 = pneg %p121
      %p248 = pneg %p118
      %p249 = pneg %p142
      %p250 = pneg %p139
      %p251 = pneg %p170
      %p252 = pneg %p167
      %p253 = scmp.lt.s32.totalorder %s20, 1
      %s254 = scalar_select %p253, %s20, 1
      %p255 = scmp.lt.s32.totalorder %s21, 0
      %s256 = scalar_select %p255, %s21, 0
      %s257 = smul.addr %s254, 4
      %s258 = sadd.s32 %s256, %s257
      %s259 = smul.addr %s258, 4
      %s260 = scalar_lea.vmem %s5, %s259
      %p261 = scmp.lt.s32.totalorder %s20, 1
      %s262 = scalar_select %p261, %s20, 1
      %p263 = scmp.lt.s32.totalorder %s21, 0
      %s264 = scalar_select %p263, %s21, 0
      %s265 = sadd.s32 %s264, %s262
      %s266 = smul.addr %s265, 4
      %s267 = scalar_lea.vmem %s0, %s266
      %p268 = scmp.lt.s32.totalorder %s20, 1
      %s269 = scalar_select %p268, %s20, 1
      %p270 = scmp.lt.s32.totalorder %s21, 0
      %s271 = scalar_select %p270, %s21, 0
      %s272 = smul.addr %s269, 4
      %s273 = sadd.s32 %s271, %s272
      %s274 = smul.addr %s273, 4
      %s275 = scalar_lea.vmem %s1, %s274
      %p276 = scmp.lt.s32.totalorder %s20, 1
      %s277 = scalar_select %p276, %s20, 1
      %p278 = scmp.lt.s32.totalorder %s21, 0
      %s279 = scalar_select %p278, %s21, 0
      %s280 = smul.addr %s277, 4
      %s281 = sadd.s32 %s279, %s280
      %s282 = smul.addr %s281, 4
      %s283 = scalar_lea.vmem %s5, %s282
      %v285 = vld [vmem:[%s267] sm:$0xf]
      %v286 = vld [vmem:[%s2] sm:$0xf]
      %v287 = vld [vmem:[%s2 + $0x4] sm:$0xf]
      %v288 = vld [vmem:[%s2 + $0x8] sm:$0xf]
      %v289 = vld [vmem:[%s2 + $0xc] sm:$0xf]
      %v290 = vld [vmem:[%s2 + $0x10] sm:$0xf]
      %v291 = vld [vmem:[%s2 + $0x14] sm:$0xf]
      %v292 = vld [vmem:[%s2 + $0x18] sm:$0xf]
      %v293 = vld [vmem:[%s2 + $0x1c] sm:$0xf]
      %v294 = vpack.c.bf16 %v285, %v285
      %v303 = vunpack.c.l.b16 %v286
      %v304 = vunpack.c.l.b16 %v287
      %v305 = vunpack.c.l.b16 %v288
      %v306 = vunpack.c.l.b16 %v289
      %v307 = vunpack.c.l.b16 %v290
      %v308 = vunpack.c.l.b16 %v291
      %v309 = vunpack.c.l.b16 %v292
      %v310 = vunpack.c.l.b16 %v293
      %v311 = vpack.c.b16 %v304, %v303
      %v312 = vpack.c.b16 %v306, %v305
      %v313 = vpack.c.b16 %v308, %v307
      %v314 = vpack.c.b16 %v310, %v309
      %vm319 = vcmask 523264
      %v321 = vsel %vm319, %v294, 0
      %323 = vmatpush.bf16.msra.mxu0 0
      %324 = vmatpush.bf16.msra.mxu0 0
      %325 = vmatpush.bf16.msra.mxu0 0
      %326 = vmatpush.bf16.msra.mxu0 0
      %327 = vmatpush.bf16.msra.mxu0 %v314
      %328 = vmatpush.bf16.msra.mxu0 %v313
      %329 = vmatpush.bf16.msra.mxu0 %v312
      %330 = vmatpush.bf16.msra.mxu0 %v311
      %331 = vmatmul.bf16.gmra.mxu0 %v321
      %v332 = vpop.f32.mrf.mxu0
      %v333 = vadd.f32 0.0, %v332
      %v334 = vpop.f32.mrf.mxu0
      %335 = vdwg.mxu0
      %v336 = vld [vmem:[%s275] sm:$0xf]
      %v337 = vld [vmem:[%s3] sm:$0xf]
      %v338 = vld [vmem:[%s3 + $0x4] sm:$0xf]
      %v339 = vld [vmem:[%s3 + $0x8] sm:$0xf]
      %v340 = vld [vmem:[%s3 + $0xc] sm:$0xf]
      %v341 = vpack.c.bf16 %v336, %v336
      %v342 = vld [vmem:[%s4] sm:$0x1]
      %v344 = vperm.slane %v342, 0
      %v350 = vunpack.c.l.b16 %v337
      %v351 = vunpack.c.l.b16 %v338
      %v352 = vunpack.c.l.b16 %v339
      %v353 = vunpack.c.l.b16 %v340
      %v354 = vpack.c.b16 %v351, %v350
      %v355 = vpack.c.b16 %v353, %v352
      %vm358 = vcmask 261120
      %v360 = vsel %vm358, %v341, 0
      %362 = vmatpush.bf16.msra.mxu0 0
      %363 = vmatpush.bf16.msra.mxu0 0
      %364 = vmatpush.bf16.msra.mxu0 0
      %365 = vmatpush.bf16.msra.mxu0 0
      %366 = vmatpush.bf16.msra.mxu0 0
      %367 = vmatpush.bf16.msra.mxu0 0
      %368 = vmatpush.bf16.msra.mxu0 %v355
      %369 = vmatpush.bf16.msra.mxu0 %v354
      %370 = vmatmul.bf16.gmra.mxu0 %v360
      %v371 = vpop.f32.mrf.mxu0
      %v372 = vadd.f32 %v344, %v371
      %v373 = vpop.f32.mrf.mxu0
      %374 = vdwg.mxu0
      %v375 = vadd.f32 %v372, %v333
      %v376 = vmax.f32 %v375, 0.0
      %vm377 = vcmask 257024
      %378 = vst.msk [vmem:[%s283] sm:$0xf] %vm377, %v376
      %s379 = scalar_lea.vmem %s275, 4
      %v380 = vld [vmem:[%s379] sm:$0xf]
      %v381 = vld [vmem:[%s3] sm:$0xf]
      %v382 = vld [vmem:[%s3 + $0x4] sm:$0xf]
      %v383 = vld [vmem:[%s3 + $0x8] sm:$0xf]
      %v384 = vld [vmem:[%s3 + $0xc] sm:$0xf]
      %v385 = vpack.c.bf16 %v380, %v380
      %v386 = vld [vmem:[%s4] sm:$0x1]
      %v388 = vperm.slane %v386, 0
      %v394 = vunpack.c.l.b16 %v381
      %v395 = vunpack.c.l.b16 %v382
      %v396 = vunpack.c.l.b16 %v383
      %v397 = vunpack.c.l.b16 %v384
      %v398 = vpack.c.b16 %v395, %v394
      %v399 = vpack.c.b16 %v397, %v396
      %v403 = vsel %vm358, %v385, 0
      %405 = vmatpush.bf16.msra.mxu0 0
      %406 = vmatpush.bf16.msra.mxu0 0
      %407 = vmatpush.bf16.msra.mxu0 0
      %408 = vmatpush.bf16.msra.mxu0 0
      %409 = vmatpush.bf16.msra.mxu0 0
      %410 = vmatpush.bf16.msra.mxu0 0
      %411 = vmatpush.bf16.msra.mxu0 %v399
      %412 = vmatpush.bf16.msra.mxu0 %v398
      %413 = vmatmul.bf16.gmra.mxu0 %v403
      %v414 = vpop.f32.mrf.mxu0
      %v415 = vadd.f32 %v388, %v414
      %v416 = vpop.f32.mrf.mxu0
      %417 = vdwg.mxu0
      %v418 = vadd.f32 %v415, %v333
      %v419 = vmax.f32 %v418, 0.0
      %s420 = scalar_lea.vmem %s283, 4
      %421 = vst.msk [vmem:[%s420] sm:$0xf] %vm377, %v419
      %s422 = scalar_lea.vmem %s275, 8
      %v423 = vld [vmem:[%s422] sm:$0xf]
      %v424 = vld [vmem:[%s3] sm:$0xf]
      %v425 = vld [vmem:[%s3 + $0x4] sm:$0xf]
      %v426 = vld [vmem:[%s3 + $0x8] sm:$0xf]
      %v427 = vld [vmem:[%s3 + $0xc] sm:$0xf]
      %v428 = vpack.c.bf16 %v423, %v423
      %v429 = vld [vmem:[%s4] sm:$0x1]
      %v431 = vperm.slane %v429, 0
      %v437 = vunpack.c.l.b16 %v424
      %v438 = vunpack.c.l.b16 %v425
      %v439 = vunpack.c.l.b16 %v426
      %v440 = vunpack.c.l.b16 %v427
      %v441 = vpack.c.b16 %v438, %v437
      %v442 = vpack.c.b16 %v440, %v439
      %v446 = vsel %vm358, %v428, 0
      %448 = vmatpush.bf16.msra.mxu0 0
      %449 = vmatpush.bf16.msra.mxu0 0
      %450 = vmatpush.bf16.msra.mxu0 0
      %451 = vmatpush.bf16.msra.mxu0 0
      %452 = vmatpush.bf16.msra.mxu0 0
      %453 = vmatpush.bf16.msra.mxu0 0
      %454 = vmatpush.bf16.msra.mxu0 %v442
      %455 = vmatpush.bf16.msra.mxu0 %v441
      %456 = vmatmul.bf16.gmra.mxu0 %v446
      %v457 = vpop.f32.mrf.mxu0
      %v458 = vadd.f32 %v431, %v457
      %v459 = vpop.f32.mrf.mxu0
      %460 = vdwg.mxu0
      %v461 = vadd.f32 %v458, %v333
      %v462 = vmax.f32 %v461, 0.0
      %s463 = scalar_lea.vmem %s283, 8
      %464 = vst.msk [vmem:[%s463] sm:$0xf] %vm377, %v462
      %s465 = scalar_lea.vmem %s275, 12
      %v466 = vld [vmem:[%s465] sm:$0xf]
      %v467 = vld [vmem:[%s3] sm:$0xf]
      %v468 = vld [vmem:[%s3 + $0x4] sm:$0xf]
      %v469 = vld [vmem:[%s3 + $0x8] sm:$0xf]
      %v470 = vld [vmem:[%s3 + $0xc] sm:$0xf]
      %v471 = vpack.c.bf16 %v466, %v466
      %v472 = vld [vmem:[%s4] sm:$0x1]
      %v474 = vperm.slane %v472, 0
      %v480 = vunpack.c.l.b16 %v467
      %v481 = vunpack.c.l.b16 %v468
      %v482 = vunpack.c.l.b16 %v469
      %v483 = vunpack.c.l.b16 %v470
      %v484 = vpack.c.b16 %v481, %v480
      %v485 = vpack.c.b16 %v483, %v482
      %v489 = vsel %vm358, %v471, 0
      %491 = vmatpush.bf16.msra.mxu0 0
      %492 = vmatpush.bf16.msra.mxu0 0
      %493 = vmatpush.bf16.msra.mxu0 0
      %494 = vmatpush.bf16.msra.mxu0 0
      %495 = vmatpush.bf16.msra.mxu0 0
      %496 = vmatpush.bf16.msra.mxu0 0
      %497 = vmatpush.bf16.msra.mxu0 %v485
      %498 = vmatpush.bf16.msra.mxu0 %v484
      %499 = vmatmul.bf16.gmra.mxu0 %v489
      %v500 = vpop.f32.mrf.mxu0
      %v501 = vadd.f32 %v474, %v500
      %v502 = vpop.f32.mrf.mxu0
      %503 = vdwg.mxu0
      %v504 = vadd.f32 %v501, %v333
      %v505 = vmax.f32 %v504, 0.0
      %s506 = scalar_lea.vmem %s283, 12
      %507 = vst.msk [vmem:[%s506] sm:$0xf] %vm377, %v505
      %p508 = scmp.lt.s32.totalorder %s20, 1
      %s509 = scalar_select %p508, %s20, 1
      %p510 = scmp.lt.s32.totalorder %s21, 0
      %s511 = scalar_select %p510, %s21, 0
      %s512 = smul.addr %s509, 4
      %s513 = sadd.s32 %s511, %s512
      %s514 = smul.addr %s513, 4
      %s515 = scalar_lea.vmem %s5, %s514
      // Predicated region
      $region41: #{point_ae_forward.8} parent=39 // pred_check
        %p516 = pneg %p167
      $region42: #{point_ae_forward.8} parent=39 // pred_check_branch
        %518 = sbr.rel (%p516) target = $region44
      $region43: #{point_ae_forward.8} parent=39 // pred_region
        _
      $region44: #{point_ae_forward.8} parent=39 // pred_fallthru
        _
    $region40: #{point_ae_forward.8} parent=5 // pred_fallthru
      _
    %p519 = scmp.le.s32.totalorder 2, %s11
    // Predicated region
    $region45: #{point_ae_forward.8} parent=5 // pred_check
      %p520 = pneg %p519
    $region46: #{point_ae_forward.8} parent=5 // pred_check_branch
      %522 = sbr.rel (%p520) target = $region48
    $region47: #{point_ae_forward.8} parent=5 // pred_region
      %s523 = ssub.s32 %s11, 2
      // Predicated region
      $region49: #{point_ae_forward.8} parent=47 // pred_check
        %p524 = pneg %p173
      $region50: #{point_ae_forward.8} parent=47 // pred_check_branch
        %526 = sbr.rel (%p524) target = $region52
      $region51: #{point_ae_forward.8} parent=47 // pred_region
        %p527 = scmp.lt.s32.totalorder %s22, 1
        %s528 = scalar_select %p527, %s22, 1
        %p529 = scmp.lt.s32.totalorder %s23, 0
        %s530 = scalar_select %p529, %s23, 0
        %s531 = smul.addr %s528, 4
        %s532 = sadd.s32 %s530, %s531
        %s533 = smul.addr %s532, 4
        %s534 = scalar_lea.vmem %s5, %s533
      $region52: #{point_ae_forward.8} parent=47 // pred_fallthru
        _
    $region48: #{point_ae_forward.8} parent=5 // pred_fallthru
      _
  $region6: #{point_ae_forward.8} parent=0 // loop_footer
    %s15 = sadd.s32 1, %s11
  $region7: #{point_ae_forward.8} parent=0 // loop_footer_branch
    %10 = sbr.rel target = $region3
  $region8: #{point_ae_forward.8} parent=0 // loop_exit
    _

// kernel: point_ae_forward.7
$region0: #{point_ae_forward.7}
  #allocation0 [shape = 'u32[]', space=smem, size = 0x4, offset = 0x4, fixed_abs, tag = 'smem constant byte address 0x4 - core index']
  #allocation1 [shape = 'u32[72,128]{1,0:T(1,128)}', space=vmem, size = 0x9000, scoped, tag = 'internal scratch']
  %s0 = inlined_call_operand.vmem [shape: f32[2,4,3], index: 0, kind: input, shape index: {}]
  %s1 = inlined_call_operand.vmem [shape: f32[2,4,64], index: 1, kind: input, shape index: {}]
  %s2 = inlined_call_operand.vmem [shape: bf16[3,128], index: 2, kind: input, shape index: {}]
  %s3 = inlined_call_operand.vmem [shape: bf16[64,128], index: 3, kind: input, shape index: {}]
  %s4 = inlined_call_operand.vmem [shape: f32[1,128], index: 4, kind: input, shape index: {}]
  %s5 = inlined_call_operand.vmem [shape: bf16[128,128], index: 5, kind: input, shape index: {}]
  %s6 = inlined_call_operand.vmem [shape: f32[1,128], index: 6, kind: input, shape index: {}]
  %s7 = inlined_call_operand.vmem [shape: bf16[128,64], index: 7, kind: input, shape index: {}]
  %s8 = inlined_call_operand.vmem [shape: bf16[64,64], index: 8, kind: input, shape index: {}]
  %s9 = inlined_call_operand.vmem [shape: f32[1,64], index: 9, kind: input, shape index: {}]
  %s10 = inlined_call_operand.hbm [shape: f32[2,1,128], index: 10, kind: output, shape index: {0}]
  %s11 = inlined_call_operand.vmem [shape: f32[2,4,64], index: 11, kind: output, shape index: {1}]
  %12 = xla_tuple %s10, %s11
  %s13 = sld [smem:[#allocation0]]
  $region81: #{point_ae_forward.7} parent=0
    _
  %s15 = ssub.s32 1, %s13
  %s16 = scalar_select 0, %s15, %s13
  $region1: #{point_ae_forward.7} parent=0
    #allocation2 [shape = 'u8[1024]{0}', space=vmem, size = 0x400, scoped, tag = 'output window, operand 0']
    #allocation3 [shape = 's32[2]{0}', space=sflag, size = 0x8, scoped, tag = 'scoped memory for point_ae_forward.7']
    %17 = vsyncpa [#allocation3], 0
    %s18 = scalar_lea.sflag [#allocation3], 1
    %19 = vsyncpa %s18, 0
    loop: start=0, step=1, limit=4
    $region2: #{point_ae_forward.7} parent=1 // loop_pre_header
      _
    $region3: #{point_ae_forward.7} parent=1 // loop_header
      %s21 = sphi 0, %s25
      %p22 = scmp.ge.s32.totalorder %s21, 4
      %s31 = sphi 0, %s33
      %s34 = sphi 0, %s31
      %s35 = sphi 0, %s34
      %s51 = sphi 0, %s35
      %s57 = sphi 0, %s59
      %s60 = sphi 0, %s57
      %s61 = sphi 0, %s60
      %s77 = sphi 0, %s61
      %s81 = sphi 0, %s81
      %s83 = sphi 0, %s81
      %s84 = sphi 0, %s83
      %s98 = sphi 0, %s84
      %s102 = sphi 0, %s102
      %s104 = sphi 0, %s102
      %s105 = sphi 0, %s104
      %s119 = sphi 0, %s105
      %s123 = sphi 0, %s123
      %s125 = sphi 0, %s123
      %s126 = sphi 0, %s125
      %s140 = sphi 0, %s126
      %s144 = sphi 0, %s144
      %s146 = sphi 0, %s144
      %s147 = sphi 0, %s146
      %s161 = sphi 0, %s147
      %s165 = sphi 0, %s165
      %s167 = sphi 0, %s165
      %s168 = sphi 0, %s167
      %s182 = sphi 0, %s168
      %s186 = sphi 0, %s186
      %s188 = sphi 0, %s186
      %s189 = sphi 0, %s188
      %s203 = sphi 0, %s189
      %s207 = sphi 0, %s207
      %s209 = sphi 0, %s207
      %s210 = sphi 0, %s209
      %s224 = sphi 0, %s210
      %s228 = sphi 0, %s228
      %s230 = sphi 0, %s228
      %s231 = sphi 0, %s230
      %s245 = sphi 0, %s231
      %s251 = sphi 0, %s253
      %s254 = sphi 0, %s251
      %s255 = sphi 0, %s254
      %s271 = sphi 0, %s255
      %s277 = sphi 0, %s279
      %s280 = sphi 0, %s277
      %s281 = sphi 0, %s280
      %s297 = sphi 0, %s281
    $region4: #{point_ae_forward.7} parent=1 // loop_header_branch
      %24 = sbr.rel (%p22) target = $region8
    $region5: #{point_ae_forward.7} parent=1 // loop_body
      %s26 = ssub.s32 %s21, 1
      %s27 = ssub.s32 %s21, 2
      %s28 = sadd.s32 %s21, 1
      %s29 = ssub.s32 %s21, %s28
      %p30 = scmp.eq.s32.totalorder %s29, 0
      %s32 = sadd.s32 %s31, 1
      %s33 = scalar_select %p30, %s31, %s32
      %p36 = pneg %p30
      %p37 = scmp.eq.s32.totalorder %s21, 1
      %p38 = por %p36, %p37
      %p39 = scmp.ne.s32.totalorder %s31, %s34
      %p40 = scmp.eq.s32.totalorder %s21, 0
      %p41 = por %p39, %p40
      %p42 = scmp.ne.s32.totalorder %s31, %s34
      %p43 = scmp.eq.s32.totalorder %s26, 1
      %p44 = por %p42, %p43
      %p45 = scmp.ne.s32.totalorder %s34, %s35
      %p46 = scmp.eq.s32.totalorder %s26, 0
      %p47 = por %p45, %p46
      %p48 = scmp.ne.s32.totalorder %s34, %s35
      %p49 = scmp.eq.s32.totalorder %s27, 1
      %p50 = por %p48, %p49
      %p52 = scmp.ne.s32.totalorder %s35, %s51
      %p53 = scmp.eq.s32.totalorder %s27, 0
      %p54 = por %p52, %p53
      %s55 = ssub.s32 %s21, %s28
      %p56 = scmp.eq.s32.totalorder %s55, 0
      %s58 = sadd.s32 %s57, 1
      %s59 = scalar_select %p56, %s57, %s58
      %p62 = pneg %p56
      %p63 = scmp.eq.s32.totalorder %s21, 1
      %p64 = por %p62, %p63
      %p65 = scmp.ne.s32.totalorder %s57, %s60
      %p66 = scmp.eq.s32.totalorder %s21, 0
      %p67 = por %p65, %p66
      %p68 = scmp.ne.s32.totalorder %s57, %s60
      %p69 = scmp.eq.s32.totalorder %s26, 1
      %p70 = por %p68, %p69
      %p71 = scmp.ne.s32.totalorder %s60, %s61
      %p72 = scmp.eq.s32.totalorder %s26, 0
      %p73 = por %p71, %p72
      %p74 = scmp.ne.s32.totalorder %s60, %s61
      %p75 = scmp.eq.s32.totalorder %s27, 1
      %p76 = por %p74, %p75
      %p78 = scmp.ne.s32.totalorder %s61, %s77
      %p79 = scmp.eq.s32.totalorder %s27, 0
      %p80 = por %p78, %p79
      %s82 = sadd.s32 %s81, 1
      %p85 = scmp.eq.s32.totalorder %s21, 1
      %p86 = scmp.ne.s32.totalorder %s81, %s83
      %p87 = scmp.eq.s32.totalorder %s21, 0
      %p88 = por %p86, %p87
      %p89 = scmp.ne.s32.totalorder %s81, %s83
      %p90 = scmp.eq.s32.totalorder %s26, 1
      %p91 = por %p89, %p90
      %p92 = scmp.ne.s32.totalorder %s83, %s84
      %p93 = scmp.eq.s32.totalorder %s26, 0
      %p94 = por %p92, %p93
      %p95 = scmp.ne.s32.totalorder %s83, %s84
      %p96 = scmp.eq.s32.totalorder %s27, 1
      %p97 = por %p95, %p96
      %p99 = scmp.ne.s32.totalorder %s84, %s98
      %p100 = scmp.eq.s32.totalorder %s27, 0
      %p101 = por %p99, %p100
      %s103 = sadd.s32 %s102, 1
      %p106 = scmp.eq.s32.totalorder %s21, 1
      %p107 = scmp.ne.s32.totalorder %s102, %s104
      %p108 = scmp.eq.s32.totalorder %s21, 0
      %p109 = por %p107, %p108
      %p110 = scmp.ne.s32.totalorder %s102, %s104
      %p111 = scmp.eq.s32.totalorder %s26, 1
      %p112 = por %p110, %p111
      %p113 = scmp.ne.s32.totalorder %s104, %s105
      %p114 = scmp.eq.s32.totalorder %s26, 0
      %p115 = por %p113, %p114
      %p116 = scmp.ne.s32.totalorder %s104, %s105
      %p117 = scmp.eq.s32.totalorder %s27, 1
      %p118 = por %p116, %p117
      %p120 = scmp.ne.s32.totalorder %s105, %s119
      %p121 = scmp.eq.s32.totalorder %s27, 0
      %p122 = por %p120, %p121
      %s124 = sadd.s32 %s123, 1
      %p127 = scmp.eq.s32.totalorder %s21, 1
      %p128 = scmp.ne.s32.totalorder %s123, %s125
      %p129 = scmp.eq.s32.totalorder %s21, 0
      %p130 = por %p128, %p129
      %p131 = scmp.ne.s32.totalorder %s123, %s125
      %p132 = scmp.eq.s32.totalorder %s26, 1
      %p133 = por %p131, %p132
      %p134 = scmp.ne.s32.totalorder %s125, %s126
      %p135 = scmp.eq.s32.totalorder %s26, 0
      %p136 = por %p134, %p135
      %p137 = scmp.ne.s32.totalorder %s125, %s126
      %p138 = scmp.eq.s32.totalorder %s27, 1
      %p139 = por %p137, %p138
      %p141 = scmp.ne.s32.totalorder %s126, %s140
      %p142 = scmp.eq.s32.totalorder %s27, 0
      %p143 = por %p141, %p142
      %s145 = sadd.s32 %s144, 1
      %p148 = scmp.eq.s32.totalorder %s21, 1
      %p149 = scmp.ne.s32.totalorder %s144, %s146
      %p150 = scmp.eq.s32.totalorder %s21, 0
      %p151 = por %p149, %p150
      %p152 = scmp.ne.s32.totalorder %s144, %s146
      %p153 = scmp.eq.s32.totalorder %s26, 1
      %p154 = por %p152, %p153
      %p155 = scmp.ne.s32.totalorder %s146, %s147
      %p156 = scmp.eq.s32.totalorder %s26, 0
      %p157 = por %p155, %p156
      %p158 = scmp.ne.s32.totalorder %s146, %s147
      %p159 = scmp.eq.s32.totalorder %s27, 1
      %p160 = por %p158, %p159
      %p162 = scmp.ne.s32.totalorder %s147, %s161
      %p163 = scmp.eq.s32.totalorder %s27, 0
      %p164 = por %p162, %p163
      %s166 = sadd.s32 %s165, 1
      %p169 = scmp.eq.s32.totalorder %s21, 1
      %p170 = scmp.ne.s32.totalorder %s165, %s167
      %p171 = scmp.eq.s32.totalorder %s21, 0
      %p172 = por %p170, %p171
      %p173 = scmp.ne.s32.totalorder %s165, %s167
      %p174 = scmp.eq.s32.totalorder %s26, 1
      %p175 = por %p173, %p174
      %p176 = scmp.ne.s32.totalorder %s167, %s168
      %p177 = scmp.eq.s32.totalorder %s26, 0
      %p178 = por %p176, %p177
      %p179 = scmp.ne.s32.totalorder %s167, %s168
      %p180 = scmp.eq.s32.totalorder %s27, 1
      %p181 = por %p179, %p180
      %p183 = scmp.ne.s32.totalorder %s168, %s182
      %p184 = scmp.eq.s32.totalorder %s27, 0
      %p185 = por %p183, %p184
      %s187 = sadd.s32 %s186, 1
      %p190 = scmp.eq.s32.totalorder %s21, 1
      %p191 = scmp.ne.s32.totalorder %s186, %s188
      %p192 = scmp.eq.s32.totalorder %s21, 0
      %p193 = por %p191, %p192
      %p194 = scmp.ne.s32.totalorder %s186, %s188
      %p195 = scmp.eq.s32.totalorder %s26, 1
      %p196 = por %p194, %p195
      %p197 = scmp.ne.s32.totalorder %s188, %s189
      %p198 = scmp.eq.s32.totalorder %s26, 0
      %p199 = por %p197, %p198
      %p200 = scmp.ne.s32.totalorder %s188, %s189
      %p201 = scmp.eq.s32.totalorder %s27, 1
      %p202 = por %p200, %p201
      %p204 = scmp.ne.s32.totalorder %s189, %s203
      %p205 = scmp.eq.s32.totalorder %s27, 0
      %p206 = por %p204, %p205
      %s208 = sadd.s32 %s207, 1
      %p211 = scmp.eq.s32.totalorder %s21, 1
      %p212 = scmp.ne.s32.totalorder %s207, %s209
      %p213 = scmp.eq.s32.totalorder %s21, 0
      %p214 = por %p212, %p213
      %p215 = scmp.ne.s32.totalorder %s207, %s209
      %p216 = scmp.eq.s32.totalorder %s26, 1
      %p217 = por %p215, %p216
      %p218 = scmp.ne.s32.totalorder %s209, %s210
      %p219 = scmp.eq.s32.totalorder %s26, 0
      %p220 = por %p218, %p219
      %p221 = scmp.ne.s32.totalorder %s209, %s210
      %p222 = scmp.eq.s32.totalorder %s27, 1
      %p223 = por %p221, %p222
      %p225 = scmp.ne.s32.totalorder %s210, %s224
      %p226 = scmp.eq.s32.totalorder %s27, 0
      %p227 = por %p225, %p226
      %s229 = sadd.s32 %s228, 1
      %p232 = scmp.eq.s32.totalorder %s21, 1
      %p233 = scmp.ne.s32.totalorder %s228, %s230
      %p234 = scmp.eq.s32.totalorder %s21, 0
      %p235 = por %p233, %p234
      %p236 = scmp.ne.s32.totalorder %s228, %s230
      %p237 = scmp.eq.s32.totalorder %s26, 1
      %p238 = por %p236, %p237
      %p239 = scmp.ne.s32.totalorder %s230, %s231
      %p240 = scmp.eq.s32.totalorder %s26, 0
      %p241 = por %p239, %p240
      %p242 = scmp.ne.s32.totalorder %s230, %s231
      %p243 = scmp.eq.s32.totalorder %s27, 1
      %p244 = por %p242, %p243
      %p246 = scmp.ne.s32.totalorder %s231, %s245
      %p247 = scmp.eq.s32.totalorder %s27, 0
      %p248 = por %p246, %p247
      %s249 = ssub.s32 %s21, %s28
      %p250 = scmp.eq.s32.totalorder %s249, 0
      %s252 = sadd.s32 %s251, 1
      %s253 = scalar_select %p250, %s251, %s252
      %p256 = pneg %p250
      %p257 = scmp.eq.s32.totalorder %s21, 1
      %p258 = por %p256, %p257
      %p259 = scmp.ne.s32.totalorder %s251, %s254
      %p260 = scmp.eq.s32.totalorder %s21, 0
      %p261 = por %p259, %p260
      %p262 = scmp.ne.s32.totalorder %s251, %s254
      %p263 = scmp.eq.s32.totalorder %s26, 1
      %p264 = por %p262, %p263
      %p265 = scmp.ne.s32.totalorder %s254, %s255
      %p266 = scmp.eq.s32.totalorder %s26, 0
      %p267 = por %p265, %p266
      %p268 = scmp.ne.s32.totalorder %s254, %s255
      %p269 = scmp.eq.s32.totalorder %s27, 1
      %p270 = por %p268, %p269
      %p272 = scmp.ne.s32.totalorder %s255, %s271
      %p273 = scmp.eq.s32.totalorder %s27, 0
      %p274 = por %p272, %p273
      %s275 = ssub.s32 %s21, %s28
      %p276 = scmp.eq.s32.totalorder %s275, 0
      %s278 = sadd.s32 %s277, 1
      %s279 = scalar_select %p276, %s277, %s278
      %p282 = pneg %p276
      %p283 = scmp.eq.s32.totalorder %s21, 1
      %p284 = por %p282, %p283
      %p285 = scmp.ne.s32.totalorder %s277, %s280
      %p286 = scmp.eq.s32.totalorder %s21, 0
      %p287 = por %p285, %p286
      %p288 = scmp.ne.s32.totalorder %s277, %s280
      %p289 = scmp.eq.s32.totalorder %s26, 1
      %p290 = por %p288, %p289
      %p291 = scmp.ne.s32.totalorder %s280, %s281
      %p292 = scmp.eq.s32.totalorder %s26, 0
      %p293 = por %p291, %p292
      %p294 = scmp.ne.s32.totalorder %s280, %s281
      %p295 = scmp.eq.s32.totalorder %s27, 1
      %p296 = por %p294, %p295
      %p298 = scmp.ne.s32.totalorder %s281, %s297
      %p299 = scmp.eq.s32.totalorder %s27, 0
      %p300 = por %p298, %p299
      %p301 = scmp.le.s32.totalorder 1, %s21
      %p302 = scmp.lt.s32.totalorder %s21, 3
      %p303 = pnand %p301, %p302
      %p304 = pneg %p303
      // Predicated region
      $region9: #{point_ae_forward.7} parent=5 // pred_check
        _
      $region10: #{point_ae_forward.7} parent=5 // pred_check_branch
        %306 = sbr.rel (%p303) target = $region12
      $region11: #{point_ae_forward.7} parent=5 // pred_region
        %s307 = ssub.s32 %s21, 1
        // Predicated region
        $region13: #{point_ae_forward.7} parent=11 // pred_check
          %p308 = pneg %p94
        $region14: #{point_ae_forward.7} parent=11 // pred_check_branch
          %310 = sbr.rel (%p308) target = $region16
        $region15: #{point_ae_forward.7} parent=11 // pred_region
          _
        $region16: #{point_ae_forward.7} parent=11 // pred_fallthru
          _
        // Predicated region
        $region17: #{point_ae_forward.7} parent=11 // pred_check
          %p311 = pneg %p115
        $region18: #{point_ae_forward.7} parent=11 // pred_check_branch
          %313 = sbr.rel (%p311) target = $region20
        $region19: #{point_ae_forward.7} parent=11 // pred_region
          _
        $region20: #{point_ae_forward.7} parent=11 // pred_fallthru
          _
        // Predicated region
        $region21: #{point_ae_forward.7} parent=11 // pred_check
          %p314 = pneg %p136
        $region22: #{point_ae_forward.7} parent=11 // pred_check_branch
          %316 = sbr.rel (%p314) target = $region24
        $region23: #{point_ae_forward.7} parent=11 // pred_region
          _
        $region24: #{point_ae_forward.7} parent=11 // pred_fallthru
          _
        // Predicated region
        $region25: #{point_ae_forward.7} parent=11 // pred_check
          %p317 = pneg %p157
        $region26: #{point_ae_forward.7} parent=11 // pred_check_branch
          %319 = sbr.rel (%p317) target = $region28
        $region27: #{point_ae_forward.7} parent=11 // pred_region
          _
        $region28: #{point_ae_forward.7} parent=11 // pred_fallthru
          _
        // Predicated region
        $region29: #{point_ae_forward.7} parent=11 // pred_check
          %p320 = pneg %p178
        $region30: #{point_ae_forward.7} parent=11 // pred_check_branch
          %322 = sbr.rel (%p320) target = $region32
        $region31: #{point_ae_forward.7} parent=11 // pred_region
          _
        $region32: #{point_ae_forward.7} parent=11 // pred_fallthru
          _
        // Predicated region
        $region33: #{point_ae_forward.7} parent=11 // pred_check
          %p323 = pneg %p199
        $region34: #{point_ae_forward.7} parent=11 // pred_check_branch
          %325 = sbr.rel (%p323) target = $region36
        $region35: #{point_ae_forward.7} parent=11 // pred_region
          _
        $region36: #{point_ae_forward.7} parent=11 // pred_fallthru
          _
        // Predicated region
        $region37: #{point_ae_forward.7} parent=11 // pred_check
          %p326 = pneg %p220
        $region38: #{point_ae_forward.7} parent=11 // pred_check_branch
          %328 = sbr.rel (%p326) target = $region40
        $region39: #{point_ae_forward.7} parent=11 // pred_region
          _
        $region40: #{point_ae_forward.7} parent=11 // pred_fallthru
          _
        // Predicated region
        $region41: #{point_ae_forward.7} parent=11 // pred_check
          %p329 = pneg %p241
        $region42: #{point_ae_forward.7} parent=11 // pred_check_branch
          %331 = sbr.rel (%p329) target = $region44
        $region43: #{point_ae_forward.7} parent=11 // pred_region
          _
        $region44: #{point_ae_forward.7} parent=11 // pred_fallthru
          _
      $region12: #{point_ae_forward.7} parent=5 // pred_fallthru
        _
      %p332 = scmp.lt.s32.totalorder %s21, 2
      // Predicated region
      $region45: #{point_ae_forward.7} parent=5 // pred_check
        %p333 = pneg %p332
      $region46: #{point_ae_forward.7} parent=5 // pred_check_branch
        %335 = sbr.rel (%p333) target = $region48
      $region47: #{point_ae_forward.7} parent=5 // pred_region
        // Predicated region
        $region49: #{point_ae_forward.7} parent=47 // pred_check
          %p336 = pneg %p41
        $region50: #{point_ae_forward.7} parent=47 // pred_check_branch
          %338 = sbr.rel (%p336) target = $region52
        $region51: #{point_ae_forward.7} parent=47 // pred_region
          %p339 = scmp.lt.s32.totalorder %s21, 1
          %s340 = scalar_select %p339, %s21, 1
          %s341 = smul.addr %s340, 4
          %s342 = scalar_lea.vmem %s0, %s341
        $region52: #{point_ae_forward.7} parent=47 // pred_fallthru
          _
        // Predicated region
        $region53: #{point_ae_forward.7} parent=47 // pred_check
          %p343 = pneg %p67
        $region54: #{point_ae_forward.7} parent=47 // pred_check_branch
          %345 = sbr.rel (%p343) target = $region56
        $region55: #{point_ae_forward.7} parent=47 // pred_region
          %p346 = scmp.lt.s32.totalorder %s21, 1
          %s347 = scalar_select %p346, %s21, 1
          %s348 = smul.addr %s347, 4
          %s349 = scalar_lea.vmem %s1, %s348
        $region56: #{point_ae_forward.7} parent=47 // pred_fallthru
          _
      $region48: #{point_ae_forward.7} parent=5 // pred_fallthru
        _
      %p350 = scmp.le.s32.totalorder 1, %s21
      %p351 = scmp.lt.s32.totalorder %s21, 3
      %p352 = pnand %p350, %p351
      %p353 = pneg %p352
      // Predicated region
      $region57: #{point_ae_forward.7} parent=5 // pred_check
        _
      $region58: #{point_ae_forward.7} parent=5 // pred_check_branch
        %355 = sbr.rel (%p352) target = $region60
      $region59: #{point_ae_forward.7} parent=5 // pred_region
        %s356 = ssub.s32 %s21, 1
        %p357 = scmp.lt.s32.totalorder %s26, 1
        %s358 = scalar_select %p357, %s26, 1
        %s359 = smul.addr %s358, 4
        %s360 = scalar_lea.vmem %s0, %s359
        %p361 = pneg %p47
        %p362 = pneg %p44
        %p363 = scmp.lt.s32.totalorder %s26, 1
        %s364 = scalar_select %p363, %s26, 1
        %s365 = smul.addr %s364, 4
        %s366 = scalar_lea.vmem %s1, %s365
        %p367 = pneg %p73
        %p368 = pneg %p70
        %p369 = pneg %p94
        %p370 = pneg %p91
        %p371 = pneg %p115
        %p372 = pneg %p112
        %p373 = pneg %p136
        %p374 = pneg %p133
        %p375 = pneg %p157
        %p376 = pneg %p154
        %p377 = pneg %p178
        %p378 = pneg %p175
        %p379 = pneg %p199
        %p380 = pneg %p196
        %p381 = pneg %p220
        %p382 = pneg %p217
        %p383 = pneg %p241
        %p384 = pneg %p238
        %p385 = pneg %p267
        %p386 = pneg %p264
        %s387 = sand.u32 %s254, 1
        %s388 = scalar_lea.sflag [#allocation3], %s387
        %s389 = sand.u32 %s254, 1
        %s390 = scalar_lea.vmem [#allocation2], %s389
        %p391 = pneg %p293
        %p392 = pneg %p290
        %p393 = scmp.lt.s32.totalorder %s26, 1
        %s394 = scalar_select %p393, %s26, 1
        %s395 = smul.addr %s394, 4
        %s396 = scalar_lea.vmem %s11, %s395
        %p397 = scmp.lt.s32.totalorder %s26, 1
        %s398 = scalar_select %p397, %s26, 1
        %s399 = smul.addr %s398, 4
        %s400 = scalar_lea.vmem %s0, %s399
        %p401 = scmp.lt.s32.totalorder %s26, 1
        %s402 = scalar_select %p401, %s26, 1
        %s403 = smul.addr %s402, 4
        %s404 = scalar_lea.vmem %s1, %s403
        %p405 = scmp.lt.s32.totalorder %s26, 1
        %s406 = scalar_select %p405, %s26, 1
        %s407 = smul.addr %s406, 4
        %s408 = scalar_lea.vmem %s11, %s407
        %v410 = vld [vmem:[%s400] sm:$0xf]
        %v411 = vld [vmem:[%s404] sm:$0xf]
        %v412 = vld [vmem:[%s2] sm:$0x3]
        %v413 = vpack.c.bf16 %v410, %v410
        %v414 = vld [vmem:[%s3] sm:$0xf]
        %v415 = vld [vmem:[%s3 + $0x4] sm:$0xf]
        %v416 = vld [vmem:[%s3 + $0x8] sm:$0xf]
        %v417 = vld [vmem:[%s3 + $0xc] sm:$0xf]
        %v418 = vld [vmem:[%s3 + $0x10] sm:$0xf]
        %v419 = vld [vmem:[%s3 + $0x14] sm:$0xf]
        %v420 = vld [vmem:[%s3 + $0x18] sm:$0xf]
        %v421 = vld [vmem:[%s3 + $0x1c] sm:$0xf]
        %v422 = vpack.c.bf16 %v411, %v411
        %v431 = vunpack.c.l.b16 %v414
        %v432 = vunpack.c.l.b16 %v415
        %v433 = vunpack.c.l.b16 %v416
        %v434 = vunpack.c.l.b16 %v417
        %v435 = vunpack.c.l.b16 %v418
        %v436 = vunpack.c.l.b16 %v419
        %v437 = vunpack.c.l.b16 %v420
        %v438 = vunpack.c.l.b16 %v421
        %v439 = vpack.c.b16 %v432, %v431
        %v440 = vpack.c.b16 %v434, %v433
        %v441 = vpack.c.b16 %v436, %v435
        %v442 = vpack.c.b16 %v438, %v437
        %vm447 = vcmask 523264
        %v449 = vsel %vm447, %v422, 0
        %451 = vmatpush.bf16.msra.mxu0 0
        %452 = vmatpush.bf16.msra.mxu0 0
        %453 = vmatpush.bf16.msra.mxu0 0
        %454 = vmatpush.bf16.msra.mxu0 0
        %455 = vmatpush.bf16.msra.mxu0 %v442
        %456 = vmatpush.bf16.msra.mxu0 %v441
        %457 = vmatpush.bf16.msra.mxu0 %v440
        %458 = vmatpush.bf16.msra.mxu0 %v439
        %459 = vmatmul.bf16.gmra.mxu0 %v449
        %v460 = vpop.f32.mrf.mxu0
        %v461 = vadd.f32 0.0, %v460
        %v462 = vpop.f32.mrf.mxu0
        %463 = vdwg.mxu0
        %vm464 = vcmask 23552
        %v466 = vsel %vm464, %v413, 0
        %vm468 = vcmask 1040384
        %vm469 = vcmask 1041408
        %v470 = vsel %vm468, 4294967295, 65535
        %v471 = vsel %vm469, %v470, 0
        %v473 = vand.u32 %v412, %v471
        %475 = vmatpush.bf16.msra.mxu0 0
        %476 = vmatpush.bf16.msra.mxu0 0
        %477 = vmatpush.bf16.msra.mxu0 0
        %478 = vmatpush.bf16.msra.mxu0 0
        %479 = vmatpush.bf16.msra.mxu0 0
        %480 = vmatpush.bf16.msra.mxu0 0
        %481 = vmatpush.bf16.msra.mxu0 0
        %482 = vmatpush.bf16.msra.mxu0 %v473
        %483 = vmatmul.bf16.gmra.mxu0 %v466
        %v484 = vpop.f32.mrf.mxu0
        %v485 = vadd.f32 %v461, %v484
        %v486 = vpop.f32.mrf.mxu0
        %487 = vdwg.mxu0
        %v488 = vld [vmem:[%s4] sm:$0x1]
        %v490 = vperm.slane %v488, 0
        %v492 = vadd.f32 %v485, %v490
        %v493 = vmax.f32 %v492, 0.0
        %v494 = vld [vmem:[%s5] sm:$0xf]
        %v495 = vld [vmem:[%s5 + $0x4] sm:$0xf]
        %v496 = vld [vmem:[%s5 + $0x8] sm:$0xf]
        %v497 = vld [vmem:[%s5 + $0xc] sm:$0xf]
        %v498 = vld [vmem:[%s5 + $0x10] sm:$0xf]
        %v499 = vld [vmem:[%s5 + $0x14] sm:$0xf]
        %v500 = vld [vmem:[%s5 + $0x18] sm:$0xf]
        %v501 = vld [vmem:[%s5 + $0x1c] sm:$0xf]
        %v502 = vld [vmem:[%s5 + $0x20] sm:$0xf]
        %v503 = vld [vmem:[%s5 + $0x24] sm:$0xf]
        %v504 = vld [vmem:[%s5 + $0x28] sm:$0xf]
        %v505 = vld [vmem:[%s5 + $0x2c] sm:$0xf]
        %v506 = vld [vmem:[%s5 + $0x30] sm:$0xf]
        %v507 = vld [vmem:[%s5 + $0x34] sm:$0xf]
        %v508 = vld [vmem:[%s5 + $0x38] sm:$0xf]
        %v509 = vld [vmem:[%s5 + $0x3c] sm:$0xf]
        %v510 = vpack.c.bf16 %v493, %v493
        %v511 = vld [vmem:[%s6] sm:$0x1]
        %v513 = vperm.slane %v511, 0
        %v531 = vunpack.c.l.b16 %v494
        %v532 = vunpack.c.l.b16 %v495
        %v533 = vunpack.c.l.b16 %v496
        %v534 = vunpack.c.l.b16 %v497
        %v535 = vunpack.c.l.b16 %v498
        %v536 = vunpack.c.l.b16 %v499
        %v537 = vunpack.c.l.b16 %v500
        %v538 = vunpack.c.l.b16 %v501
        %v539 = vunpack.c.l.b16 %v502
        %v540 = vunpack.c.l.b16 %v503
        %v541 = vunpack.c.l.b16 %v504
        %v542 = vunpack.c.l.b16 %v505
        %v543 = vunpack.c.l.b16 %v506
        %v544 = vunpack.c.l.b16 %v507
        %v545 = vunpack.c.l.b16 %v508
        %v546 = vunpack.c.l.b16 %v509
        %v547 = vpack.c.b16 %v532, %v531
        %v548 = vpack.c.b16 %v534, %v533
        %v549 = vpack.c.b16 %v536, %v535
        %v550 = vpack.c.b16 %v538, %v537
        %v551 = vpack.c.b16 %v540, %v539
        %v552 = vpack.c.b16 %v542, %v541
        %v553 = vpack.c.b16 %v544, %v543
        %v554 = vpack.c.b16 %v546, %v545
        %563 = vmatpush.bf16.msra.mxu0 %v554
        %564 = vmatpush.bf16.msra.mxu0 %v553
        %565 = vmatpush.bf16.msra.mxu0 %v552
        %566 = vmatpush.bf16.msra.mxu0 %v551
        %567 = vmatpush.bf16.msra.mxu0 %v550
        %568 = vmatpush.bf16.msra.mxu0 %v549
        %569 = vmatpush.bf16.msra.mxu0 %v548
        %570 = vmatpush.bf16.msra.mxu0 %v547
        %571 = vmatmul.bf16.gmra.mxu0 %v510
        %v572 = vpop.f32.mrf.mxu0
        %v573 = vadd.f32 %v513, %v572
        %v574 = vpop.f32.mrf.mxu0
        %575 = vdwg.mxu0
        %v576 = vmax.f32 %v573, 0.0
        %vm577 = vcmask 1043456
        %v578 = vsel %vm577, %v576, -inf
        %v579 = vrot.slane %v578, 4
        %v580 = vmax.f32 %v578, %v579
        %v581 = vrot.slane %v580, 2
        %v582 = vmax.f32 %v580, %v581
        %v583 = vrot.slane %v582, 1
        %v584 = vmax.f32 %v582, %v583
        %v585 = vld [vmem:[%s7] sm:$0xf]
        %v586 = vld [vmem:[%s7 + $0x4] sm:$0xf]
        %v587 = vld [vmem:[%s7 + $0x8] sm:$0xf]
        %v588 = vld [vmem:[%s7 + $0xc] sm:$0xf]
        %v589 = vld [vmem:[%s7 + $0x10] sm:$0xf]
        %v590 = vld [vmem:[%s7 + $0x14] sm:$0xf]
        %v591 = vld [vmem:[%s7 + $0x18] sm:$0xf]
        %v592 = vld [vmem:[%s7 + $0x1c] sm:$0xf]
        %v593 = vld [vmem:[%s7 + $0x20] sm:$0xf]
        %v594 = vld [vmem:[%s7 + $0x24] sm:$0xf]
        %v595 = vld [vmem:[%s7 + $0x28] sm:$0xf]
        %v596 = vld [vmem:[%s7 + $0x2c] sm:$0xf]
        %v597 = vld [vmem:[%s7 + $0x30] sm:$0xf]
        %v598 = vld [vmem:[%s7 + $0x34] sm:$0xf]
        %v599 = vld [vmem:[%s7 + $0x38] sm:$0xf]
        %v600 = vld [vmem:[%s7 + $0x3c] sm:$0xf]
        %v601 = vpack.c.bf16 %v584, %v584
        %v618 = vunpack.c.l.b16 %v585
        %v619 = vunpack.c.l.b16 %v586
        %v620 = vunpack.c.l.b16 %v587
        %v621 = vunpack.c.l.b16 %v588
        %v622 = vunpack.c.l.b16 %v589
        %v623 = vunpack.c.l.b16 %v590
        %v624 = vunpack.c.l.b16 %v591
        %v625 = vunpack.c.l.b16 %v592
        %v626 = vunpack.c.l.b16 %v593
        %v627 = vunpack.c.l.b16 %v594
        %v628 = vunpack.c.l.b16 %v595
        %v629 = vunpack.c.l.b16 %v596
        %v630 = vunpack.c.l.b16 %v597
        %v631 = vunpack.c.l.b16 %v598
        %v632 = vunpack.c.l.b16 %v599
        %v633 = vunpack.c.l.b16 %v600
        %v634 = vpack.c.b16 %v619, %v618
        %v635 = vpack.c.b16 %v621, %v620
        %v636 = vpack.c.b16 %v623, %v622
        %v637 = vpack.c.b16 %v625, %v624
        %v638 = vpack.c.b16 %v627, %v626
        %v639 = vpack.c.b16 %v629, %v628
        %v640 = vpack.c.b16 %v631, %v630
        %v641 = vpack.c.b16 %v633, %v632
        %650 = vmatpush.bf16.msra.mxu0 %v641
        %651 = vmatpush.bf16.msra.mxu0 %v640
        %652 = vmatpush.bf16.msra.mxu0 %v639
        %653 = vmatpush.bf16.msra.mxu0 %v638
        %654 = vmatpush.bf16.msra.mxu0 %v637
        %655 = vmatpush.bf16.msra.mxu0 %v636
        %656 = vmatpush.bf16.msra.mxu0 %v635
        %657 = vmatpush.bf16.msra.mxu0 %v634
        %658 = vmatmul.bf16.gmra.mxu0 %v601
        %v659 = vpop.f32.mrf.mxu0
        %v660 = vadd.f32 0.0, %v659
        %v661 = vpop.f32.mrf.mxu0
        %662 = vdwg.mxu0
        %v663 = vld [vmem:[%s8] sm:$0xf]
        %v664 = vld [vmem:[%s8 + $0x4] sm:$0xf]
        %v665 = vld [vmem:[%s8 + $0x8] sm:$0xf]
        %v666 = vld [vmem:[%s8 + $0xc] sm:$0xf]
        %v667 = vld [vmem:[%s8 + $0x10] sm:$0xf]
        %v668 = vld [vmem:[%s8 + $0x14] sm:$0xf]
        %v669 = vld [vmem:[%s8 + $0x18] sm:$0xf]
        %v670 = vld [vmem:[%s8 + $0x1c] sm:$0xf]
        %v671 = vld [vmem:[%s9] sm:$0x1]
        %v673 = vperm.slane %v671, 0
        %v683 = vunpack.c.l.b16 %v663
        %v684 = vunpack.c.l.b16 %v664
        %v685 = vunpack.c.l.b16 %v665
        %v686 = vunpack.c.l.b16 %v666
        %v687 = vunpack.c.l.b16 %v667
        %v688 = vunpack.c.l.b16 %v668
        %v689 = vunpack.c.l.b16 %v669
        %v690 = vunpack.c.l.b16 %v670
        %v691 = vpack.c.b16 %v684, %v683
        %v692 = vpack.c.b16 %v686, %v685
        %v693 = vpack.c.b16 %v688, %v687
        %v694 = vpack.c.b16 %v690, %v689
        %699 = vmatpush.bf16.msra.mxu0 0
        %700 = vmatpush.bf16.msra.mxu0 0
        %701 = vmatpush.bf16.msra.mxu0 0
        %702 = vmatpush.bf16.msra.mxu0 0
        %703 = vmatpush.bf16.msra.mxu0 %v694
        %704 = vmatpush.bf16.msra.mxu0 %v693
        %705 = vmatpush.bf16.msra.mxu0 %v692
        %706 = vmatpush.bf16.msra.mxu0 %v691
        %707 = vmatmul.bf16.gmra.mxu0 %v449
        %v708 = vpop.f32.mrf.mxu0
        %v709 = vadd.f32 %v673, %v708
        %v710 = vpop.f32.mrf.mxu0
        %711 = vdwg.mxu0
        %v712 = vperm.slane %v660, 0
        %v713 = vadd.f32 %v709, %v712
        %v714 = vmax.f32 %v713, 0.0
        %715 = vst [vmem:[%s390] sm:$0x1] %v584
        %vm716 = vcmask 519168
        %717 = vst.msk [vmem:[%s408] sm:$0xf] %vm716, %v714
        %s718 = sand.u32 %s254, 1
        %s719 = scalar_lea.sflag [#allocation3], %s718
        %s720 = sand.u32 %s254, 1
        %s721 = scalar_lea.vmem [#allocation2], %s720
        %p722 = scmp.lt.s32.totalorder %s26, 1
        %s723 = scalar_select %p722, %s26, 1
        %s724 = smul.addr %s723, 4
        %s725 = scalar_lea.vmem %s11, %s724
        // Predicated region
        $region61: #{point_ae_forward.7} parent=59 // pred_check
          %p726 = pneg %p264
        $region62: #{point_ae_forward.7} parent=59 // pred_check_branch
          %728 = sbr.rel (%p726) target = $region64
        $region63: #{point_ae_forward.7} parent=59 // pred_region
          %730 = vsyncadd %s719, 0
          %s731 = scalar_lea.hbm %s10, %s26
          %s733 = sshll.u32 %s721, 4
          %s734 = int_to_ptr.vmem [resolvable:$true] %s733
          %s735 = sshll.u32 %s731, 4
          %s736 = int_to_ptr.hbm [resolvable:$true] %s735
          %738 = dma.vmem_to_hbm [thread:$0]  %s734, 16, %s736, %s719
        $region64: #{point_ae_forward.7} parent=59 // pred_fallthru
          _
        // Predicated region
        $region65: #{point_ae_forward.7} parent=59 // pred_check
          %p739 = pneg %p290
        $region66: #{point_ae_forward.7} parent=59 // pred_check_branch
          %741 = sbr.rel (%p739) target = $region68
        $region67: #{point_ae_forward.7} parent=59 // pred_region
          _
        $region68: #{point_ae_forward.7} parent=59 // pred_fallthru
          _
      $region60: #{point_ae_forward.7} parent=5 // pred_fallthru
        _
      %p742 = scmp.le.s32.totalorder 2, %s21
      // Predicated region
      $region69: #{point_ae_forward.7} parent=5 // pred_check
        %p743 = pneg %p742
      $region70: #{point_ae_forward.7} parent=5 // pred_check_branch
        %745 = sbr.rel (%p743) target = $region72
      $region71: #{point_ae_forward.7} parent=5 // pred_region
        %s746 = ssub.s32 %s21, 2
        // Predicated region
        $region73: #{point_ae_forward.7} parent=71 // pred_check
          %p747 = pneg %p270
        $region74: #{point_ae_forward.7} parent=71 // pred_check_branch
          %749 = sbr.rel (%p747) target = $region76
        $region75: #{point_ae_forward.7} parent=71 // pred_region
          %s750 = sand.u32 %s255, 1
          %s751 = scalar_lea.sflag [#allocation3], %s750
          %s752 = sand.u32 %s255, 1
          %s753 = scalar_lea.vmem [#allocation2], %s752
          %755 = dma.done %s751, 16
        $region76: #{point_ae_forward.7} parent=71 // pred_fallthru
          _
        // Predicated region
        $region77: #{point_ae_forward.7} parent=71 // pred_check
          %p756 = pneg %p296
        $region78: #{point_ae_forward.7} parent=71 // pred_check_branch
          %758 = sbr.rel (%p756) target = $region80
        $region79: #{point_ae_forward.7} parent=71 // pred_region
          %p759 = scmp.lt.s32.totalorder %s27, 1
          %s760 = scalar_select %p759, %s27, 1
          %s761 = smul.addr %s760, 4
          %s762 = scalar_lea.vmem %s11, %s761
        $region80: #{point_ae_forward.7} parent=71 // pred_fallthru
          _
      $region72: #{point_ae_forward.7} parent=5 // pred_fallthru
        _
    $region6: #{point_ae_forward.7} parent=1 // loop_footer
      %s25 = sadd.s32 1, %s21
    $region7: #{point_ae_forward.7} parent=1 // loop_footer_branch
      %20 = sbr.rel target = $region3
    $region8: #{point_ae_forward.7} parent=1 // loop_exit
      _
    %763 = vsyncpa [#allocation3], 1
    %s764 = scalar_lea.sflag [#allocation3], 1
    %765 = vsyncpa %s764, 1

// kernel: point_ae_forward.9
$region0: #{point_ae_forward.9}
  #allocation0 [shape = 'u32[]', space=smem, size = 0x4, offset = 0x4, fixed_abs, tag = 'smem constant byte address 0x4 - core index']
  #allocation1 [shape = 'u32[72,128]{1,0:T(1,128)}', space=vmem, size = 0x9000, scoped, tag = 'internal scratch']
  %s0 = inlined_call_operand.vmem [shape: f32[2,16,32], index: 0, kind: input, shape index: {}]
  %s1 = inlined_call_operand.vmem [shape: f32[2,4,16,3], index: 1, kind: input, shape index: {}]
  %s2 = inlined_call_operand.vmem [shape: bf16[32,32], index: 2, kind: input, shape index: {}]
  %s3 = inlined_call_operand.vmem [shape: bf16[3,32], index: 3, kind: input, shape index: {}]
  %s4 = inlined_call_operand.vmem [shape: f32[1,32], index: 4, kind: input, shape index: {}]
  %s5 = inlined_call_operand.vmem [shape: bf16[32,3], index: 5, kind: input, shape index: {}]
  %s6 = inlined_call_operand.vmem [shape: f32[1,3], index: 6, kind: input, shape index: {}]
  %s7 = inlined_call_operand.vmem [shape: f32[2,4,16,3], index: 7, kind: output, shape index: {}]
  %s8 = sld [smem:[#allocation0]]
  $region61: #{point_ae_forward.9} parent=0
    _
  %s10 = ssub.s32 1, %s8
  %s11 = scalar_select 0, %s10, %s8
  loop: start=0, step=1, limit=4
  $region2: #{point_ae_forward.9} parent=0 // loop_pre_header
    _
  $region3: #{point_ae_forward.9} parent=0 // loop_header
    %s13 = sphi 0, %s17
    %p14 = scmp.ge.s32.totalorder %s13, 4
    %s20 = sphi 0, %s32
    %s21 = sphi 0, %s28
    %s22 = sphi 0, %s20
    %s23 = sphi 0, %s21
    %s24 = sphi 0, %s22
    %s25 = sphi 0, %s23
    %s37 = sphi 0, %s39
    %s40 = sphi 0, %s37
    %s41 = sphi 0, %s40
    %s57 = sphi 0, %s41
    %s65 = sphi 0, %s67
    %s68 = sphi 0, %s65
    %s69 = sphi 0, %s68
    %s85 = sphi 0, %s69
    %s89 = sphi 0, %s89
    %s91 = sphi 0, %s89
    %s92 = sphi 0, %s91
    %s106 = sphi 0, %s92
    %s110 = sphi 0, %s110
    %s112 = sphi 0, %s110
    %s113 = sphi 0, %s112
    %s127 = sphi 0, %s113
    %s131 = sphi 0, %s131
    %s133 = sphi 0, %s131
    %s134 = sphi 0, %s133
    %s148 = sphi 0, %s134
    %s152 = sphi 0, %s152
    %s154 = sphi 0, %s152
    %s155 = sphi 0, %s154
    %s169 = sphi 0, %s155
    %s173 = sphi 0, %s173
    %s175 = sphi 0, %s173
    %s176 = sphi 0, %s175
    %s190 = sphi 0, %s176
    %s198 = sphi 0, %s200
    %s201 = sphi 0, %s198
    %s202 = sphi 0, %s201
    %s218 = sphi 0, %s202
  $region4: #{point_ae_forward.9} parent=0 // loop_header_branch
    %16 = sbr.rel (%p14) target = $region8
  $region5: #{point_ae_forward.9} parent=0 // loop_body
    %s18 = ssub.s32 %s13, 1
    %s19 = ssub.s32 %s13, 2
    %s26 = sadd.s32 1, %s21
    %p27 = scmp.ge.s32.totalorder %s26, 1
    %s28 = scalar_select %p27, 0, %s26
    %s29 = sadd.s32 1, %s20
    %s30 = scalar_select %p27, %s29, %s20
    %p31 = scmp.ge.s32.totalorder %s30, 2
    %s32 = scalar_select %p31, 0, %s30
    %s33 = ssub.s32 %s20, %s32
    %s34 = ssub.s32 %s21, %s28
    %s35 = sor.u32 %s33, %s34
    %p36 = scmp.eq.s32.totalorder %s35, 0
    %s38 = sadd.s32 %s37, 1
    %s39 = scalar_select %p36, %s37, %s38
    %p42 = pneg %p36
    %p43 = scmp.eq.s32.totalorder %s13, 1
    %p44 = por %p42, %p43
    %p45 = scmp.ne.s32.totalorder %s37, %s40
    %p46 = scmp.eq.s32.totalorder %s13, 0
    %p47 = por %p45, %p46
    %p48 = scmp.ne.s32.totalorder %s37, %s40
    %p49 = scmp.eq.s32.totalorder %s18, 1
    %p50 = por %p48, %p49
    %p51 = scmp.ne.s32.totalorder %s40, %s41
    %p52 = scmp.eq.s32.totalorder %s18, 0
    %p53 = por %p51, %p52
    %p54 = scmp.ne.s32.totalorder %s40, %s41
    %p55 = scmp.eq.s32.totalorder %s19, 1
    %p56 = por %p54, %p55
    %p58 = scmp.ne.s32.totalorder %s41, %s57
    %p59 = scmp.eq.s32.totalorder %s19, 0
    %p60 = por %p58, %p59
    %s61 = ssub.s32 %s20, %s32
    %s62 = ssub.s32 %s21, %s28
    %s63 = sor.u32 %s61, %s62
    %p64 = scmp.eq.s32.totalorder %s63, 0
    %s66 = sadd.s32 %s65, 1
    %s67 = scalar_select %p64, %s65, %s66
    %p70 = pneg %p64
    %p71 = scmp.eq.s32.totalorder %s13, 1
    %p72 = por %p70, %p71
    %p73 = scmp.ne.s32.totalorder %s65, %s68
    %p74 = scmp.eq.s32.totalorder %s13, 0
    %p75 = por %p73, %p74
    %p76 = scmp.ne.s32.totalorder %s65, %s68
    %p77 = scmp.eq.s32.totalorder %s18, 1
    %p78 = por %p76, %p77
    %p79 = scmp.ne.s32.totalorder %s68, %s69
    %p80 = scmp.eq.s32.totalorder %s18, 0
    %p81 = por %p79, %p80
    %p82 = scmp.ne.s32.totalorder %s68, %s69
    %p83 = scmp.eq.s32.totalorder %s19, 1
    %p84 = por %p82, %p83
    %p86 = scmp.ne.s32.totalorder %s69, %s85
    %p87 = scmp.eq.s32.totalorder %s19, 0
    %p88 = por %p86, %p87
    %s90 = sadd.s32 %s89, 1
    %p93 = scmp.eq.s32.totalorder %s13, 1
    %p94 = scmp.ne.s32.totalorder %s89, %s91
    %p95 = scmp.eq.s32.totalorder %s13, 0
    %p96 = por %p94, %p95
    %p97 = scmp.ne.s32.totalorder %s89, %s91
    %p98 = scmp.eq.s32.totalorder %s18, 1
    %p99 = por %p97, %p98
    %p100 = scmp.ne.s32.totalorder %s91, %s92
    %p101 = scmp.eq.s32.totalorder %s18, 0
    %p102 = por %p100, %p101
    %p103 = scmp.ne.s32.totalorder %s91, %s92
    %p104 = scmp.eq.s32.totalorder %s19, 1
    %p105 = por %p103, %p104
    %p107 = scmp.ne.s32.totalorder %s92, %s106
    %p108 = scmp.eq.s32.totalorder %s19, 0
    %p109 = por %p107, %p108
    %s111 = sadd.s32 %s110, 1
    %p114 = scmp.eq.s32.totalorder %s13, 1
    %p115 = scmp.ne.s32.totalorder %s110, %s112
    %p116 = scmp.eq.s32.totalorder %s13, 0
    %p117 = por %p115, %p116
    %p118 = scmp.ne.s32.totalorder %s110, %s112
    %p119 = scmp.eq.s32.totalorder %s18, 1
    %p120 = por %p118, %p119
    %p121 = scmp.ne.s32.totalorder %s112, %s113
    %p122 = scmp.eq.s32.totalorder %s18, 0
    %p123 = por %p121, %p122
    %p124 = scmp.ne.s32.totalorder %s112, %s113
    %p125 = scmp.eq.s32.totalorder %s19, 1
    %p126 = por %p124, %p125
    %p128 = scmp.ne.s32.totalorder %s113, %s127
    %p129 = scmp.eq.s32.totalorder %s19, 0
    %p130 = por %p128, %p129
    %s132 = sadd.s32 %s131, 1
    %p135 = scmp.eq.s32.totalorder %s13, 1
    %p136 = scmp.ne.s32.totalorder %s131, %s133
    %p137 = scmp.eq.s32.totalorder %s13, 0
    %p138 = por %p136, %p137
    %p139 = scmp.ne.s32.totalorder %s131, %s133
    %p140 = scmp.eq.s32.totalorder %s18, 1
    %p141 = por %p139, %p140
    %p142 = scmp.ne.s32.totalorder %s133, %s134
    %p143 = scmp.eq.s32.totalorder %s18, 0
    %p144 = por %p142, %p143
    %p145 = scmp.ne.s32.totalorder %s133, %s134
    %p146 = scmp.eq.s32.totalorder %s19, 1
    %p147 = por %p145, %p146
    %p149 = scmp.ne.s32.totalorder %s134, %s148
    %p150 = scmp.eq.s32.totalorder %s19, 0
    %p151 = por %p149, %p150
    %s153 = sadd.s32 %s152, 1
    %p156 = scmp.eq.s32.totalorder %s13, 1
    %p157 = scmp.ne.s32.totalorder %s152, %s154
    %p158 = scmp.eq.s32.totalorder %s13, 0
    %p159 = por %p157, %p158
    %p160 = scmp.ne.s32.totalorder %s152, %s154
    %p161 = scmp.eq.s32.totalorder %s18, 1
    %p162 = por %p160, %p161
    %p163 = scmp.ne.s32.totalorder %s154, %s155
    %p164 = scmp.eq.s32.totalorder %s18, 0
    %p165 = por %p163, %p164
    %p166 = scmp.ne.s32.totalorder %s154, %s155
    %p167 = scmp.eq.s32.totalorder %s19, 1
    %p168 = por %p166, %p167
    %p170 = scmp.ne.s32.totalorder %s155, %s169
    %p171 = scmp.eq.s32.totalorder %s19, 0
    %p172 = por %p170, %p171
    %s174 = sadd.s32 %s173, 1
    %p177 = scmp.eq.s32.totalorder %s13, 1
    %p178 = scmp.ne.s32.totalorder %s173, %s175
    %p179 = scmp.eq.s32.totalorder %s13, 0
    %p180 = por %p178, %p179
    %p181 = scmp.ne.s32.totalorder %s173, %s175
    %p182 = scmp.eq.s32.totalorder %s18, 1
    %p183 = por %p181, %p182
    %p184 = scmp.ne.s32.totalorder %s175, %s176
    %p185 = scmp.eq.s32.totalorder %s18, 0
    %p186 = por %p184, %p185
    %p187 = scmp.ne.s32.totalorder %s175, %s176
    %p188 = scmp.eq.s32.totalorder %s19, 1
    %p189 = por %p187, %p188
    %p191 = scmp.ne.s32.totalorder %s176, %s190
    %p192 = scmp.eq.s32.totalorder %s19, 0
    %p193 = por %p191, %p192
    %s194 = ssub.s32 %s20, %s32
    %s195 = ssub.s32 %s21, %s28
    %s196 = sor.u32 %s194, %s195
    %p197 = scmp.eq.s32.totalorder %s196, 0
    %s199 = sadd.s32 %s198, 1
    %s200 = scalar_select %p197, %s198, %s199
    %p203 = pneg %p197
    %p204 = scmp.eq.s32.totalorder %s13, 1
    %p205 = por %p203, %p204
    %p206 = scmp.ne.s32.totalorder %s198, %s201
    %p207 = scmp.eq.s32.totalorder %s13, 0
    %p208 = por %p206, %p207
    %p209 = scmp.ne.s32.totalorder %s198, %s201
    %p210 = scmp.eq.s32.totalorder %s18, 1
    %p211 = por %p209, %p210
    %p212 = scmp.ne.s32.totalorder %s201, %s202
    %p213 = scmp.eq.s32.totalorder %s18, 0
    %p214 = por %p212, %p213
    %p215 = scmp.ne.s32.totalorder %s201, %s202
    %p216 = scmp.eq.s32.totalorder %s19, 1
    %p217 = por %p215, %p216
    %p219 = scmp.ne.s32.totalorder %s202, %s218
    %p220 = scmp.eq.s32.totalorder %s19, 0
    %p221 = por %p219, %p220
    %p222 = scmp.le.s32.totalorder 1, %s13
    %p223 = scmp.lt.s32.totalorder %s13, 3
    %p224 = pnand %p222, %p223
    %p225 = pneg %p224
    // Predicated region
    $region9: #{point_ae_forward.9} parent=5 // pred_check
      _
    $region10: #{point_ae_forward.9} parent=5 // pred_check_branch
      %227 = sbr.rel (%p224) target = $region12
    $region11: #{point_ae_forward.9} parent=5 // pred_region
      %s228 = ssub.s32 %s13, 1
      // Predicated region
      $region13: #{point_ae_forward.9} parent=11 // pred_check
        %p229 = pneg %p102
      $region14: #{point_ae_forward.9} parent=11 // pred_check_branch
        %231 = sbr.rel (%p229) target = $region16
      $region15: #{point_ae_forward.9} parent=11 // pred_region
        _
      $region16: #{point_ae_forward.9} parent=11 // pred_fallthru
        _
      // Predicated region
      $region17: #{point_ae_forward.9} parent=11 // pred_check
        %p232 = pneg %p123
      $region18: #{point_ae_forward.9} parent=11 // pred_check_branch
        %234 = sbr.rel (%p232) target = $region20
      $region19: #{point_ae_forward.9} parent=11 // pred_region
        _
      $region20: #{point_ae_forward.9} parent=11 // pred_fallthru
        _
      // Predicated region
      $region21: #{point_ae_forward.9} parent=11 // pred_check
        %p235 = pneg %p144
      $region22: #{point_ae_forward.9} parent=11 // pred_check_branch
        %237 = sbr.rel (%p235) target = $region24
      $region23: #{point_ae_forward.9} parent=11 // pred_region
        _
      $region24: #{point_ae_forward.9} parent=11 // pred_fallthru
        _
      // Predicated region
      $region25: #{point_ae_forward.9} parent=11 // pred_check
        %p238 = pneg %p165
      $region26: #{point_ae_forward.9} parent=11 // pred_check_branch
        %240 = sbr.rel (%p238) target = $region28
      $region27: #{point_ae_forward.9} parent=11 // pred_region
        _
      $region28: #{point_ae_forward.9} parent=11 // pred_fallthru
        _
      // Predicated region
      $region29: #{point_ae_forward.9} parent=11 // pred_check
        %p241 = pneg %p186
      $region30: #{point_ae_forward.9} parent=11 // pred_check_branch
        %243 = sbr.rel (%p241) target = $region32
      $region31: #{point_ae_forward.9} parent=11 // pred_region
        _
      $region32: #{point_ae_forward.9} parent=11 // pred_fallthru
        _
    $region12: #{point_ae_forward.9} parent=5 // pred_fallthru
      _
    %p244 = scmp.lt.s32.totalorder %s13, 2
    // Predicated region
    $region33: #{point_ae_forward.9} parent=5 // pred_check
      %p245 = pneg %p244
    $region34: #{point_ae_forward.9} parent=5 // pred_check_branch
      %247 = sbr.rel (%p245) target = $region36
    $region35: #{point_ae_forward.9} parent=5 // pred_region
      // Predicated region
      $region37: #{point_ae_forward.9} parent=35 // pred_check
        %p248 = pneg %p47
      $region38: #{point_ae_forward.9} parent=35 // pred_check_branch
        %250 = sbr.rel (%p248) target = $region40
      $region39: #{point_ae_forward.9} parent=35 // pred_region
        %s251 = smul.u32 2, %s21
        %p252 = scmp.lt.s32.totalorder %s20, 1
        %s253 = scalar_select %p252, %s20, 1
        %p254 = scmp.lt.s32.totalorder %s251, 1
        %s255 = scalar_select %p254, %s251, 1
        %s256 = smul.addr %s253, 2
        %s257 = sadd.s32 %s255, %s256
        %s258 = smul.addr %s257, 8
        %s259 = scalar_lea.vmem %s0, %s258
        %s260 = smul.u32 2, %s21
      $region40: #{point_ae_forward.9} parent=35 // pred_fallthru
        _
      // Predicated region
      $region41: #{point_ae_forward.9} parent=35 // pred_check
        %p261 = pneg %p75
      $region42: #{point_ae_forward.9} parent=35 // pred_check_branch
        %263 = sbr.rel (%p261) target = $region44
      $region43: #{point_ae_forward.9} parent=35 // pred_region
        %s264 = smul.u32 2, %s21
        %p265 = scmp.lt.s32.totalorder %s20, 1
        %s266 = scalar_select %p265, %s20, 1
        %p267 = scmp.lt.s32.totalorder %s264, 1
        %s268 = scalar_select %p267, %s264, 1
        %s269 = smul.addr %s266, 8
        %s270 = sadd.s32 %s268, %s269
        %s271 = smul.addr %s270, 8
        %s272 = scalar_lea.vmem %s1, %s271
        %s273 = smul.u32 2, %s21
      $region44: #{point_ae_forward.9} parent=35 // pred_fallthru
        _
    $region36: #{point_ae_forward.9} parent=5 // pred_fallthru
      _
    %p274 = scmp.le.s32.totalorder 1, %s13
    %p275 = scmp.lt.s32.totalorder %s13, 3
    %p276 = pnand %p274, %p275
    %p277 = pneg %p276
    // Predicated region
    $region45: #{point_ae_forward.9} parent=5 // pred_check
      _
    $region46: #{point_ae_forward.9} parent=5 // pred_check_branch
      %279 = sbr.rel (%p276) target = $region48
    $region47: #{point_ae_forward.9} parent=5 // pred_region
      %s280 = ssub.s32 %s13, 1
      %s281 = smul.u32 2, %s23
      %p282 = scmp.lt.s32.totalorder %s22, 1
      %s283 = scalar_select %p282, %s22, 1
      %p284 = scmp.lt.s32.totalorder %s281, 1
      %s285 = scalar_select %p284, %s281, 1
      %s286 = smul.addr %s283, 2
      %s287 = sadd.s32 %s285, %s286
      %s288 = smul.addr %s287, 8
      %s289 = scalar_lea.vmem %s0, %s288
      %p290 = pneg %p53
      %p291 = pneg %p50
      %s292 = smul.u32 2, %s23
      %p293 = scmp.lt.s32.totalorder %s22, 1
      %s294 = scalar_select %p293, %s22, 1
      %p295 = scmp.lt.s32.totalorder %s292, 1
      %s296 = scalar_select %p295, %s292, 1
      %s297 = smul.addr %s294, 8
      %s298 = sadd.s32 %s296, %s297
      %s299 = smul.addr %s298, 8
      %s300 = scalar_lea.vmem %s1, %s299
      %p301 = pneg %p81
      %p302 = pneg %p78
      %p303 = pneg %p102
      %p304 = pneg %p99
      %p305 = pneg %p123
      %p306 = pneg %p120
      %p307 = pneg %p144
      %p308 = pneg %p141
      %p309 = pneg %p165
      %p310 = pneg %p162
      %p311 = pneg %p186
      %p312 = pneg %p183
      %p313 = pneg %p214
      %p314 = pneg %p211
      %s315 = smul.u32 2, %s23
      %p316 = scmp.lt.s32.totalorder %s22, 1
      %s317 = scalar_select %p316, %s22, 1
      %p318 = scmp.lt.s32.totalorder %s315, 1
      %s319 = scalar_select %p318, %s315, 1
      %s320 = smul.addr %s317, 8
      %s321 = sadd.s32 %s319, %s320
      %s322 = smul.addr %s321, 8
      %s323 = scalar_lea.vmem %s7, %s322
      %s324 = smul.u32 2, %s23
      %p325 = scmp.lt.s32.totalorder %s22, 1
      %s326 = scalar_select %p325, %s22, 1
      %p327 = scmp.lt.s32.totalorder %s324, 1
      %s328 = scalar_select %p327, %s324, 1
      %s329 = smul.addr %s326, 2
      %s330 = sadd.s32 %s328, %s329
      %s331 = smul.addr %s330, 8
      %s332 = scalar_lea.vmem %s0, %s331
      %s333 = smul.u32 2, %s23
      %s334 = smul.u32 2, %s23
      %p335 = scmp.lt.s32.totalorder %s22, 1
      %s336 = scalar_select %p335, %s22, 1
      %p337 = scmp.lt.s32.totalorder %s334, 1
      %s338 = scalar_select %p337, %s334, 1
      %s339 = smul.addr %s336, 8
      %s340 = sadd.s32 %s338, %s339
      %s341 = smul.addr %s340, 8
      %s342 = scalar_lea.vmem %s1, %s341
      %s343 = smul.u32 2, %s23
      %s344 = smul.u32 2, %s23
      %p345 = scmp.lt.s32.totalorder %s22, 1
      %s346 = scalar_select %p345, %s22, 1
      %p347 = scmp.lt.s32.totalorder %s344, 1
      %s348 = scalar_select %p347, %s344, 1
      %s349 = smul.addr %s346, 8
      %s350 = sadd.s32 %s348, %s349
      %s351 = smul.addr %s350, 8
      %s352 = scalar_lea.vmem %s7, %s351
      %s353 = smul.u32 2, %s23
      %v355 = vld [vmem:[%s332] sm:$0xff]
      %v356 = vld [vmem:[%s332 + $0x8] sm:$0xff]
      %v357 = vld [vmem:[%s2] sm:$0xf]
      %v358 = vld [vmem:[%s2 + $0x4] sm:$0xf]
      %v359 = vld [vmem:[%s2 + $0x8] sm:$0xf]
      %v360 = vld [vmem:[%s2 + $0xc] sm:$0xf]
      %v361 = vpack.c.bf16 %v356, %v355
      %v366 = vunpack.c.l.b16 %v357
      %v367 = vunpack.c.l.b16 %v358
      %v368 = vunpack.c.l.b16 %v359
      %v369 = vunpack.c.l.b16 %v360
      %v370 = vpack.c.b16 %v367, %v366
      %v371 = vpack.c.b16 %v369, %v368
      %vm374 = vcmask 261120
      %v376 = vsel %vm374, %v361, 0
      %378 = vmatpush.bf16.msra.mxu0 0
      %379 = vmatpush.bf16.msra.mxu0 0
      %380 = vmatpush.bf16.msra.mxu0 0
      %381 = vmatpush.bf16.msra.mxu0 0
      %382 = vmatpush.bf16.msra.mxu0 0
      %383 = vmatpush.bf16.msra.mxu0 0
      %384 = vmatpush.bf16.msra.mxu0 %v371
      %385 = vmatpush.bf16.msra.mxu0 %v370
      %386 = vmatmul.bf16.gmra.mxu0 %v376
      %v387 = vpop.f32.mrf.mxu0
      %v388 = vadd.f32 0.0, %v387
      %v389 = vpop.f32.mrf.mxu0
      %v390 = vadd.f32 0.0, %v389
      %391 = vdwg.mxu0
      %v392 = vld [vmem:[%s342] sm:$0xff]
      %v393 = vld [vmem:[%s342 + $0x8] sm:$0xff]
      %v394 = vld [vmem:[%s3] sm:$0x3]
      %v395 = vpack.c.bf16 %v393, %v392
      %v396 = vld [vmem:[%s4] sm:$0x1]
      %v398 = vperm.slane %v396, 0
      %vm400 = vcmask 23552
      %v402 = vsel %vm400, %v395, 0
      %vm404 = vcmask 1040384
      %vm405 = vcmask 1041408
      %v406 = vsel %vm404, 4294967295, 65535
      %v407 = vsel %vm405, %v406, 0
      %v409 = vand.u32 %v394, %v407
      %411 = vmatpush.bf16.msra.mxu0 0
      %412 = vmatpush.bf16.msra.mxu0 0
      %413 = vmatpush.bf16.msra.mxu0 0
      %414 = vmatpush.bf16.msra.mxu0 0
      %415 = vmatpush.bf16.msra.mxu0 0
      %416 = vmatpush.bf16.msra.mxu0 0
      %417 = vmatpush.bf16.msra.mxu0 0
      %418 = vmatpush.bf16.msra.mxu0 %v409
      %419 = vmatmul.bf16.gmra.mxu0 %v402
      %v420 = vpop.f32.mrf.mxu0
      %v421 = vadd.f32 %v398, %v420
      %v422 = vpop.f32.mrf.mxu0
      %v423 = vadd.f32 %v398, %v422
      %424 = vdwg.mxu0
      %v425 = vadd.f32 %v421, %v388
      %v426 = vadd.f32 %v423, %v390
      %v427 = vmax.f32 %v425, 0.0
      %v428 = vmax.f32 %v426, 0.0
      %v429 = vld [vmem:[%s5] sm:$0xf]
      %v430 = vld [vmem:[%s5 + $0x4] sm:$0xf]
      %v431 = vld [vmem:[%s5 + $0x8] sm:$0xf]
      %v432 = vld [vmem:[%s5 + $0xc] sm:$0xf]
      %v433 = vpack.c.bf16 %v428, %v427
      %v434 = vld [vmem:[%s6] sm:$0x1]
      %v436 = vperm.slane %v434, 0
      %v442 = vunpack.c.l.b16 %v429
      %v443 = vunpack.c.l.b16 %v430
      %v444 = vunpack.c.l.b16 %v431
      %v445 = vunpack.c.l.b16 %v432
      %v446 = vpack.c.b16 %v443, %v442
      %v447 = vpack.c.b16 %v445, %v444
      %v451 = vsel %vm374, %v433, 0
      %453 = vmatpush.bf16.msra.mxu0 0
      %454 = vmatpush.bf16.msra.mxu0 0
      %455 = vmatpush.bf16.msra.mxu0 0
      %456 = vmatpush.bf16.msra.mxu0 0
      %457 = vmatpush.bf16.msra.mxu0 0
      %458 = vmatpush.bf16.msra.mxu0 0
      %459 = vmatpush.bf16.msra.mxu0 %v447
      %460 = vmatpush.bf16.msra.mxu0 %v446
      %461 = vmatmul.bf16.gmra.mxu0 %v451
      %v462 = vpop.f32.mrf.mxu0
      %v463 = vadd.f32 %v436, %v462
      %v464 = vpop.f32.mrf.mxu0
      %v465 = vadd.f32 %v436, %v464
      %466 = vdwg.mxu0
      %467 = vst.msk [vmem:[%s352] sm:$0xff] %vm400, %v463
      %468 = vst.msk [vmem:[%s352 + $0x8] sm:$0xff] %vm400, %v465
      %s469 = scalar_lea.vmem %s342, 16
      %v470 = vld [vmem:[%s469] sm:$0xff]
      %v471 = vld [vmem:[%s469 + $0x8] sm:$0xff]
      %v472 = vld [vmem:[%s3] sm:$0x3]
      %v473 = vpack.c.bf16 %v471, %v470
      %v474 = vld [vmem:[%s4] sm:$0x1]
      %v476 = vperm.slane %v474, 0
      %v479 = vsel %vm400, %v473, 0
      %v482 = vand.u32 %v472, %v407
      %484 = vmatpush.bf16.msra.mxu0 0
      %485 = vmatpush.bf16.msra.mxu0 0
      %486 = vmatpush.bf16.msra.mxu0 0
      %487 = vmatpush.bf16.msra.mxu0 0
      %488 = vmatpush.bf16.msra.mxu0 0
      %489 = vmatpush.bf16.msra.mxu0 0
      %490 = vmatpush.bf16.msra.mxu0 0
      %491 = vmatpush.bf16.msra.mxu0 %v482
      %492 = vmatmul.bf16.gmra.mxu0 %v479
      %v493 = vpop.f32.mrf.mxu0
      %v494 = vadd.f32 %v476, %v493
      %v495 = vpop.f32.mrf.mxu0
      %v496 = vadd.f32 %v476, %v495
      %497 = vdwg.mxu0
      %v498 = vadd.f32 %v494, %v388
      %v499 = vadd.f32 %v496, %v390
      %v500 = vmax.f32 %v498, 0.0
      %v501 = vmax.f32 %v499, 0.0
      %v502 = vld [vmem:[%s5] sm:$0xf]
      %v503 = vld [vmem:[%s5 + $0x4] sm:$0xf]
      %v504 = vld [vmem:[%s5 + $0x8] sm:$0xf]
      %v505 = vld [vmem:[%s5 + $0xc] sm:$0xf]
      %v506 = vpack.c.bf16 %v501, %v500
      %v507 = vld [vmem:[%s6] sm:$0x1]
      %v509 = vperm.slane %v507, 0
      %v515 = vunpack.c.l.b16 %v502
      %v516 = vunpack.c.l.b16 %v503
      %v517 = vunpack.c.l.b16 %v504
      %v518 = vunpack.c.l.b16 %v505
      %v519 = vpack.c.b16 %v516, %v515
      %v520 = vpack.c.b16 %v518, %v517
      %v524 = vsel %vm374, %v506, 0
      %526 = vmatpush.bf16.msra.mxu0 0
      %527 = vmatpush.bf16.msra.mxu0 0
      %528 = vmatpush.bf16.msra.mxu0 0
      %529 = vmatpush.bf16.msra.mxu0 0
      %530 = vmatpush.bf16.msra.mxu0 0
      %531 = vmatpush.bf16.msra.mxu0 0
      %532 = vmatpush.bf16.msra.mxu0 %v520
      %533 = vmatpush.bf16.msra.mxu0 %v519
      %534 = vmatmul.bf16.gmra.mxu0 %v524
      %v535 = vpop.f32.mrf.mxu0
      %v536 = vadd.f32 %v509, %v535
      %v537 = vpop.f32.mrf.mxu0
      %v538 = vadd.f32 %v509, %v537
      %539 = vdwg.mxu0
      %s540 = scalar_lea.vmem %s352, 16
      %541 = vst.msk [vmem:[%s540] sm:$0xff] %vm400, %v536
      %542 = vst.msk [vmem:[%s540 + $0x8] sm:$0xff] %vm400, %v538
      %s543 = scalar_lea.vmem %s342, 32
      %v544 = vld [vmem:[%s543] sm:$0xff]
      %v545 = vld [vmem:[%s543 + $0x8] sm:$0xff]
      %v546 = vld [vmem:[%s3] sm:$0x3]
      %v547 = vpack.c.bf16 %v545, %v544
      %v548 = vld [vmem:[%s4] sm:$0x1]
      %v550 = vperm.slane %v548, 0
      %v553 = vsel %vm400, %v547, 0
      %v556 = vand.u32 %v546, %v407
      %558 = vmatpush.bf16.msra.mxu0 0
      %559 = vmatpush.bf16.msra.mxu0 0
      %560 = vmatpush.bf16.msra.mxu0 0
      %561 = vmatpush.bf16.msra.mxu0 0
      %562 = vmatpush.bf16.msra.mxu0 0
      %563 = vmatpush.bf16.msra.mxu0 0
      %564 = vmatpush.bf16.msra.mxu0 0
      %565 = vmatpush.bf16.msra.mxu0 %v556
      %566 = vmatmul.bf16.gmra.mxu0 %v553
      %v567 = vpop.f32.mrf.mxu0
      %v568 = vadd.f32 %v550, %v567
      %v569 = vpop.f32.mrf.mxu0
      %v570 = vadd.f32 %v550, %v569
      %571 = vdwg.mxu0
      %v572 = vadd.f32 %v568, %v388
      %v573 = vadd.f32 %v570, %v390
      %v574 = vmax.f32 %v572, 0.0
      %v575 = vmax.f32 %v573, 0.0
      %v576 = vld [vmem:[%s5] sm:$0xf]
      %v577 = vld [vmem:[%s5 + $0x4] sm:$0xf]
      %v578 = vld [vmem:[%s5 + $0x8] sm:$0xf]
      %v579 = vld [vmem:[%s5 + $0xc] sm:$0xf]
      %v580 = vpack.c.bf16 %v575, %v574
      %v581 = vld [vmem:[%s6] sm:$0x1]
      %v583 = vperm.slane %v581, 0
      %v589 = vunpack.c.l.b16 %v576
      %v590 = vunpack.c.l.b16 %v577
      %v591 = vunpack.c.l.b16 %v578
      %v592 = vunpack.c.l.b16 %v579
      %v593 = vpack.c.b16 %v590, %v589
      %v594 = vpack.c.b16 %v592, %v591
      %v598 = vsel %vm374, %v580, 0
      %600 = vmatpush.bf16.msra.mxu0 0
      %601 = vmatpush.bf16.msra.mxu0 0
      %602 = vmatpush.bf16.msra.mxu0 0
      %603 = vmatpush.bf16.msra.mxu0 0
      %604 = vmatpush.bf16.msra.mxu0 0
      %605 = vmatpush.bf16.msra.mxu0 0
      %606 = vmatpush.bf16.msra.mxu0 %v594
      %607 = vmatpush.bf16.msra.mxu0 %v593
      %608 = vmatmul.bf16.gmra.mxu0 %v598
      %v609 = vpop.f32.mrf.mxu0
      %v610 = vadd.f32 %v583, %v609
      %v611 = vpop.f32.mrf.mxu0
      %v612 = vadd.f32 %v583, %v611
      %613 = vdwg.mxu0
      %s614 = scalar_lea.vmem %s352, 32
      %615 = vst.msk [vmem:[%s614] sm:$0xff] %vm400, %v610
      %616 = vst.msk [vmem:[%s614 + $0x8] sm:$0xff] %vm400, %v612
      %s617 = scalar_lea.vmem %s342, 48
      %v618 = vld [vmem:[%s617] sm:$0xff]
      %v619 = vld [vmem:[%s617 + $0x8] sm:$0xff]
      %v620 = vld [vmem:[%s3] sm:$0x3]
      %v621 = vpack.c.bf16 %v619, %v618
      %v622 = vld [vmem:[%s4] sm:$0x1]
      %v624 = vperm.slane %v622, 0
      %v627 = vsel %vm400, %v621, 0
      %v630 = vand.u32 %v620, %v407
      %632 = vmatpush.bf16.msra.mxu0 0
      %633 = vmatpush.bf16.msra.mxu0 0
      %634 = vmatpush.bf16.msra.mxu0 0
      %635 = vmatpush.bf16.msra.mxu0 0
      %636 = vmatpush.bf16.msra.mxu0 0
      %637 = vmatpush.bf16.msra.mxu0 0
      %638 = vmatpush.bf16.msra.mxu0 0
      %639 = vmatpush.bf16.msra.mxu0 %v630
      %640 = vmatmul.bf16.gmra.mxu0 %v627
      %v641 = vpop.f32.mrf.mxu0
      %v642 = vadd.f32 %v624, %v641
      %v643 = vpop.f32.mrf.mxu0
      %v644 = vadd.f32 %v624, %v643
      %645 = vdwg.mxu0
      %v646 = vadd.f32 %v642, %v388
      %v647 = vadd.f32 %v644, %v390
      %v648 = vmax.f32 %v646, 0.0
      %v649 = vmax.f32 %v647, 0.0
      %v650 = vld [vmem:[%s5] sm:$0xf]
      %v651 = vld [vmem:[%s5 + $0x4] sm:$0xf]
      %v652 = vld [vmem:[%s5 + $0x8] sm:$0xf]
      %v653 = vld [vmem:[%s5 + $0xc] sm:$0xf]
      %v654 = vpack.c.bf16 %v649, %v648
      %v655 = vld [vmem:[%s6] sm:$0x1]
      %v657 = vperm.slane %v655, 0
      %v663 = vunpack.c.l.b16 %v650
      %v664 = vunpack.c.l.b16 %v651
      %v665 = vunpack.c.l.b16 %v652
      %v666 = vunpack.c.l.b16 %v653
      %v667 = vpack.c.b16 %v664, %v663
      %v668 = vpack.c.b16 %v666, %v665
      %v672 = vsel %vm374, %v654, 0
      %674 = vmatpush.bf16.msra.mxu0 0
      %675 = vmatpush.bf16.msra.mxu0 0
      %676 = vmatpush.bf16.msra.mxu0 0
      %677 = vmatpush.bf16.msra.mxu0 0
      %678 = vmatpush.bf16.msra.mxu0 0
      %679 = vmatpush.bf16.msra.mxu0 0
      %680 = vmatpush.bf16.msra.mxu0 %v668
      %681 = vmatpush.bf16.msra.mxu0 %v667
      %682 = vmatmul.bf16.gmra.mxu0 %v672
      %v683 = vpop.f32.mrf.mxu0
      %v684 = vadd.f32 %v657, %v683
      %v685 = vpop.f32.mrf.mxu0
      %v686 = vadd.f32 %v657, %v685
      %687 = vdwg.mxu0
      %s688 = scalar_lea.vmem %s352, 48
      %689 = vst.msk [vmem:[%s688] sm:$0xff] %vm400, %v684
      %690 = vst.msk [vmem:[%s688 + $0x8] sm:$0xff] %vm400, %v686
      %s691 = smul.u32 2, %s23
      %p692 = scmp.lt.s32.totalorder %s22, 1
      %s693 = scalar_select %p692, %s22, 1
      %p694 = scmp.lt.s32.totalorder %s691, 1
      %s695 = scalar_select %p694, %s691, 1
      %s696 = smul.addr %s693, 8
      %s697 = sadd.s32 %s695, %s696
      %s698 = smul.addr %s697, 8
      %s699 = scalar_lea.vmem %s7, %s698
      // Predicated region
      $region49: #{point_ae_forward.9} parent=47 // pred_check
        %p700 = pneg %p211
      $region50: #{point_ae_forward.9} parent=47 // pred_check_branch
        %702 = sbr.rel (%p700) target = $region52
      $region51: #{point_ae_forward.9} parent=47 // pred_region
        %s703 = smul.u32 2, %s23
      $region52: #{point_ae_forward.9} parent=47 // pred_fallthru
        _
    $region48: #{point_ae_forward.9} parent=5 // pred_fallthru
      _
    %p704 = scmp.le.s32.totalorder 2, %s13
    // Predicated region
    $region53: #{point_ae_forward.9} parent=5 // pred_check
      %p705 = pneg %p704
    $region54: #{point_ae_forward.9} parent=5 // pred_check_branch
      %707 = sbr.rel (%p705) target = $region56
    $region55: #{point_ae_forward.9} parent=5 // pred_region
      %s708 = ssub.s32 %s13, 2
      // Predicated region
      $region57: #{point_ae_forward.9} parent=55 // pred_check
        %p709 = pneg %p217
      $region58: #{point_ae_forward.9} parent=55 // pred_check_branch
        %711 = sbr.rel (%p709) target = $region60
      $region59: #{point_ae_forward.9} parent=55 // pred_region
        %s712 = smul.u32 2, %s25
        %p713 = scmp.lt.s32.totalorder %s24, 1
        %s714 = scalar_select %p713, %s24, 1
        %p715 = scmp.lt.s32.totalorder %s712, 1
        %s716 = scalar_select %p715, %s712, 1
        %s717 = smul.addr %s714, 8
        %s718 = sadd.s32 %s716, %s717
        %s719 = smul.addr %s718, 8
        %s720 = scalar_lea.vmem %s7, %s719
      $region60: #{point_ae_forward.9} parent=55 // pred_fallthru
        _
    $region56: #{point_ae_forward.9} parent=5 // pred_fallthru
      _
  $region6: #{point_ae_forward.9} parent=0 // loop_footer
    %s17 = sadd.s32 1, %s13
  $region7: #{point_ae_forward.9} parent=0 // loop_footer_branch
    %12 = sbr.rel target = $region3
  $region8: #{point_ae_forward.9} parent=0 // loop_exit
    _

</llo_original>
